<compile_context>
chip_gen: v7x
topology: tpu7x:2x2x1
jax: 0.10.0
libtpu: 0.0.40
codegen_flags: <defaults>
</compile_context>

<pallas_src>
import jax
import jax.numpy as jnp
from jax import lax
from jax.experimental import pallas as pl
from jax.experimental.pallas import tpu as pltpu

BN_EPS = 1e-5
HIGH = jax.lax.Precision.HIGHEST          # reference path only
VMEM_LIMIT = 32 * 1024 * 1024             # explicit scoped-VMEM budget (<= 64 MiB v7x physical)
ACC_BYTES_TARGET = 128 * 1024             # keep f32 accumulators at ~<= 32 vregs


def _round_up(n, m):
    return ((n + m - 1) // m) * m


def _row_tile(ho, wp, cp):
    """Output-row tile so the (tile*wp, cp) f32 accumulator stays in vregs."""
    m_target = max(1, ACC_BYTES_TARGET // (4 * cp))
    return max(1, min(ho, max(1, m_target // wp)))


# ----------------------------- Pallas kernels ------------------------------

def _make_conv_kernel(wp, th):
    """3x3 conv + folded-BN bias + ReLU.

    The kernel-width (q) taps are folded into the matmul K dim by the wrapper
    (3x patches); the kernel-height (p) taps are free outer-row offsets here,
    accumulated as 3 MXU matmuls into an f32 register accumulator."""
    def kernel(x_ref, w_ref, b_ref, o_ref):
        # x_ref: (1, (HoP+2)*WP, 3C) bf16 — full padded image rows for this batch.
        # w_ref: (3, 3C, CP) bf16 (BN scale folded in).  b_ref: (1, CP) f32.
        # o_ref: (1, TH*WP, CP) bf16 — one output-row block.
        m = th * wp
        base = pl.multiple_of(pl.program_id(1) * m, wp)   # aligned row offset
        cp = o_ref.shape[2]
        acc = jnp.zeros((m, cp), jnp.float32)
        for p in range(3):                                # static unroll: 3 row-group matmuls
            xs = x_ref[0, pl.ds(base + p * wp, m), :]     # aligned, no relayout
            acc = acc + jnp.dot(xs, w_ref[p], preferred_element_type=jnp.float32)
        o_ref[0] = jnp.maximum(acc + b_ref[...], 0.0).astype(o_ref.dtype)
    return kernel


def _make_corr_head_kernel(wp, ti, hk, wk):
    """Fused depthwise cross-correlation + head (1x1 -> BN -> ReLU -> 1x1 + bias).

    Windows are pre-shifted along W only (wk-fold); the hk shifts are free
    outer-row offsets.  The output-row grid axis keeps the f32 accumulator in
    vregs, and the head matmuls run on the resident accumulator (corr result
    never round-trips to HBM)."""
    def kernel(win_ref, k_ref, w1_ref, b1_ref, w2_ref, b2_ref, o_ref):
        # win_ref: (1, Wk, HsP*WP, CP) bf16.  k_ref: (1, Hk*Wk, CP) bf16.
        # w1/w2: (CP, CP) bf16 (s1 folded into w1).  b1/b2: (1, CP) f32.
        # o_ref: (1, TI*WP, CP) f32.
        m = ti * wp
        base = pl.multiple_of(pl.program_id(1) * m, wp)
        cp = o_ref.shape[2]
        acc = jnp.zeros((m, cp), jnp.float32)
        for p in range(hk):                               # static unroll over taps
            for q in range(wk):
                xs = win_ref[0, q, pl.ds(base + p * wp, m), :].astype(jnp.float32)
                kt = k_ref[0, pl.ds(p * wk + q, 1), :].astype(jnp.float32)  # (1, CP)
                acc = acc + xs * kt                        # lane-dense f32 FMA
        h = jnp.dot(acc.astype(jnp.bfloat16), w1_ref[...],
                    preferred_element_type=jnp.float32)
        h = jnp.maximum(h + b1_ref[...], 0.0)
        o_ref[0] = jnp.dot(h.astype(jnp.bfloat16), w2_ref[...],
                           preferred_element_type=jnp.float32) + b2_ref[...]
    return kernel


# ------------------------------ Pallas wrappers -----------------------------

def _conv3x3_bn_relu(x_nhwc, w_slabs, bias, cp):
    """3x3 VALID conv + folded BN + ReLU.  Returns (B, H-2, W-2, cp) bfloat16."""
    B, H, W, C = x_nhwc.shape
    Ho, Wo = H - 2, W - 2
    WP = _round_up(Wo, 16)                 # row width padded so all slices are aligned
    TH = _row_tile(Ho, WP, cp)
    HoP = _round_up(Ho, TH)
    n_hblk = HoP // TH
    M = TH * WP

    x16 = x_nhwc.astype(jnp.bfloat16)
    x16 = jnp.pad(x16, ((0, 0), (0, HoP + 2 - H), (0, WP + 2 - W), (0, 0)))
    # Fold only the kernel-WIDTH taps into K (3x, not 9x im2col); rows stay separate
    # so the kernel can apply the kernel-height taps as free row offsets.
    xw = jnp.concatenate([x16[:, :, q:q + WP, :] for q in range(3)], axis=-1)
    xw = xw.reshape(B, (HoP + 2) * WP, 3 * C)

    flops = 2 * B * HoP * WP * 9 * C * cp
    bytes_accessed = (B * (HoP + 2) * WP * 3 * C * 2 + 9 * C * cp * 2 + cp * 4
                      + B * HoP * WP * cp * 2)

    out = pl.pallas_call(
        _make_conv_kernel(WP, TH),
        out_shape=jax.ShapeDtypeStruct((B, HoP * WP, cp), jnp.bfloat16),
        grid=(B, n_hblk),
        in_specs=[
            pl.BlockSpec((1, (HoP + 2) * WP, 3 * C), lambda b, r: (b, 0, 0)),
            pl.BlockSpec((3, 3 * C, cp), lambda b, r: (0, 0, 0)),
            pl.BlockSpec((1, cp), lambda b, r: (0, 0)),
        ],
        out_specs=pl.BlockSpec((1, M, cp), lambda b, r: (b, r, 0)),
        compiler_params=pltpu.CompilerParams(
            dimension_semantics=("parallel", "parallel"),
            vmem_limit_bytes=VMEM_LIMIT),
        cost_estimate=pl.CostEstimate(flops=flops, transcendentals=0,
                                      bytes_accessed=bytes_accessed),
    )(xw, w_slabs, bias.reshape(1, -1))
    return out.reshape(B, HoP, WP, cp)[:, :Ho, :Wo, :]


def _corr_head(search_feat, kernel_feat, w1, b1, w2, b2, out_channels):
    """Fused depthwise correlation + head.  Returns (B, Ho, Wo, out_channels) f32."""
    B, Hs, Ws, CP = search_feat.shape
    _, Hk, Wk, _ = kernel_feat.shape
    Ho, Wo = Hs - Hk + 1, Ws - Wk + 1
    T = Hk * Wk
    WP = _round_up(Wo, 16)
    TI = _row_tile(Ho, WP, CP)
    HoP = _round_up(Ho, TI)
    n_iblk = HoP // TI
    HsP = HoP + Hk - 1
    M = TI * WP

    sfp = jnp.pad(search_feat,
                  ((0, 0), (0, HsP - Hs), (0, WP + Wk - 1 - Ws), (0, 0)))
    # W-only pre-shift (Wk-fold, not Hk*Wk-fold); Hk shifts are in-kernel row offsets.
    windows = jnp.stack([sfp[:, :, q:q + WP, :] for q in range(Wk)], axis=1)
    windows = windows.reshape(B, Wk, HsP * WP, CP)
    kflat = kernel_feat.reshape(B, T, CP)

    flops = B * HoP * WP * CP * (2 * T + 4 * CP)
    bytes_accessed = (B * Wk * HsP * WP * CP * 2 + B * T * CP * 2 + 2 * CP * CP * 2
                      + 2 * CP * 4 + B * HoP * WP * CP * 4)

    out = pl.pallas_call(
        _make_corr_head_kernel(WP, TI, Hk, Wk),
        out_shape=jax.ShapeDtypeStruct((B, HoP * WP, CP), jnp.float32),
        grid=(B, n_iblk),
        in_specs=[
            pl.BlockSpec((1, Wk, HsP * WP, CP), lambda b, r: (b, 0, 0, 0)),
            pl.BlockSpec((1, T, CP), lambda b, r: (b, 0, 0)),
            pl.BlockSpec((CP, CP), lambda b, r: (0, 0)),
            pl.BlockSpec((1, CP), lambda b, r: (0, 0)),
            pl.BlockSpec((CP, CP), lambda b, r: (0, 0)),
            pl.BlockSpec((1, CP), lambda b, r: (0, 0)),
        ],
        out_specs=pl.BlockSpec((1, M, CP), lambda b, r: (b, r, 0)),
        compiler_params=pltpu.CompilerParams(
            dimension_semantics=("parallel", "parallel"),
            vmem_limit_bytes=VMEM_LIMIT),
        cost_estimate=pl.CostEstimate(flops=flops, transcendentals=0,
                                      bytes_accessed=bytes_accessed),
    )(windows, kflat, w1, b1.reshape(1, -1), w2, b2.reshape(1, -1))
    return out.reshape(B, HoP, WP, CP)[:, :Ho, :Wo, :out_channels]


# --------------------------- parameters & forward ---------------------------

def _fold_bn(gamma, beta, mean, var):
    scale = gamma / jnp.sqrt(var + BN_EPS)
    return scale, beta - mean * scale


def init_params(key, in_channels, hidden, out_channels):
    keys = iter(jax.random.split(key, 24))

    def nrm(shape, s=0.1):
        return s * jax.random.normal(next(keys), shape, jnp.float32)

    def bn(ch):
        gamma = 1.0 + 0.1 * jax.random.normal(next(keys), (ch,), jnp.float32)
        beta = nrm((ch,))
        mean = nrm((ch,), 0.05)
        var = 1.0 + 0.1 * jax.random.uniform(next(keys), (ch,), jnp.float32)
        return gamma, beta, mean, var

    return dict(
        w_kernel=nrm((hidden, in_channels, 3, 3)),   # PyTorch OIHW
        bn_kernel=bn(hidden),
        w_search=nrm((hidden, in_channels, 3, 3)),
        bn_search=bn(hidden),
        w_head1=nrm((hidden, hidden, 1, 1)),
        bn_head=bn(hidden),
        w_head2=nrm((out_channels, hidden, 1, 1)),
        b_head2=nrm((out_channels,)),
    )


def depth_corr_forward(params, z_nchw, x_nchw):
    # NCHW inputs (PyTorch) -> NHWC internally -> NCHW output.
    z = jnp.transpose(z_nchw, (0, 2, 3, 1))
    x = jnp.transpose(x_nchw, (0, 2, 3, 1))

    hidden = params['w_kernel'].shape[0]
    out_channels = params['w_head2'].shape[0]
    CP = _round_up(max(hidden, out_channels), 128)   # lane-dense padded channel count

    def prep_conv(w, bn):
        # Fold BN scale into the conv weight, lay out as (p, q*C+c, o) slabs, pad O->CP.
        s, b = _fold_bn(*bn)
        wf = w * s[:, None, None, None]                           # OIHW, scale folded
        slabs = jnp.transpose(wf, (2, 3, 1, 0)).reshape(3, 3 * w.shape[1], w.shape[0])
        slabs = jnp.pad(slabs, ((0, 0), (0, 0), (0, CP - w.shape[0]))).astype(jnp.bfloat16)
        return slabs, jnp.pad(b, (0, CP - w.shape[0]))

    wk_slabs, bk = prep_conv(params['w_kernel'], params['bn_kernel'])
    ws_slabs, bs = prep_conv(params['w_search'], params['bn_search'])
    kernel_feat = _conv3x3_bn_relu(z, wk_slabs, bk, CP)           # (B, 5, 5, CP) bf16
    search_feat = _conv3x3_bn_relu(x, ws_slabs, bs, CP)           # (B, 13, 13, CP) bf16

    s1, b1 = _fold_bn(*params['bn_head'])
    w1 = jnp.transpose(params['w_head1'][:, :, 0, 0]) * s1[None, :]   # fold s1 into w1
    w1 = jnp.pad(w1, ((0, CP - hidden), (0, CP - hidden))).astype(jnp.bfloat16)
    w2 = jnp.transpose(params['w_head2'][:, :, 0, 0])
    w2 = jnp.pad(w2, ((0, CP - hidden), (0, CP - out_channels))).astype(jnp.bfloat16)
    b1p = jnp.pad(b1, (0, CP - hidden))
    b2p = jnp.pad(params['b_head2'], (0, CP - out_channels))

    out = _corr_head(search_feat, kernel_feat, w1, b1p, w2, b2p, out_channels)
    return jnp.transpose(out, (0, 3, 1, 2))                       # NCHW


# ------------------------------- pure-JAX ref --------------------------------
# Matches the kernel's numerics (bf16 MXU operands / bf16-stored intermediates,
# f32 accumulation, f32 epilogues) through an independent XLA code path.

def reference_forward(params, z, x):
    def conv_bn_relu(inp, w, bn):
        s, b = _fold_bn(*bn)
        wf = (w * s[:, None, None, None]).astype(jnp.bfloat16)
        y = lax.conv_general_dilated(
            inp.astype(jnp.bfloat16), wf, (1, 1), 'VALID',
            dimension_numbers=('NCHW', 'OIHW', 'NCHW'),
            preferred_element_type=jnp.float32)
        y = jnp.maximum(y + b[None, :, None, None], 0.0)
        return y.astype(jnp.bfloat16)          # kernel path stores conv features in bf16

    kf = conv_bn_relu(z, params['w_kernel'], params['bn_kernel'])
    sf = conv_bn_relu(x, params['w_search'], params['bn_search'])

    B, C = kf.shape[:2]
    inp = sf.astype(jnp.float32).reshape(1, B * C, sf.shape[2], sf.shape[3])
    ker = kf.astype(jnp.float32).reshape(B * C, 1, kf.shape[2], kf.shape[3])
    feat = lax.conv_general_dilated(inp, ker, (1, 1), 'VALID',
                                    dimension_numbers=('NCHW', 'OIHW', 'NCHW'),
                                    feature_group_count=B * C, precision=HIGH)
    feat = feat.reshape(B, C, feat.shape[2], feat.shape[3])

    s1, b1 = _fold_bn(*params['bn_head'])
    w1 = (params['w_head1'][:, :, 0, 0] * s1[:, None]).astype(jnp.bfloat16)
    h = jnp.einsum('bchw,oc->bohw', feat.astype(jnp.bfloat16), w1,
                   preferred_element_type=jnp.float32)
    h = jnp.maximum(h + b1[None, :, None, None], 0.0)
    w2 = params['w_head2'][:, :, 0, 0].astype(jnp.bfloat16)
    out = jnp.einsum('bchw,oc->bohw', h.astype(jnp.bfloat16), w2,
                     preferred_element_type=jnp.float32)
    return out + params['b_head2'][None, :, None, None]


# ----------------------------------- main ------------------------------------

if __name__ == "__main__":
    B, Cin, hidden, Cout = 2, 4, 16, 8
    Hz = Wz = 7      # template ("kernel") input
    Hx = Wx = 15     # search input

    key = jax.random.PRNGKey(0)
    kz, kx, kp = jax.random.split(key, 3)
    z = jax.random.normal(kz, (B, Cin, Hz, Wz), jnp.float32)
    x = jax.random.normal(kx, (B, Cin, Hx, Wx), jnp.float32)
    params = init_params(kp, Cin, hidden, Cout)

    fwd = jax.jit(depth_corr_forward)
    out = jax.block_until_ready(fwd(params, z, x))

    # template feat 5x5, search feat 13x13 -> correlation 9x9
    assert out.shape == (B, Cout, Hx - Hz + 1, Wx - Wz + 1), out.shape

    ref = reference_forward(params, z, x)
    err = float(jnp.max(jnp.abs(out - ref)))
    # Both paths use bf16 operands / bf16-stored features with f32 accumulation;
    # differences are accumulation order + isolated bf16 rounding-boundary flips.
    assert err < 5e-3, f"max abs err too large: {err}"

    print("KERNEL_OK")
</pallas_src>

<mosaic_0001>
module attributes {stable_mosaic.version = 11 : i64} {
  func.func @kernel(%arg0: i32, %arg1: i32, %arg2: memref<1x240x12xbf16, #tpu.memory_space<vmem>>, %arg3: memref<3x12x128xbf16, #tpu.memory_space<vmem>>, %arg4: memref<1x128xf32, #tpu.memory_space<vmem>>, %arg5: memref<1x208x128xbf16, #tpu.memory_space<vmem>>) attributes {dimension_semantics = [#tpu.dimension_semantics<parallel>, #tpu.dimension_semantics<parallel>], iteration_bounds = array<i64: 2, 1>, scalar_prefetch = 0 : i64, scratch_operands = 0 : i64, tpu.core_type = #tpu.core_type<tc>, window_params = [{transform_indices = @transform_0, window_bounds = array<i64: 1, 240, 12>}, {pipeline_mode = #tpu.pipeline_mode<synchronous>, transform_indices = @transform_1, window_bounds = array<i64: 3, 12, 128>}, {pipeline_mode = #tpu.pipeline_mode<synchronous>, transform_indices = @transform_2, window_bounds = array<i64: 1, 128>}, {transform_indices = @transform_3, window_bounds = array<i64: 1, 208, 128>}]} {
    %c208_i32 = arith.constant 208 : i32
    %0 = arith.muli %arg1, %c208_i32 : i32
    %1 = tpu.assume_multiple %0, 16 : i32
    %cst = arith.constant 0.000000e+00 : f32
    %2 = vector.broadcast %cst : f32 to vector<208x128xf32>
    %c0_i32 = arith.constant 0 : i32
    %3 = arith.addi %1, %c0_i32 : i32
    %c0 = arith.constant 0 : index
    %4 = arith.index_cast %3 : i32 to index
    %c0_0 = arith.constant 0 : index
    %5 = vector.load %arg2[%c0, %4, %c0_0] : memref<1x240x12xbf16, #tpu.memory_space<vmem>>, vector<1x208x12xbf16>
    %6 = vector.shape_cast %5 : vector<1x208x12xbf16> to vector<208x12xbf16>
    %c0_1 = arith.constant 0 : index
    %c0_2 = arith.constant 0 : index
    %c0_3 = arith.constant 0 : index
    %7 = vector.load %arg3[%c0_1, %c0_2, %c0_3] : memref<3x12x128xbf16, #tpu.memory_space<vmem>>, vector<1x12x128xbf16>
    %8 = vector.shape_cast %7 : vector<1x12x128xbf16> to vector<12x128xbf16>
    %cst_4 = arith.constant dense<0.000000e+00> : vector<208x128xf32>
    %9 = tpu.matmul %6, %8, %cst_4 {dimension_numbers = #tpu.dot_dimension_numbers<[1], [0], [0], [1], [0, 0, 1, 1], [], []>} : vector<208x12xbf16>, vector<12x128xbf16>, vector<208x128xf32> -> vector<208x128xf32>
    %10 = arith.addf %2, %9 : vector<208x128xf32>
    %c16_i32 = arith.constant 16 : i32
    %11 = arith.addi %1, %c16_i32 : i32
    %c0_5 = arith.constant 0 : index
    %12 = arith.index_cast %11 : i32 to index
    %c0_6 = arith.constant 0 : index
    %13 = vector.load %arg2[%c0_5, %12, %c0_6] : memref<1x240x12xbf16, #tpu.memory_space<vmem>>, vector<1x208x12xbf16>
    %14 = vector.shape_cast %13 : vector<1x208x12xbf16> to vector<208x12xbf16>
    %c1 = arith.constant 1 : index
    %c0_7 = arith.constant 0 : index
    %c0_8 = arith.constant 0 : index
    %15 = vector.load %arg3[%c1, %c0_7, %c0_8] : memref<3x12x128xbf16, #tpu.memory_space<vmem>>, vector<1x12x128xbf16>
    %16 = vector.shape_cast %15 : vector<1x12x128xbf16> to vector<12x128xbf16>
    %cst_9 = arith.constant dense<0.000000e+00> : vector<208x128xf32>
    %17 = tpu.matmul %14, %16, %cst_9 {dimension_numbers = #tpu.dot_dimension_numbers<[1], [0], [0], [1], [0, 0, 1, 1], [], []>} : vector<208x12xbf16>, vector<12x128xbf16>, vector<208x128xf32> -> vector<208x128xf32>
    %18 = arith.addf %10, %17 : vector<208x128xf32>
    %c32_i32 = arith.constant 32 : i32
    %19 = arith.addi %1, %c32_i32 : i32
    %c0_10 = arith.constant 0 : index
    %20 = arith.index_cast %19 : i32 to index
    %c0_11 = arith.constant 0 : index
    %21 = vector.load %arg2[%c0_10, %20, %c0_11] : memref<1x240x12xbf16, #tpu.memory_space<vmem>>, vector<1x208x12xbf16>
    %22 = vector.shape_cast %21 : vector<1x208x12xbf16> to vector<208x12xbf16>
    %c2 = arith.constant 2 : index
    %c0_12 = arith.constant 0 : index
    %c0_13 = arith.constant 0 : index
    %23 = vector.load %arg3[%c2, %c0_12, %c0_13] : memref<3x12x128xbf16, #tpu.memory_space<vmem>>, vector<1x12x128xbf16>
    %24 = vector.shape_cast %23 : vector<1x12x128xbf16> to vector<12x128xbf16>
    %cst_14 = arith.constant dense<0.000000e+00> : vector<208x128xf32>
    %25 = tpu.matmul %22, %24, %cst_14 {dimension_numbers = #tpu.dot_dimension_numbers<[1], [0], [0], [1], [0, 0, 1, 1], [], []>} : vector<208x12xbf16>, vector<12x128xbf16>, vector<208x128xf32> -> vector<208x128xf32>
    %26 = arith.addf %18, %25 : vector<208x128xf32>
    %c0_15 = arith.constant 0 : index
    %c0_16 = arith.constant 0 : index
    %27 = vector.load %arg4[%c0_15, %c0_16] : memref<1x128xf32, #tpu.memory_space<vmem>>, vector<1x128xf32>
    %28 = vector.broadcast %27 : vector<1x128xf32> to vector<208x128xf32>
    %29 = arith.addf %26, %28 : vector<208x128xf32>
    %cst_17 = arith.constant 0.000000e+00 : f32
    %30 = vector.broadcast %cst_17 : f32 to vector<208x128xf32>
    %31 = arith.maximumf %29, %30 : vector<208x128xf32>
    %32 = arith.truncf %31 : vector<208x128xf32> to vector<208x128xbf16>
    %c0_18 = arith.constant 0 : index
    %c0_19 = arith.constant 0 : index
    %c0_20 = arith.constant 0 : index
    %33 = vector.load %arg5[%c0_18, %c0_19, %c0_20] : memref<1x208x128xbf16, #tpu.memory_space<vmem>>, vector<1x208x128xbf16>
    %34 = vector.shape_cast %33 : vector<1x208x128xbf16> to vector<208x128xbf16>
    %35 = vector.shape_cast %32 : vector<208x128xbf16> to vector<1x208x128xbf16>
    tpu.vector_store %arg5[%c0_18, %c0_19, %c0_20], %35 {strides = array<i32>} : memref<1x208x128xbf16, #tpu.memory_space<vmem>>, vector<1x208x128xbf16>,
    return
  }
  func.func @transform_0(%arg0: i32, %arg1: i32) -> (i32, i32, i32) {
    %c0_i32 = arith.constant 0 : i32
    %c0_i32_0 = arith.constant 0 : i32
    %c0_i32_1 = arith.constant 0 : i32
    return %arg0, %c0_i32, %c0_i32_0 : i32, i32, i32
  }
  func.func @transform_1(%arg0: i32, %arg1: i32) -> (i32, i32, i32) {
    %c0_i32 = arith.constant 0 : i32
    %c0_i32_0 = arith.constant 0 : i32
    %c0_i32_1 = arith.constant 0 : i32
    %c0_i32_2 = arith.constant 0 : i32
    return %c0_i32, %c0_i32_0, %c0_i32_1 : i32, i32, i32
  }
  func.func @transform_2(%arg0: i32, %arg1: i32) -> (i32, i32) {
    %c0_i32 = arith.constant 0 : i32
    %c0_i32_0 = arith.constant 0 : i32
    %c0_i32_1 = arith.constant 0 : i32
    return %c0_i32, %c0_i32_0 : i32, i32
  }
  func.func @transform_3(%arg0: i32, %arg1: i32) -> (i32, i32, i32) {
    %c0_i32 = arith.constant 0 : i32
    %c0_i32_0 = arith.constant 0 : i32
    return %arg0, %arg1, %c0_i32 : i32, i32, i32
  }
}

module attributes {stable_mosaic.version = 11 : i64} {
  func.func @kernel(%arg0: i32, %arg1: i32, %arg2: memref<1x112x12xbf16, #tpu.memory_space<vmem>>, %arg3: memref<3x12x128xbf16, #tpu.memory_space<vmem>>, %arg4: memref<1x128xf32, #tpu.memory_space<vmem>>, %arg5: memref<1x80x128xbf16, #tpu.memory_space<vmem>>) attributes {dimension_semantics = [#tpu.dimension_semantics<parallel>, #tpu.dimension_semantics<parallel>], iteration_bounds = array<i64: 2, 1>, scalar_prefetch = 0 : i64, scratch_operands = 0 : i64, tpu.core_type = #tpu.core_type<tc>, window_params = [{transform_indices = @transform_0, window_bounds = array<i64: 1, 112, 12>}, {pipeline_mode = #tpu.pipeline_mode<synchronous>, transform_indices = @transform_1, window_bounds = array<i64: 3, 12, 128>}, {pipeline_mode = #tpu.pipeline_mode<synchronous>, transform_indices = @transform_2, window_bounds = array<i64: 1, 128>}, {transform_indices = @transform_3, window_bounds = array<i64: 1, 80, 128>}]} {
    %c80_i32 = arith.constant 80 : i32
    %0 = arith.muli %arg1, %c80_i32 : i32
    %1 = tpu.assume_multiple %0, 16 : i32
    %cst = arith.constant 0.000000e+00 : f32
    %2 = vector.broadcast %cst : f32 to vector<80x128xf32>
    %c0_i32 = arith.constant 0 : i32
    %3 = arith.addi %1, %c0_i32 : i32
    %c0 = arith.constant 0 : index
    %4 = arith.index_cast %3 : i32 to index
    %c0_0 = arith.constant 0 : index
    %5 = vector.load %arg2[%c0, %4, %c0_0] : memref<1x112x12xbf16, #tpu.memory_space<vmem>>, vector<1x80x12xbf16>
    %6 = vector.shape_cast %5 : vector<1x80x12xbf16> to vector<80x12xbf16>
    %c0_1 = arith.constant 0 : index
    %c0_2 = arith.constant 0 : index
    %c0_3 = arith.constant 0 : index
    %7 = vector.load %arg3[%c0_1, %c0_2, %c0_3] : memref<3x12x128xbf16, #tpu.memory_space<vmem>>, vector<1x12x128xbf16>
    %8 = vector.shape_cast %7 : vector<1x12x128xbf16> to vector<12x128xbf16>
    %cst_4 = arith.constant dense<0.000000e+00> : vector<80x128xf32>
    %9 = tpu.matmul %6, %8, %cst_4 {dimension_numbers = #tpu.dot_dimension_numbers<[1], [0], [0], [1], [0, 0, 1, 1], [], []>} : vector<80x12xbf16>, vector<12x128xbf16>, vector<80x128xf32> -> vector<80x128xf32>
    %10 = arith.addf %2, %9 : vector<80x128xf32>
    %c16_i32 = arith.constant 16 : i32
    %11 = arith.addi %1, %c16_i32 : i32
    %c0_5 = arith.constant 0 : index
    %12 = arith.index_cast %11 : i32 to index
    %c0_6 = arith.constant 0 : index
    %13 = vector.load %arg2[%c0_5, %12, %c0_6] : memref<1x112x12xbf16, #tpu.memory_space<vmem>>, vector<1x80x12xbf16>
    %14 = vector.shape_cast %13 : vector<1x80x12xbf16> to vector<80x12xbf16>
    %c1 = arith.constant 1 : index
    %c0_7 = arith.constant 0 : index
    %c0_8 = arith.constant 0 : index
    %15 = vector.load %arg3[%c1, %c0_7, %c0_8] : memref<3x12x128xbf16, #tpu.memory_space<vmem>>, vector<1x12x128xbf16>
    %16 = vector.shape_cast %15 : vector<1x12x128xbf16> to vector<12x128xbf16>
    %cst_9 = arith.constant dense<0.000000e+00> : vector<80x128xf32>
    %17 = tpu.matmul %14, %16, %cst_9 {dimension_numbers = #tpu.dot_dimension_numbers<[1], [0], [0], [1], [0, 0, 1, 1], [], []>} : vector<80x12xbf16>, vector<12x128xbf16>, vector<80x128xf32> -> vector<80x128xf32>
    %18 = arith.addf %10, %17 : vector<80x128xf32>
    %c32_i32 = arith.constant 32 : i32
    %19 = arith.addi %1, %c32_i32 : i32
    %c0_10 = arith.constant 0 : index
    %20 = arith.index_cast %19 : i32 to index
    %c0_11 = arith.constant 0 : index
    %21 = vector.load %arg2[%c0_10, %20, %c0_11] : memref<1x112x12xbf16, #tpu.memory_space<vmem>>, vector<1x80x12xbf16>
    %22 = vector.shape_cast %21 : vector<1x80x12xbf16> to vector<80x12xbf16>
    %c2 = arith.constant 2 : index
    %c0_12 = arith.constant 0 : index
    %c0_13 = arith.constant 0 : index
    %23 = vector.load %arg3[%c2, %c0_12, %c0_13] : memref<3x12x128xbf16, #tpu.memory_space<vmem>>, vector<1x12x128xbf16>
    %24 = vector.shape_cast %23 : vector<1x12x128xbf16> to vector<12x128xbf16>
    %cst_14 = arith.constant dense<0.000000e+00> : vector<80x128xf32>
    %25 = tpu.matmul %22, %24, %cst_14 {dimension_numbers = #tpu.dot_dimension_numbers<[1], [0], [0], [1], [0, 0, 1, 1], [], []>} : vector<80x12xbf16>, vector<12x128xbf16>, vector<80x128xf32> -> vector<80x128xf32>
    %26 = arith.addf %18, %25 : vector<80x128xf32>
    %c0_15 = arith.constant 0 : index
    %c0_16 = arith.constant 0 : index
    %27 = vector.load %arg4[%c0_15, %c0_16] : memref<1x128xf32, #tpu.memory_space<vmem>>, vector<1x128xf32>
    %28 = vector.broadcast %27 : vector<1x128xf32> to vector<80x128xf32>
    %29 = arith.addf %26, %28 : vector<80x128xf32>
    %cst_17 = arith.constant 0.000000e+00 : f32
    %30 = vector.broadcast %cst_17 : f32 to vector<80x128xf32>
    %31 = arith.maximumf %29, %30 : vector<80x128xf32>
    %32 = arith.truncf %31 : vector<80x128xf32> to vector<80x128xbf16>
    %c0_18 = arith.constant 0 : index
    %c0_19 = arith.constant 0 : index
    %c0_20 = arith.constant 0 : index
    %33 = vector.load %arg5[%c0_18, %c0_19, %c0_20] : memref<1x80x128xbf16, #tpu.memory_space<vmem>>, vector<1x80x128xbf16>
    %34 = vector.shape_cast %33 : vector<1x80x128xbf16> to vector<80x128xbf16>
    %35 = vector.shape_cast %32 : vector<80x128xbf16> to vector<1x80x128xbf16>
    tpu.vector_store %arg5[%c0_18, %c0_19, %c0_20], %35 {strides = array<i32>} : memref<1x80x128xbf16, #tpu.memory_space<vmem>>, vector<1x80x128xbf16>,
    return
  }
  func.func @transform_0(%arg0: i32, %arg1: i32) -> (i32, i32, i32) {
    %c0_i32 = arith.constant 0 : i32
    %c0_i32_0 = arith.constant 0 : i32
    %c0_i32_1 = arith.constant 0 : i32
    return %arg0, %c0_i32, %c0_i32_0 : i32, i32, i32
  }
  func.func @transform_1(%arg0: i32, %arg1: i32) -> (i32, i32, i32) {
    %c0_i32 = arith.constant 0 : i32
    %c0_i32_0 = arith.constant 0 : i32
    %c0_i32_1 = arith.constant 0 : i32
    %c0_i32_2 = arith.constant 0 : i32
    return %c0_i32, %c0_i32_0, %c0_i32_1 : i32, i32, i32
  }
  func.func @transform_2(%arg0: i32, %arg1: i32) -> (i32, i32) {
    %c0_i32 = arith.constant 0 : i32
    %c0_i32_0 = arith.constant 0 : i32
    %c0_i32_1 = arith.constant 0 : i32
    return %c0_i32, %c0_i32_0 : i32, i32
  }
  func.func @transform_3(%arg0: i32, %arg1: i32) -> (i32, i32, i32) {
    %c0_i32 = arith.constant 0 : i32
    %c0_i32_0 = arith.constant 0 : i32
    return %arg0, %arg1, %c0_i32 : i32, i32, i32
  }
}

module attributes {stable_mosaic.version = 11 : i64} {
  func.func @kernel(%arg0: i32, %arg1: i32, %arg2: memref<1x5x208x128xbf16, #tpu.memory_space<vmem>>, %arg3: memref<1x25x128xbf16, #tpu.memory_space<vmem>>, %arg4: memref<128x128xbf16, #tpu.memory_space<vmem>>, %arg5: memref<1x128xf32, #tpu.memory_space<vmem>>, %arg6: memref<128x128xbf16, #tpu.memory_space<vmem>>, %arg7: memref<1x128xf32, #tpu.memory_space<vmem>>, %arg8: memref<1x144x128xf32, #tpu.memory_space<vmem>>) attributes {dimension_semantics = [#tpu.dimension_semantics<parallel>, #tpu.dimension_semantics<parallel>], iteration_bounds = array<i64: 2, 1>, scalar_prefetch = 0 : i64, scratch_operands = 0 : i64, tpu.core_type = #tpu.core_type<tc>, window_params = [{transform_indices = @transform_0, window_bounds = array<i64: 1, 5, 208, 128>}, {transform_indices = @transform_1, window_bounds = array<i64: 1, 25, 128>}, {pipeline_mode = #tpu.pipeline_mode<synchronous>, transform_indices = @transform_2, window_bounds = array<i64: 128, 128>}, {pipeline_mode = #tpu.pipeline_mode<synchronous>, transform_indices = @transform_3, window_bounds = array<i64: 1, 128>}, {pipeline_mode = #tpu.pipeline_mode<synchronous>, transform_indices = @transform_4, window_bounds = array<i64: 128, 128>}, {pipeline_mode = #tpu.pipeline_mode<synchronous>, transform_indices = @transform_5, window_bounds = array<i64: 1, 128>}, {transform_indices = @transform_6, window_bounds = array<i64: 1, 144, 128>}]} {
    %c144_i32 = arith.constant 144 : i32
    %0 = arith.muli %arg1, %c144_i32 : i32
    %1 = tpu.assume_multiple %0, 16 : i32
    %cst = arith.constant 0.000000e+00 : f32
    %2 = vector.broadcast %cst : f32 to vector<144x128xf32>
    %c0_i32 = arith.constant 0 : i32
    %3 = arith.addi %1, %c0_i32 : i32
    %c0 = arith.constant 0 : index
    %c0_0 = arith.constant 0 : index
    %4 = arith.index_cast %3 : i32 to index
    %c0_1 = arith.constant 0 : index
    %5 = vector.load %arg2[%c0, %c0_0, %4, %c0_1] : memref<1x5x208x128xbf16, #tpu.memory_space<vmem>>, vector<1x1x144x128xbf16>
    %6 = vector.shape_cast %5 : vector<1x1x144x128xbf16> to vector<144x128xbf16>
    %7 = arith.extf %6 : vector<144x128xbf16> to vector<144x128xf32>
    %c0_2 = arith.constant 0 : index
    %c0_3 = arith.constant 0 : index
    %c0_4 = arith.constant 0 : index
    %8 = vector.load %arg3[%c0_2, %c0_3, %c0_4] : memref<1x25x128xbf16, #tpu.memory_space<vmem>>, vector<1x1x128xbf16>
    %9 = vector.shape_cast %8 : vector<1x1x128xbf16> to vector<1x128xbf16>
    %10 = arith.extf %9 : vector<1x128xbf16> to vector<1x128xf32>
    %11 = vector.broadcast %10 : vector<1x128xf32> to vector<144x128xf32>
    %12 = arith.mulf %7, %11 : vector<144x128xf32>
    %13 = arith.addf %2, %12 : vector<144x128xf32>
    %c0_i32_5 = arith.constant 0 : i32
    %14 = arith.addi %1, %c0_i32_5 : i32
    %c0_6 = arith.constant 0 : index
    %c1 = arith.constant 1 : index
    %15 = arith.index_cast %14 : i32 to index
    %c0_7 = arith.constant 0 : index
    %16 = vector.load %arg2[%c0_6, %c1, %15, %c0_7] : memref<1x5x208x128xbf16, #tpu.memory_space<vmem>>, vector<1x1x144x128xbf16>
    %17 = vector.shape_cast %16 : vector<1x1x144x128xbf16> to vector<144x128xbf16>
    %18 = arith.extf %17 : vector<144x128xbf16> to vector<144x128xf32>
    %c0_8 = arith.constant 0 : index
    %c1_9 = arith.constant 1 : index
    %c0_10 = arith.constant 0 : index
    %19 = vector.load %arg3[%c0_8, %c1_9, %c0_10] : memref<1x25x128xbf16, #tpu.memory_space<vmem>>, vector<1x1x128xbf16>
    %20 = vector.shape_cast %19 : vector<1x1x128xbf16> to vector<1x128xbf16>
    %21 = arith.extf %20 : vector<1x128xbf16> to vector<1x128xf32>
    %22 = vector.broadcast %21 : vector<1x128xf32> to vector<144x128xf32>
    %23 = arith.mulf %18, %22 : vector<144x128xf32>
    %24 = arith.addf %13, %23 : vector<144x128xf32>
    %c0_i32_11 = arith.constant 0 : i32
    %25 = arith.addi %1, %c0_i32_11 : i32
    %c0_12 = arith.constant 0 : index
    %c2 = arith.constant 2 : index
    %26 = arith.index_cast %25 : i32 to index
    %c0_13 = arith.constant 0 : index
    %27 = vector.load %arg2[%c0_12, %c2, %26, %c0_13] : memref<1x5x208x128xbf16, #tpu.memory_space<vmem>>, vector<1x1x144x128xbf16>
    %28 = vector.shape_cast %27 : vector<1x1x144x128xbf16> to vector<144x128xbf16>
    %29 = arith.extf %28 : vector<144x128xbf16> to vector<144x128xf32>
    %c0_14 = arith.constant 0 : index
    %c2_15 = arith.constant 2 : index
    %c0_16 = arith.constant 0 : index
    %30 = vector.load %arg3[%c0_14, %c2_15, %c0_16] : memref<1x25x128xbf16, #tpu.memory_space<vmem>>, vector<1x1x128xbf16>
    %31 = vector.shape_cast %30 : vector<1x1x128xbf16> to vector<1x128xbf16>
    %32 = arith.extf %31 : vector<1x128xbf16> to vector<1x128xf32>
    %33 = vector.broadcast %32 : vector<1x128xf32> to vector<144x128xf32>
    %34 = arith.mulf %29, %33 : vector<144x128xf32>
    %35 = arith.addf %24, %34 : vector<144x128xf32>
    %c0_i32_17 = arith.constant 0 : i32
    %36 = arith.addi %1, %c0_i32_17 : i32
    %c0_18 = arith.constant 0 : index
    %c3 = arith.constant 3 : index
    %37 = arith.index_cast %36 : i32 to index
    %c0_19 = arith.constant 0 : index
    %38 = vector.load %arg2[%c0_18, %c3, %37, %c0_19] : memref<1x5x208x128xbf16, #tpu.memory_space<vmem>>, vector<1x1x144x128xbf16>
    %39 = vector.shape_cast %38 : vector<1x1x144x128xbf16> to vector<144x128xbf16>
    %40 = arith.extf %39 : vector<144x128xbf16> to vector<144x128xf32>
    %c0_20 = arith.constant 0 : index
    %c3_21 = arith.constant 3 : index
    %c0_22 = arith.constant 0 : index
    %41 = vector.load %arg3[%c0_20, %c3_21, %c0_22] : memref<1x25x128xbf16, #tpu.memory_space<vmem>>, vector<1x1x128xbf16>
    %42 = vector.shape_cast %41 : vector<1x1x128xbf16> to vector<1x128xbf16>
    %43 = arith.extf %42 : vector<1x128xbf16> to vector<1x128xf32>
    %44 = vector.broadcast %43 : vector<1x128xf32> to vector<144x128xf32>
    %45 = arith.mulf %40, %44 : vector<144x128xf32>
    %46 = arith.addf %35, %45 : vector<144x128xf32>
    %c0_i32_23 = arith.constant 0 : i32
    %47 = arith.addi %1, %c0_i32_23 : i32
    %c0_24 = arith.constant 0 : index
    %c4 = arith.constant 4 : index
    %48 = arith.index_cast %47 : i32 to index
    %c0_25 = arith.constant 0 : index
    %49 = vector.load %arg2[%c0_24, %c4, %48, %c0_25] : memref<1x5x208x128xbf16, #tpu.memory_space<vmem>>, vector<1x1x144x128xbf16>
    %50 = vector.shape_cast %49 : vector<1x1x144x128xbf16> to vector<144x128xbf16>
    %51 = arith.extf %50 : vector<144x128xbf16> to vector<144x128xf32>
    %c0_26 = arith.constant 0 : index
    %c4_27 = arith.constant 4 : index
    %c0_28 = arith.constant 0 : index
    %52 = vector.load %arg3[%c0_26, %c4_27, %c0_28] : memref<1x25x128xbf16, #tpu.memory_space<vmem>>, vector<1x1x128xbf16>
    %53 = vector.shape_cast %52 : vector<1x1x128xbf16> to vector<1x128xbf16>
    %54 = arith.extf %53 : vector<1x128xbf16> to vector<1x128xf32>
    %55 = vector.broadcast %54 : vector<1x128xf32> to vector<144x128xf32>
    %56 = arith.mulf %51, %55 : vector<144x128xf32>
    %57 = arith.addf %46, %56 : vector<144x128xf32>
    %c16_i32 = arith.constant 16 : i32
    %58 = arith.addi %1, %c16_i32 : i32
    %c0_29 = arith.constant 0 : index
    %c0_30 = arith.constant 0 : index
    %59 = arith.index_cast %58 : i32 to index
    %c0_31 = arith.constant 0 : index
    %60 = vector.load %arg2[%c0_29, %c0_30, %59, %c0_31] : memref<1x5x208x128xbf16, #tpu.memory_space<vmem>>, vector<1x1x144x128xbf16>
    %61 = vector.shape_cast %60 : vector<1x1x144x128xbf16> to vector<144x128xbf16>
    %62 = arith.extf %61 : vector<144x128xbf16> to vector<144x128xf32>
    %c0_32 = arith.constant 0 : index
    %c5 = arith.constant 5 : index
    %c0_33 = arith.constant 0 : index
    %63 = vector.load %arg3[%c0_32, %c5, %c0_33] : memref<1x25x128xbf16, #tpu.memory_space<vmem>>, vector<1x1x128xbf16>
    %64 = vector.shape_cast %63 : vector<1x1x128xbf16> to vector<1x128xbf16>
    %65 = arith.extf %64 : vector<1x128xbf16> to vector<1x128xf32>
    %66 = vector.broadcast %65 : vector<1x128xf32> to vector<144x128xf32>
    %67 = arith.mulf %62, %66 : vector<144x128xf32>
    %68 = arith.addf %57, %67 : vector<144x128xf32>
    %c16_i32_34 = arith.constant 16 : i32
    %69 = arith.addi %1, %c16_i32_34 : i32
    %c0_35 = arith.constant 0 : index
    %c1_36 = arith.constant 1 : index
    %70 = arith.index_cast %69 : i32 to index
    %c0_37 = arith.constant 0 : index
    %71 = vector.load %arg2[%c0_35, %c1_36, %70, %c0_37] : memref<1x5x208x128xbf16, #tpu.memory_space<vmem>>, vector<1x1x144x128xbf16>
    %72 = vector.shape_cast %71 : vector<1x1x144x128xbf16> to vector<144x128xbf16>
    %73 = arith.extf %72 : vector<144x128xbf16> to vector<144x128xf32>
    %c0_38 = arith.constant 0 : index
    %c6 = arith.constant 6 : index
    %c0_39 = arith.constant 0 : index
    %74 = vector.load %arg3[%c0_38, %c6, %c0_39] : memref<1x25x128xbf16, #tpu.memory_space<vmem>>, vector<1x1x128xbf16>
    %75 = vector.shape_cast %74 : vector<1x1x128xbf16> to vector<1x128xbf16>
    %76 = arith.extf %75 : vector<1x128xbf16> to vector<1x128xf32>
    %77 = vector.broadcast %76 : vector<1x128xf32> to vector<144x128xf32>
    %78 = arith.mulf %73, %77 : vector<144x128xf32>
    %79 = arith.addf %68, %78 : vector<144x128xf32>
    %c16_i32_40 = arith.constant 16 : i32
    %80 = arith.addi %1, %c16_i32_40 : i32
    %c0_41 = arith.constant 0 : index
    %c2_42 = arith.constant 2 : index
    %81 = arith.index_cast %80 : i32 to index
    %c0_43 = arith.constant 0 : index
    %82 = vector.load %arg2[%c0_41, %c2_42, %81, %c0_43] : memref<1x5x208x128xbf16, #tpu.memory_space<vmem>>, vector<1x1x144x128xbf16>
    %83 = vector.shape_cast %82 : vector<1x1x144x128xbf16> to vector<144x128xbf16>
    %84 = arith.extf %83 : vector<144x128xbf16> to vector<144x128xf32>
    %c0_44 = arith.constant 0 : index
    %c7 = arith.constant 7 : index
    %c0_45 = arith.constant 0 : index
    %85 = vector.load %arg3[%c0_44, %c7, %c0_45] : memref<1x25x128xbf16, #tpu.memory_space<vmem>>, vector<1x1x128xbf16>
    %86 = vector.shape_cast %85 : vector<1x1x128xbf16> to vector<1x128xbf16>
    %87 = arith.extf %86 : vector<1x128xbf16> to vector<1x128xf32>
    %88 = vector.broadcast %87 : vector<1x128xf32> to vector<144x128xf32>
    %89 = arith.mulf %84, %88 : vector<144x128xf32>
    %90 = arith.addf %79, %89 : vector<144x128xf32>
    %c16_i32_46 = arith.constant 16 : i32
    %91 = arith.addi %1, %c16_i32_46 : i32
    %c0_47 = arith.constant 0 : index
    %c3_48 = arith.constant 3 : index
    %92 = arith.index_cast %91 : i32 to index
    %c0_49 = arith.constant 0 : index
    %93 = vector.load %arg2[%c0_47, %c3_48, %92, %c0_49] : memref<1x5x208x128xbf16, #tpu.memory_space<vmem>>, vector<1x1x144x128xbf16>
    %94 = vector.shape_cast %93 : vector<1x1x144x128xbf16> to vector<144x128xbf16>
    %95 = arith.extf %94 : vector<144x128xbf16> to vector<144x128xf32>
    %c0_50 = arith.constant 0 : index
    %c8 = arith.constant 8 : index
    %c0_51 = arith.constant 0 : index
    %96 = vector.load %arg3[%c0_50, %c8, %c0_51] : memref<1x25x128xbf16, #tpu.memory_space<vmem>>, vector<1x1x128xbf16>
    %97 = vector.shape_cast %96 : vector<1x1x128xbf16> to vector<1x128xbf16>
    %98 = arith.extf %97 : vector<1x128xbf16> to vector<1x128xf32>
    %99 = vector.broadcast %98 : vector<1x128xf32> to vector<144x128xf32>
    %100 = arith.mulf %95, %99 : vector<144x128xf32>
    %101 = arith.addf %90, %100 : vector<144x128xf32>
    %c16_i32_52 = arith.constant 16 : i32
    %102 = arith.addi %1, %c16_i32_52 : i32
    %c0_53 = arith.constant 0 : index
    %c4_54 = arith.constant 4 : index
    %103 = arith.index_cast %102 : i32 to index
    %c0_55 = arith.constant 0 : index
    %104 = vector.load %arg2[%c0_53, %c4_54, %103, %c0_55] : memref<1x5x208x128xbf16, #tpu.memory_space<vmem>>, vector<1x1x144x128xbf16>
    %105 = vector.shape_cast %104 : vector<1x1x144x128xbf16> to vector<144x128xbf16>
    %106 = arith.extf %105 : vector<144x128xbf16> to vector<144x128xf32>
    %c0_56 = arith.constant 0 : index
    %c9 = arith.constant 9 : index
    %c0_57 = arith.constant 0 : index
    %107 = vector.load %arg3[%c0_56, %c9, %c0_57] : memref<1x25x128xbf16, #tpu.memory_space<vmem>>, vector<1x1x128xbf16>
    %108 = vector.shape_cast %107 : vector<1x1x128xbf16> to vector<1x128xbf16>
    %109 = arith.extf %108 : vector<1x128xbf16> to vector<1x128xf32>
    %110 = vector.broadcast %109 : vector<1x128xf32> to vector<144x128xf32>
    %111 = arith.mulf %106, %110 : vector<144x128xf32>
    %112 = arith.addf %101, %111 : vector<144x128xf32>
    %c32_i32 = arith.constant 32 : i32
    %113 = arith.addi %1, %c32_i32 : i32
    %c0_58 = arith.constant 0 : index
    %c0_59 = arith.constant 0 : index
    %114 = arith.index_cast %113 : i32 to index
    %c0_60 = arith.constant 0 : index
    %115 = vector.load %arg2[%c0_58, %c0_59, %114, %c0_60] : memref<1x5x208x128xbf16, #tpu.memory_space<vmem>>, vector<1x1x144x128xbf16>
    %116 = vector.shape_cast %115 : vector<1x1x144x128xbf16> to vector<144x128xbf16>
    %117 = arith.extf %116 : vector<144x128xbf16> to vector<144x128xf32>
    %c0_61 = arith.constant 0 : index
    %c10 = arith.constant 10 : index
    %c0_62 = arith.constant 0 : index
    %118 = vector.load %arg3[%c0_61, %c10, %c0_62] : memref<1x25x128xbf16, #tpu.memory_space<vmem>>, vector<1x1x128xbf16>
    %119 = vector.shape_cast %118 : vector<1x1x128xbf16> to vector<1x128xbf16>
    %120 = arith.extf %119 : vector<1x128xbf16> to vector<1x128xf32>
    %121 = vector.broadcast %120 : vector<1x128xf32> to vector<144x128xf32>
    %122 = arith.mulf %117, %121 : vector<144x128xf32>
    %123 = arith.addf %112, %122 : vector<144x128xf32>
    %c32_i32_63 = arith.constant 32 : i32
    %124 = arith.addi %1, %c32_i32_63 : i32
    %c0_64 = arith.constant 0 : index
    %c1_65 = arith.constant 1 : index
    %125 = arith.index_cast %124 : i32 to index
    %c0_66 = arith.constant 0 : index
    %126 = vector.load %arg2[%c0_64, %c1_65, %125, %c0_66] : memref<1x5x208x128xbf16, #tpu.memory_space<vmem>>, vector<1x1x144x128xbf16>
    %127 = vector.shape_cast %126 : vector<1x1x144x128xbf16> to vector<144x128xbf16>
    %128 = arith.extf %127 : vector<144x128xbf16> to vector<144x128xf32>
    %c0_67 = arith.constant 0 : index
    %c11 = arith.constant 11 : index
    %c0_68 = arith.constant 0 : index
    %129 = vector.load %arg3[%c0_67, %c11, %c0_68] : memref<1x25x128xbf16, #tpu.memory_space<vmem>>, vector<1x1x128xbf16>
    %130 = vector.shape_cast %129 : vector<1x1x128xbf16> to vector<1x128xbf16>
    %131 = arith.extf %130 : vector<1x128xbf16> to vector<1x128xf32>
    %132 = vector.broadcast %131 : vector<1x128xf32> to vector<144x128xf32>
    %133 = arith.mulf %128, %132 : vector<144x128xf32>
    %134 = arith.addf %123, %133 : vector<144x128xf32>
    %c32_i32_69 = arith.constant 32 : i32
    %135 = arith.addi %1, %c32_i32_69 : i32
    %c0_70 = arith.constant 0 : index
    %c2_71 = arith.constant 2 : index
    %136 = arith.index_cast %135 : i32 to index
    %c0_72 = arith.constant 0 : index
    %137 = vector.load %arg2[%c0_70, %c2_71, %136, %c0_72] : memref<1x5x208x128xbf16, #tpu.memory_space<vmem>>, vector<1x1x144x128xbf16>
    %138 = vector.shape_cast %137 : vector<1x1x144x128xbf16> to vector<144x128xbf16>
    %139 = arith.extf %138 : vector<144x128xbf16> to vector<144x128xf32>
    %c0_73 = arith.constant 0 : index
    %c12 = arith.constant 12 : index
    %c0_74 = arith.constant 0 : index
    %140 = vector.load %arg3[%c0_73, %c12, %c0_74] : memref<1x25x128xbf16, #tpu.memory_space<vmem>>, vector<1x1x128xbf16>
    %141 = vector.shape_cast %140 : vector<1x1x128xbf16> to vector<1x128xbf16>
    %142 = arith.extf %141 : vector<1x128xbf16> to vector<1x128xf32>
    %143 = vector.broadcast %142 : vector<1x128xf32> to vector<144x128xf32>
    %144 = arith.mulf %139, %143 : vector<144x128xf32>
    %145 = arith.addf %134, %144 : vector<144x128xf32>
    %c32_i32_75 = arith.constant 32 : i32
    %146 = arith.addi %1, %c32_i32_75 : i32
    %c0_76 = arith.constant 0 : index
    %c3_77 = arith.constant 3 : index
    %147 = arith.index_cast %146 : i32 to index
    %c0_78 = arith.constant 0 : index
    %148 = vector.load %arg2[%c0_76, %c3_77, %147, %c0_78] : memref<1x5x208x128xbf16, #tpu.memory_space<vmem>>, vector<1x1x144x128xbf16>
    %149 = vector.shape_cast %148 : vector<1x1x144x128xbf16> to vector<144x128xbf16>
    %150 = arith.extf %149 : vector<144x128xbf16> to vector<144x128xf32>
    %c0_79 = arith.constant 0 : index
    %c13 = arith.constant 13 : index
    %c0_80 = arith.constant 0 : index
    %151 = vector.load %arg3[%c0_79, %c13, %c0_80] : memref<1x25x128xbf16, #tpu.memory_space<vmem>>, vector<1x1x128xbf16>
    %152 = vector.shape_cast %151 : vector<1x1x128xbf16> to vector<1x128xbf16>
    %153 = arith.extf %152 : vector<1x128xbf16> to vector<1x128xf32>
    %154 = vector.broadcast %153 : vector<1x128xf32> to vector<144x128xf32>
    %155 = arith.mulf %150, %154 : vector<144x128xf32>
    %156 = arith.addf %145, %155 : vector<144x128xf32>
    %c32_i32_81 = arith.constant 32 : i32
    %157 = arith.addi %1, %c32_i32_81 : i32
    %c0_82 = arith.constant 0 : index
    %c4_83 = arith.constant 4 : index
    %158 = arith.index_cast %157 : i32 to index
    %c0_84 = arith.constant 0 : index
    %159 = vector.load %arg2[%c0_82, %c4_83, %158, %c0_84] : memref<1x5x208x128xbf16, #tpu.memory_space<vmem>>, vector<1x1x144x128xbf16>
    %160 = vector.shape_cast %159 : vector<1x1x144x128xbf16> to vector<144x128xbf16>
    %161 = arith.extf %160 : vector<144x128xbf16> to vector<144x128xf32>
    %c0_85 = arith.constant 0 : index
    %c14 = arith.constant 14 : index
    %c0_86 = arith.constant 0 : index
    %162 = vector.load %arg3[%c0_85, %c14, %c0_86] : memref<1x25x128xbf16, #tpu.memory_space<vmem>>, vector<1x1x128xbf16>
    %163 = vector.shape_cast %162 : vector<1x1x128xbf16> to vector<1x128xbf16>
    %164 = arith.extf %163 : vector<1x128xbf16> to vector<1x128xf32>
    %165 = vector.broadcast %164 : vector<1x128xf32> to vector<144x128xf32>
    %166 = arith.mulf %161, %165 : vector<144x128xf32>
    %167 = arith.addf %156, %166 : vector<144x128xf32>
    %c48_i32 = arith.constant 48 : i32
    %168 = arith.addi %1, %c48_i32 : i32
    %c0_87 = arith.constant 0 : index
    %c0_88 = arith.constant 0 : index
    %169 = arith.index_cast %168 : i32 to index
    %c0_89 = arith.constant 0 : index
    %170 = vector.load %arg2[%c0_87, %c0_88, %169, %c0_89] : memref<1x5x208x128xbf16, #tpu.memory_space<vmem>>, vector<1x1x144x128xbf16>
    %171 = vector.shape_cast %170 : vector<1x1x144x128xbf16> to vector<144x128xbf16>
    %172 = arith.extf %171 : vector<144x128xbf16> to vector<144x128xf32>
    %c0_90 = arith.constant 0 : index
    %c15 = arith.constant 15 : index
    %c0_91 = arith.constant 0 : index
    %173 = vector.load %arg3[%c0_90, %c15, %c0_91] : memref<1x25x128xbf16, #tpu.memory_space<vmem>>, vector<1x1x128xbf16>
    %174 = vector.shape_cast %173 : vector<1x1x128xbf16> to vector<1x128xbf16>
    %175 = arith.extf %174 : vector<1x128xbf16> to vector<1x128xf32>
    %176 = vector.broadcast %175 : vector<1x128xf32> to vector<144x128xf32>
    %177 = arith.mulf %172, %176 : vector<144x128xf32>
    %178 = arith.addf %167, %177 : vector<144x128xf32>
    %c48_i32_92 = arith.constant 48 : i32
    %179 = arith.addi %1, %c48_i32_92 : i32
    %c0_93 = arith.constant 0 : index
    %c1_94 = arith.constant 1 : index
    %180 = arith.index_cast %179 : i32 to index
    %c0_95 = arith.constant 0 : index
    %181 = vector.load %arg2[%c0_93, %c1_94, %180, %c0_95] : memref<1x5x208x128xbf16, #tpu.memory_space<vmem>>, vector<1x1x144x128xbf16>
    %182 = vector.shape_cast %181 : vector<1x1x144x128xbf16> to vector<144x128xbf16>
    %183 = arith.extf %182 : vector<144x128xbf16> to vector<144x128xf32>
    %c0_96 = arith.constant 0 : index
    %c16 = arith.constant 16 : index
    %c0_97 = arith.constant 0 : index
    %184 = vector.load %arg3[%c0_96, %c16, %c0_97] : memref<1x25x128xbf16, #tpu.memory_space<vmem>>, vector<1x1x128xbf16>
    %185 = vector.shape_cast %184 : vector<1x1x128xbf16> to vector<1x128xbf16>
    %186 = arith.extf %185 : vector<1x128xbf16> to vector<1x128xf32>
    %187 = vector.broadcast %186 : vector<1x128xf32> to vector<144x128xf32>
    %188 = arith.mulf %183, %187 : vector<144x128xf32>
    %189 = arith.addf %178, %188 : vector<144x128xf32>
    %c48_i32_98 = arith.constant 48 : i32
    %190 = arith.addi %1, %c48_i32_98 : i32
    %c0_99 = arith.constant 0 : index
    %c2_100 = arith.constant 2 : index
    %191 = arith.index_cast %190 : i32 to index
    %c0_101 = arith.constant 0 : index
    %192 = vector.load %arg2[%c0_99, %c2_100, %191, %c0_101] : memref<1x5x208x128xbf16, #tpu.memory_space<vmem>>, vector<1x1x144x128xbf16>
    %193 = vector.shape_cast %192 : vector<1x1x144x128xbf16> to vector<144x128xbf16>
    %194 = arith.extf %193 : vector<144x128xbf16> to vector<144x128xf32>
    %c0_102 = arith.constant 0 : index
    %c17 = arith.constant 17 : index
    %c0_103 = arith.constant 0 : index
    %195 = vector.load %arg3[%c0_102, %c17, %c0_103] : memref<1x25x128xbf16, #tpu.memory_space<vmem>>, vector<1x1x128xbf16>
    %196 = vector.shape_cast %195 : vector<1x1x128xbf16> to vector<1x128xbf16>
    %197 = arith.extf %196 : vector<1x128xbf16> to vector<1x128xf32>
    %198 = vector.broadcast %197 : vector<1x128xf32> to vector<144x128xf32>
    %199 = arith.mulf %194, %198 : vector<144x128xf32>
    %200 = arith.addf %189, %199 : vector<144x128xf32>
    %c48_i32_104 = arith.constant 48 : i32
    %201 = arith.addi %1, %c48_i32_104 : i32
    %c0_105 = arith.constant 0 : index
    %c3_106 = arith.constant 3 : index
    %202 = arith.index_cast %201 : i32 to index
    %c0_107 = arith.constant 0 : index
    %203 = vector.load %arg2[%c0_105, %c3_106, %202, %c0_107] : memref<1x5x208x128xbf16, #tpu.memory_space<vmem>>, vector<1x1x144x128xbf16>
    %204 = vector.shape_cast %203 : vector<1x1x144x128xbf16> to vector<144x128xbf16>
    %205 = arith.extf %204 : vector<144x128xbf16> to vector<144x128xf32>
    %c0_108 = arith.constant 0 : index
    %c18 = arith.constant 18 : index
    %c0_109 = arith.constant 0 : index
    %206 = vector.load %arg3[%c0_108, %c18, %c0_109] : memref<1x25x128xbf16, #tpu.memory_space<vmem>>, vector<1x1x128xbf16>
    %207 = vector.shape_cast %206 : vector<1x1x128xbf16> to vector<1x128xbf16>
    %208 = arith.extf %207 : vector<1x128xbf16> to vector<1x128xf32>
    %209 = vector.broadcast %208 : vector<1x128xf32> to vector<144x128xf32>
    %210 = arith.mulf %205, %209 : vector<144x128xf32>
    %211 = arith.addf %200, %210 : vector<144x128xf32>
    %c48_i32_110 = arith.constant 48 : i32
    %212 = arith.addi %1, %c48_i32_110 : i32
    %c0_111 = arith.constant 0 : index
    %c4_112 = arith.constant 4 : index
    %213 = arith.index_cast %212 : i32 to index
    %c0_113 = arith.constant 0 : index
    %214 = vector.load %arg2[%c0_111, %c4_112, %213, %c0_113] : memref<1x5x208x128xbf16, #tpu.memory_space<vmem>>, vector<1x1x144x128xbf16>
    %215 = vector.shape_cast %214 : vector<1x1x144x128xbf16> to vector<144x128xbf16>
    %216 = arith.extf %215 : vector<144x128xbf16> to vector<144x128xf32>
    %c0_114 = arith.constant 0 : index
    %c19 = arith.constant 19 : index
    %c0_115 = arith.constant 0 : index
    %217 = vector.load %arg3[%c0_114, %c19, %c0_115] : memref<1x25x128xbf16, #tpu.memory_space<vmem>>, vector<1x1x128xbf16>
    %218 = vector.shape_cast %217 : vector<1x1x128xbf16> to vector<1x128xbf16>
    %219 = arith.extf %218 : vector<1x128xbf16> to vector<1x128xf32>
    %220 = vector.broadcast %219 : vector<1x128xf32> to vector<144x128xf32>
    %221 = arith.mulf %216, %220 : vector<144x128xf32>
    %222 = arith.addf %211, %221 : vector<144x128xf32>
    %c64_i32 = arith.constant 64 : i32
    %223 = arith.addi %1, %c64_i32 : i32
    %c0_116 = arith.constant 0 : index
    %c0_117 = arith.constant 0 : index
    %224 = arith.index_cast %223 : i32 to index
    %c0_118 = arith.constant 0 : index
    %225 = vector.load %arg2[%c0_116, %c0_117, %224, %c0_118] : memref<1x5x208x128xbf16, #tpu.memory_space<vmem>>, vector<1x1x144x128xbf16>
    %226 = vector.shape_cast %225 : vector<1x1x144x128xbf16> to vector<144x128xbf16>
    %227 = arith.extf %226 : vector<144x128xbf16> to vector<144x128xf32>
    %c0_119 = arith.constant 0 : index
    %c20 = arith.constant 20 : index
    %c0_120 = arith.constant 0 : index
    %228 = vector.load %arg3[%c0_119, %c20, %c0_120] : memref<1x25x128xbf16, #tpu.memory_space<vmem>>, vector<1x1x128xbf16>
    %229 = vector.shape_cast %228 : vector<1x1x128xbf16> to vector<1x128xbf16>
    %230 = arith.extf %229 : vector<1x128xbf16> to vector<1x128xf32>
    %231 = vector.broadcast %230 : vector<1x128xf32> to vector<144x128xf32>
    %232 = arith.mulf %227, %231 : vector<144x128xf32>
    %233 = arith.addf %222, %232 : vector<144x128xf32>
    %c64_i32_121 = arith.constant 64 : i32
    %234 = arith.addi %1, %c64_i32_121 : i32
    %c0_122 = arith.constant 0 : index
    %c1_123 = arith.constant 1 : index
    %235 = arith.index_cast %234 : i32 to index
    %c0_124 = arith.constant 0 : index
    %236 = vector.load %arg2[%c0_122, %c1_123, %235, %c0_124] : memref<1x5x208x128xbf16, #tpu.memory_space<vmem>>, vector<1x1x144x128xbf16>
    %237 = vector.shape_cast %236 : vector<1x1x144x128xbf16> to vector<144x128xbf16>
    %238 = arith.extf %237 : vector<144x128xbf16> to vector<144x128xf32>
    %c0_125 = arith.constant 0 : index
    %c21 = arith.constant 21 : index
    %c0_126 = arith.constant 0 : index
    %239 = vector.load %arg3[%c0_125, %c21, %c0_126] : memref<1x25x128xbf16, #tpu.memory_space<vmem>>, vector<1x1x128xbf16>
    %240 = vector.shape_cast %239 : vector<1x1x128xbf16> to vector<1x128xbf16>
    %241 = arith.extf %240 : vector<1x128xbf16> to vector<1x128xf32>
    %242 = vector.broadcast %241 : vector<1x128xf32> to vector<144x128xf32>
    %243 = arith.mulf %238, %242 : vector<144x128xf32>
    %244 = arith.addf %233, %243 : vector<144x128xf32>
    %c64_i32_127 = arith.constant 64 : i32
    %245 = arith.addi %1, %c64_i32_127 : i32
    %c0_128 = arith.constant 0 : index
    %c2_129 = arith.constant 2 : index
    %246 = arith.index_cast %245 : i32 to index
    %c0_130 = arith.constant 0 : index
    %247 = vector.load %arg2[%c0_128, %c2_129, %246, %c0_130] : memref<1x5x208x128xbf16, #tpu.memory_space<vmem>>, vector<1x1x144x128xbf16>
    %248 = vector.shape_cast %247 : vector<1x1x144x128xbf16> to vector<144x128xbf16>
    %249 = arith.extf %248 : vector<144x128xbf16> to vector<144x128xf32>
    %c0_131 = arith.constant 0 : index
    %c22 = arith.constant 22 : index
    %c0_132 = arith.constant 0 : index
    %250 = vector.load %arg3[%c0_131, %c22, %c0_132] : memref<1x25x128xbf16, #tpu.memory_space<vmem>>, vector<1x1x128xbf16>
    %251 = vector.shape_cast %250 : vector<1x1x128xbf16> to vector<1x128xbf16>
    %252 = arith.extf %251 : vector<1x128xbf16> to vector<1x128xf32>
    %253 = vector.broadcast %252 : vector<1x128xf32> to vector<144x128xf32>
    %254 = arith.mulf %249, %253 : vector<144x128xf32>
    %255 = arith.addf %244, %254 : vector<144x128xf32>
    %c64_i32_133 = arith.constant 64 : i32
    %256 = arith.addi %1, %c64_i32_133 : i32
    %c0_134 = arith.constant 0 : index
    %c3_135 = arith.constant 3 : index
    %257 = arith.index_cast %256 : i32 to index
    %c0_136 = arith.constant 0 : index
    %258 = vector.load %arg2[%c0_134, %c3_135, %257, %c0_136] : memref<1x5x208x128xbf16, #tpu.memory_space<vmem>>, vector<1x1x144x128xbf16>
    %259 = vector.shape_cast %258 : vector<1x1x144x128xbf16> to vector<144x128xbf16>
    %260 = arith.extf %259 : vector<144x128xbf16> to vector<144x128xf32>
    %c0_137 = arith.constant 0 : index
    %c23 = arith.constant 23 : index
    %c0_138 = arith.constant 0 : index
    %261 = vector.load %arg3[%c0_137, %c23, %c0_138] : memref<1x25x128xbf16, #tpu.memory_space<vmem>>, vector<1x1x128xbf16>
    %262 = vector.shape_cast %261 : vector<1x1x128xbf16> to vector<1x128xbf16>
    %263 = arith.extf %262 : vector<1x128xbf16> to vector<1x128xf32>
    %264 = vector.broadcast %263 : vector<1x128xf32> to vector<144x128xf32>
    %265 = arith.mulf %260, %264 : vector<144x128xf32>
    %266 = arith.addf %255, %265 : vector<144x128xf32>
    %c64_i32_139 = arith.constant 64 : i32
    %267 = arith.addi %1, %c64_i32_139 : i32
    %c0_140 = arith.constant 0 : index
    %c4_141 = arith.constant 4 : index
    %268 = arith.index_cast %267 : i32 to index
    %c0_142 = arith.constant 0 : index
    %269 = vector.load %arg2[%c0_140, %c4_141, %268, %c0_142] : memref<1x5x208x128xbf16, #tpu.memory_space<vmem>>, vector<1x1x144x128xbf16>
    %270 = vector.shape_cast %269 : vector<1x1x144x128xbf16> to vector<144x128xbf16>
    %271 = arith.extf %270 : vector<144x128xbf16> to vector<144x128xf32>
    %c0_143 = arith.constant 0 : index
    %c24 = arith.constant 24 : index
    %c0_144 = arith.constant 0 : index
    %272 = vector.load %arg3[%c0_143, %c24, %c0_144] : memref<1x25x128xbf16, #tpu.memory_space<vmem>>, vector<1x1x128xbf16>
    %273 = vector.shape_cast %272 : vector<1x1x128xbf16> to vector<1x128xbf16>
    %274 = arith.extf %273 : vector<1x128xbf16> to vector<1x128xf32>
    %275 = vector.broadcast %274 : vector<1x128xf32> to vector<144x128xf32>
    %276 = arith.mulf %271, %275 : vector<144x128xf32>
    %277 = arith.addf %266, %276 : vector<144x128xf32>
    %278 = arith.truncf %277 : vector<144x128xf32> to vector<144x128xbf16>
    %c0_145 = arith.constant 0 : index
    %c0_146 = arith.constant 0 : index
    %279 = vector.load %arg4[%c0_145, %c0_146] : memref<128x128xbf16, #tpu.memory_space<vmem>>, vector<128x128xbf16>
    %cst_147 = arith.constant dense<0.000000e+00> : vector<144x128xf32>
    %280 = tpu.matmul %278, %279, %cst_147 {dimension_numbers = #tpu.dot_dimension_numbers<[1], [0], [0], [1], [0, 0, 1, 1], [], []>} : vector<144x128xbf16>, vector<128x128xbf16>, vector<144x128xf32> -> vector<144x128xf32>
    %c0_148 = arith.constant 0 : index
    %c0_149 = arith.constant 0 : index
    %281 = vector.load %arg5[%c0_148, %c0_149] : memref<1x128xf32, #tpu.memory_space<vmem>>, vector<1x128xf32>
    %282 = vector.broadcast %281 : vector<1x128xf32> to vector<144x128xf32>
    %283 = arith.addf %280, %282 : vector<144x128xf32>
    %cst_150 = arith.constant 0.000000e+00 : f32
    %284 = vector.broadcast %cst_150 : f32 to vector<144x128xf32>
    %285 = arith.maximumf %283, %284 : vector<144x128xf32>
    %286 = arith.truncf %285 : vector<144x128xf32> to vector<144x128xbf16>
    %c0_151 = arith.constant 0 : index
    %c0_152 = arith.constant 0 : index
    %287 = vector.load %arg6[%c0_151, %c0_152] : memref<128x128xbf16, #tpu.memory_space<vmem>>, vector<128x128xbf16>
    %cst_153 = arith.constant dense<0.000000e+00> : vector<144x128xf32>
    %288 = tpu.matmul %286, %287, %cst_153 {dimension_numbers = #tpu.dot_dimension_numbers<[1], [0], [0], [1], [0, 0, 1, 1], [], []>} : vector<144x128xbf16>, vector<128x128xbf16>, vector<144x128xf32> -> vector<144x128xf32>
    %c0_154 = arith.constant 0 : index
    %c0_155 = arith.constant 0 : index
    %289 = vector.load %arg7[%c0_154, %c0_155] : memref<1x128xf32, #tpu.memory_space<vmem>>, vector<1x128xf32>
    %290 = vector.broadcast %289 : vector<1x128xf32> to vector<144x128xf32>
    %291 = arith.addf %288, %290 : vector<144x128xf32>
    %c0_156 = arith.constant 0 : index
    %c0_157 = arith.constant 0 : index
    %c0_158 = arith.constant 0 : index
    %292 = vector.load %arg8[%c0_156, %c0_157, %c0_158] : memref<1x144x128xf32, #tpu.memory_space<vmem>>, vector<1x144x128xf32>
    %293 = vector.shape_cast %292 : vector<1x144x128xf32> to vector<144x128xf32>
    %294 = vector.shape_cast %291 : vector<144x128xf32> to vector<1x144x128xf32>
    tpu.vector_store %arg8[%c0_156, %c0_157, %c0_158], %294 {strides = array<i32>} : memref<1x144x128xf32, #tpu.memory_space<vmem>>, vector<1x144x128xf32>,
    return
  }
  func.func @transform_0(%arg0: i32, %arg1: i32) -> (i32, i32, i32, i32) {
    %c0_i32 = arith.constant 0 : i32
    %c0_i32_0 = arith.constant 0 : i32
    %c0_i32_1 = arith.constant 0 : i32
    %c0_i32_2 = arith.constant 0 : i32
    return %arg0, %c0_i32, %c0_i32_0, %c0_i32_1 : i32, i32, i32, i32
  }
  func.func @transform_1(%arg0: i32, %arg1: i32) -> (i32, i32, i32) {
    %c0_i32 = arith.constant 0 : i32
    %c0_i32_0 = arith.constant 0 : i32
    %c0_i32_1 = arith.constant 0 : i32
    return %arg0, %c0_i32, %c0_i32_0 : i32, i32, i32
  }
  func.func @transform_2(%arg0: i32, %arg1: i32) -> (i32, i32) {
    %c0_i32 = arith.constant 0 : i32
    %c0_i32_0 = arith.constant 0 : i32
    %c0_i32_1 = arith.constant 0 : i32
    return %c0_i32, %c0_i32_0 : i32, i32
  }
  func.func @transform_3(%arg0: i32, %arg1: i32) -> (i32, i32) {
    %c0_i32 = arith.constant 0 : i32
    %c0_i32_0 = arith.constant 0 : i32
    %c0_i32_1 = arith.constant 0 : i32
    return %c0_i32, %c0_i32_0 : i32, i32
  }
  func.func @transform_4(%arg0: i32, %arg1: i32) -> (i32, i32) {
    %c0_i32 = arith.constant 0 : i32
    %c0_i32_0 = arith.constant 0 : i32
    %c0_i32_1 = arith.constant 0 : i32
    return %c0_i32, %c0_i32_0 : i32, i32
  }
  func.func @transform_5(%arg0: i32, %arg1: i32) -> (i32, i32) {
    %c0_i32 = arith.constant 0 : i32
    %c0_i32_0 = arith.constant 0 : i32
    %c0_i32_1 = arith.constant 0 : i32
    return %c0_i32, %c0_i32_0 : i32, i32
  }
  func.func @transform_6(%arg0: i32, %arg1: i32) -> (i32, i32, i32) {
    %c0_i32 = arith.constant 0 : i32
    %c0_i32_0 = arith.constant 0 : i32
    return %arg0, %arg1, %c0_i32 : i32, i32, i32
  }
}

</mosaic_0001>

<llo_original>
// kernel: depth_corr_forward.4
$region0: #{depth_corr_forward.4}
  #allocation0 [shape = 'u32[]', space=smem, size = 0x4, offset = 0x4, fixed_abs, tag = 'smem constant byte address 0x4 - core index']
  #allocation1 [shape = 'u32[144,128]{1,0:T(1,128)}', space=vmem, size = 0x12000, scoped, tag = 'internal scratch']
  %s0 = inlined_call_operand.vmem [shape: bf16[2,240,12], index: 0, kind: input, shape index: {}]
  %s1 = inlined_call_operand.vmem [shape: bf16[3,12,128], index: 1, kind: input, shape index: {}]
  %s2 = inlined_call_operand.vmem [shape: f32[1,128], index: 2, kind: input, shape index: {}]
  %s3 = inlined_call_operand.vmem [shape: bf16[2,208,128], index: 3, kind: output, shape index: {}]
  %s4 = sld [smem:[#allocation0]]
  $region45: #{depth_corr_forward.4} parent=0
    _
  %s6 = ssub.s32 1, %s4
  %s7 = scalar_select 0, %s6, %s4
  loop: start=0, step=1, limit=4
  $region2: #{depth_corr_forward.4} parent=0 // loop_pre_header
    _
  $region3: #{depth_corr_forward.4} parent=0 // loop_header
    %s9 = sphi 0, %s13
    %p10 = scmp.ge.s32.totalorder %s9, 4
    %s16 = sphi 0, %s28
    %s17 = sphi 0, %s24
    %s18 = sphi 0, %s16
    %s19 = sphi 0, %s17
    %s20 = sphi 0, %s18
    %s21 = sphi 0, %s19
    %s31 = sphi 0, %s33
    %s34 = sphi 0, %s31
    %s35 = sphi 0, %s34
    %s51 = sphi 0, %s35
    %s55 = sphi 0, %s55
    %s57 = sphi 0, %s55
    %s58 = sphi 0, %s57
    %s72 = sphi 0, %s58
    %s76 = sphi 0, %s76
    %s78 = sphi 0, %s76
    %s79 = sphi 0, %s78
    %s93 = sphi 0, %s79
    %s101 = sphi 0, %s103
    %s104 = sphi 0, %s101
    %s105 = sphi 0, %s104
    %s121 = sphi 0, %s105
  $region4: #{depth_corr_forward.4} parent=0 // loop_header_branch
    %12 = sbr.rel (%p10) target = $region8
  $region5: #{depth_corr_forward.4} parent=0 // loop_body
    %s14 = ssub.s32 %s9, 1
    %s15 = ssub.s32 %s9, 2
    %s22 = sadd.s32 1, %s17
    %p23 = scmp.ge.s32.totalorder %s22, 1
    %s24 = scalar_select %p23, 0, %s22
    %s25 = sadd.s32 1, %s16
    %s26 = scalar_select %p23, %s25, %s16
    %p27 = scmp.ge.s32.totalorder %s26, 2
    %s28 = scalar_select %p27, 0, %s26
    %s29 = ssub.s32 %s16, %s28
    %p30 = scmp.eq.s32.totalorder %s29, 0
    %s32 = sadd.s32 %s31, 1
    %s33 = scalar_select %p30, %s31, %s32
    %p36 = pneg %p30
    %p37 = scmp.eq.s32.totalorder %s9, 1
    %p38 = por %p36, %p37
    %p39 = scmp.ne.s32.totalorder %s31, %s34
    %p40 = scmp.eq.s32.totalorder %s9, 0
    %p41 = por %p39, %p40
    %p42 = scmp.ne.s32.totalorder %s31, %s34
    %p43 = scmp.eq.s32.totalorder %s14, 1
    %p44 = por %p42, %p43
    %p45 = scmp.ne.s32.totalorder %s34, %s35
    %p46 = scmp.eq.s32.totalorder %s14, 0
    %p47 = por %p45, %p46
    %p48 = scmp.ne.s32.totalorder %s34, %s35
    %p49 = scmp.eq.s32.totalorder %s15, 1
    %p50 = por %p48, %p49
    %p52 = scmp.ne.s32.totalorder %s35, %s51
    %p53 = scmp.eq.s32.totalorder %s15, 0
    %p54 = por %p52, %p53
    %s56 = sadd.s32 %s55, 1
    %p59 = scmp.eq.s32.totalorder %s9, 1
    %p60 = scmp.ne.s32.totalorder %s55, %s57
    %p61 = scmp.eq.s32.totalorder %s9, 0
    %p62 = por %p60, %p61
    %p63 = scmp.ne.s32.totalorder %s55, %s57
    %p64 = scmp.eq.s32.totalorder %s14, 1
    %p65 = por %p63, %p64
    %p66 = scmp.ne.s32.totalorder %s57, %s58
    %p67 = scmp.eq.s32.totalorder %s14, 0
    %p68 = por %p66, %p67
    %p69 = scmp.ne.s32.totalorder %s57, %s58
    %p70 = scmp.eq.s32.totalorder %s15, 1
    %p71 = por %p69, %p70
    %p73 = scmp.ne.s32.totalorder %s58, %s72
    %p74 = scmp.eq.s32.totalorder %s15, 0
    %p75 = por %p73, %p74
    %s77 = sadd.s32 %s76, 1
    %p80 = scmp.eq.s32.totalorder %s9, 1
    %p81 = scmp.ne.s32.totalorder %s76, %s78
    %p82 = scmp.eq.s32.totalorder %s9, 0
    %p83 = por %p81, %p82
    %p84 = scmp.ne.s32.totalorder %s76, %s78
    %p85 = scmp.eq.s32.totalorder %s14, 1
    %p86 = por %p84, %p85
    %p87 = scmp.ne.s32.totalorder %s78, %s79
    %p88 = scmp.eq.s32.totalorder %s14, 0
    %p89 = por %p87, %p88
    %p90 = scmp.ne.s32.totalorder %s78, %s79
    %p91 = scmp.eq.s32.totalorder %s15, 1
    %p92 = por %p90, %p91
    %p94 = scmp.ne.s32.totalorder %s79, %s93
    %p95 = scmp.eq.s32.totalorder %s15, 0
    %p96 = por %p94, %p95
    %s97 = ssub.s32 %s16, %s28
    %s98 = ssub.s32 %s17, %s24
    %s99 = sor.u32 %s97, %s98
    %p100 = scmp.eq.s32.totalorder %s99, 0
    %s102 = sadd.s32 %s101, 1
    %s103 = scalar_select %p100, %s101, %s102
    %p106 = pneg %p100
    %p107 = scmp.eq.s32.totalorder %s9, 1
    %p108 = por %p106, %p107
    %p109 = scmp.ne.s32.totalorder %s101, %s104
    %p110 = scmp.eq.s32.totalorder %s9, 0
    %p111 = por %p109, %p110
    %p112 = scmp.ne.s32.totalorder %s101, %s104
    %p113 = scmp.eq.s32.totalorder %s14, 1
    %p114 = por %p112, %p113
    %p115 = scmp.ne.s32.totalorder %s104, %s105
    %p116 = scmp.eq.s32.totalorder %s14, 0
    %p117 = por %p115, %p116
    %p118 = scmp.ne.s32.totalorder %s104, %s105
    %p119 = scmp.eq.s32.totalorder %s15, 1
    %p120 = por %p118, %p119
    %p122 = scmp.ne.s32.totalorder %s105, %s121
    %p123 = scmp.eq.s32.totalorder %s15, 0
    %p124 = por %p122, %p123
    %p125 = scmp.le.s32.totalorder 1, %s9
    %p126 = scmp.lt.s32.totalorder %s9, 3
    %p127 = pnand %p125, %p126
    %p128 = pneg %p127
    // Predicated region
    $region9: #{depth_corr_forward.4} parent=5 // pred_check
      _
    $region10: #{depth_corr_forward.4} parent=5 // pred_check_branch
      %130 = sbr.rel (%p127) target = $region12
    $region11: #{depth_corr_forward.4} parent=5 // pred_region
      %s131 = ssub.s32 %s9, 1
      // Predicated region
      $region13: #{depth_corr_forward.4} parent=11 // pred_check
        %p132 = pneg %p68
      $region14: #{depth_corr_forward.4} parent=11 // pred_check_branch
        %134 = sbr.rel (%p132) target = $region16
      $region15: #{depth_corr_forward.4} parent=11 // pred_region
        _
      $region16: #{depth_corr_forward.4} parent=11 // pred_fallthru
        _
      // Predicated region
      $region17: #{depth_corr_forward.4} parent=11 // pred_check
        %p135 = pneg %p89
      $region18: #{depth_corr_forward.4} parent=11 // pred_check_branch
        %137 = sbr.rel (%p135) target = $region20
      $region19: #{depth_corr_forward.4} parent=11 // pred_region
        _
      $region20: #{depth_corr_forward.4} parent=11 // pred_fallthru
        _
    $region12: #{depth_corr_forward.4} parent=5 // pred_fallthru
      _
    %p138 = scmp.lt.s32.totalorder %s9, 2
    // Predicated region
    $region21: #{depth_corr_forward.4} parent=5 // pred_check
      %p139 = pneg %p138
    $region22: #{depth_corr_forward.4} parent=5 // pred_check_branch
      %141 = sbr.rel (%p139) target = $region24
    $region23: #{depth_corr_forward.4} parent=5 // pred_region
      // Predicated region
      $region25: #{depth_corr_forward.4} parent=23 // pred_check
        %p142 = pneg %p41
      $region26: #{depth_corr_forward.4} parent=23 // pred_check_branch
        %144 = sbr.rel (%p142) target = $region28
      $region27: #{depth_corr_forward.4} parent=23 // pred_region
        %p145 = scmp.lt.s32.totalorder %s16, 1
        %s146 = scalar_select %p145, %s16, 1
        %s147 = smul.addr %s146, 30
        %s148 = smul.addr %s147, 4
        %s149 = scalar_lea.vmem %s0, %s148
      $region28: #{depth_corr_forward.4} parent=23 // pred_fallthru
        _
    $region24: #{depth_corr_forward.4} parent=5 // pred_fallthru
      _
    %p150 = scmp.le.s32.totalorder 1, %s9
    %p151 = scmp.lt.s32.totalorder %s9, 3
    %p152 = pnand %p150, %p151
    %p153 = pneg %p152
    // Predicated region
    $region29: #{depth_corr_forward.4} parent=5 // pred_check
      _
    $region30: #{depth_corr_forward.4} parent=5 // pred_check_branch
      %155 = sbr.rel (%p152) target = $region32
    $region31: #{depth_corr_forward.4} parent=5 // pred_region
      %s156 = ssub.s32 %s9, 1
      %p157 = scmp.lt.s32.totalorder %s18, 1
      %s158 = scalar_select %p157, %s18, 1
      %s159 = smul.addr %s158, 30
      %s160 = smul.addr %s159, 4
      %s161 = scalar_lea.vmem %s0, %s160
      %p162 = pneg %p47
      %p163 = pneg %p44
      %p164 = pneg %p68
      %p165 = pneg %p65
      %p166 = pneg %p89
      %p167 = pneg %p86
      %p168 = pneg %p117
      %p169 = pneg %p114
      %s170 = smul.u32 26, %s19
      %p171 = scmp.lt.s32.totalorder %s18, 1
      %s172 = scalar_select %p171, %s18, 1
      %p173 = scmp.lt.s32.totalorder %s170, 25
      %s174 = scalar_select %p173, %s170, 25
      %s175 = smul.addr %s172, 26
      %s176 = sadd.s32 %s174, %s175
      %s177 = smul.addr %s176, 4
      %s178 = scalar_lea.vmem %s3, %s177
      %p179 = scmp.lt.s32.totalorder %s18, 1
      %s180 = scalar_select %p179, %s18, 1
      %s181 = smul.addr %s180, 30
      %s182 = smul.addr %s181, 4
      %s183 = scalar_lea.vmem %s0, %s182
      %s184 = smul.u32 26, %s19
      %p185 = scmp.lt.s32.totalorder %s18, 1
      %s186 = scalar_select %p185, %s18, 1
      %p187 = scmp.lt.s32.totalorder %s184, 25
      %s188 = scalar_select %p187, %s184, 25
      %s189 = smul.addr %s186, 26
      %s190 = sadd.s32 %s188, %s189
      %s191 = smul.addr %s190, 4
      %s192 = scalar_lea.vmem %s3, %s191
      %s193 = smul.u32 26, %s19
      %s195 = smul.u32 %s19, 208
      %s196 = sshra.s32 %s195, 3
      %s197 = sand.u32 %s195, 7
      %s198 = smul.addr %s196, 4
      %s199 = scalar_lea.vmem %s183, %s198
      %v200 = vld [vmem:[%s199] sm:$0xf]
      %v201 = vld [vmem:[%s199 + $0x4] sm:$0xf]
      %v202 = vld [vmem:[%s199 + $0x8] sm:$0xf]
      %v203 = vld [vmem:[%s199 + $0xc] sm:$0xf]
      %v204 = vld [vmem:[%s199 + $0x10] sm:$0xf]
      %v205 = vld [vmem:[%s199 + $0x14] sm:$0xf]
      %v206 = vld [vmem:[%s199 + $0x18] sm:$0xf]
      %v207 = vld [vmem:[%s199 + $0x1c] sm:$0xf]
      %v208 = vld [vmem:[%s199 + $0x20] sm:$0xf]
      %v209 = vld [vmem:[%s199 + $0x24] sm:$0xf]
      %v210 = vld [vmem:[%s199 + $0x28] sm:$0xf]
      %v211 = vld [vmem:[%s199 + $0x2c] sm:$0xf]
      %v212 = vld [vmem:[%s199 + $0x30] sm:$0xf]
      %v213 = vld [vmem:[%s199 + $0x34] sm:$0xf]
      %v214 = vld [vmem:[%s199 + $0x38] sm:$0xf]
      %v215 = vld [vmem:[%s199 + $0x3c] sm:$0xf]
      %v216 = vld [vmem:[%s199 + $0x40] sm:$0xf]
      %v217 = vld [vmem:[%s199 + $0x44] sm:$0xf]
      %v218 = vld [vmem:[%s199 + $0x48] sm:$0xf]
      %v219 = vld [vmem:[%s199 + $0x4c] sm:$0xf]
      %v220 = vld [vmem:[%s199 + $0x50] sm:$0xf]
      %v221 = vld [vmem:[%s199 + $0x54] sm:$0xf]
      %v222 = vld [vmem:[%s199 + $0x58] sm:$0xf]
      %v223 = vld [vmem:[%s199 + $0x5c] sm:$0xf]
      %v224 = vld [vmem:[%s199 + $0x60] sm:$0xf]
      %v225 = vld [vmem:[%s199 + $0x64] sm:$0xf]
      %v226 = vld [vmem:[%s1] sm:$0xf]
      %v227 = vld [vmem:[%s1 + $0x4] sm:$0x3]
      %s228 = sadd.s32 %s195, 16
      %s229 = sshra.s32 %s228, 3
      %s230 = sand.u32 %s228, 7
      %s231 = smul.addr %s229, 4
      %s232 = scalar_lea.vmem %s183, %s231
      %v233 = vld [vmem:[%s232] sm:$0xf]
      %v234 = vld [vmem:[%s232 + $0x4] sm:$0xf]
      %v235 = vld [vmem:[%s232 + $0x8] sm:$0xf]
      %v236 = vld [vmem:[%s232 + $0xc] sm:$0xf]
      %v237 = vld [vmem:[%s232 + $0x10] sm:$0xf]
      %v238 = vld [vmem:[%s232 + $0x14] sm:$0xf]
      %v239 = vld [vmem:[%s232 + $0x18] sm:$0xf]
      %v240 = vld [vmem:[%s232 + $0x1c] sm:$0xf]
      %v241 = vld [vmem:[%s232 + $0x20] sm:$0xf]
      %v242 = vld [vmem:[%s232 + $0x24] sm:$0xf]
      %v243 = vld [vmem:[%s232 + $0x28] sm:$0xf]
      %v244 = vld [vmem:[%s232 + $0x2c] sm:$0xf]
      %v245 = vld [vmem:[%s232 + $0x30] sm:$0xf]
      %v246 = vld [vmem:[%s232 + $0x34] sm:$0xf]
      %v247 = vld [vmem:[%s232 + $0x38] sm:$0xf]
      %v248 = vld [vmem:[%s232 + $0x3c] sm:$0xf]
      %v249 = vld [vmem:[%s232 + $0x40] sm:$0xf]
      %v250 = vld [vmem:[%s232 + $0x44] sm:$0xf]
      %v251 = vld [vmem:[%s232 + $0x48] sm:$0xf]
      %v252 = vld [vmem:[%s232 + $0x4c] sm:$0xf]
      %v253 = vld [vmem:[%s232 + $0x50] sm:$0xf]
      %v254 = vld [vmem:[%s232 + $0x54] sm:$0xf]
      %v255 = vld [vmem:[%s232 + $0x58] sm:$0xf]
      %v256 = vld [vmem:[%s232 + $0x5c] sm:$0xf]
      %v257 = vld [vmem:[%s232 + $0x60] sm:$0xf]
      %v258 = vld [vmem:[%s232 + $0x64] sm:$0xf]
      %s259 = scalar_lea.vmem %s1, 8
      %v260 = vld [vmem:[%s259] sm:$0xf]
      %v261 = vld [vmem:[%s259 + $0x4] sm:$0x3]
      %v288 = vunpack.c.l.b16 %v233
      %v289 = vunpack.c.l.b16 %v234
      %v290 = vunpack.c.l.b16 %v235
      %v291 = vunpack.c.l.b16 %v236
      %v292 = vunpack.c.l.b16 %v237
      %v293 = vunpack.c.l.b16 %v238
      %v294 = vunpack.c.l.b16 %v239
      %v295 = vunpack.c.l.b16 %v240
      %v296 = vunpack.c.l.b16 %v241
      %v297 = vunpack.c.l.b16 %v242
      %v298 = vunpack.c.l.b16 %v243
      %v299 = vunpack.c.l.b16 %v244
      %v300 = vunpack.c.l.b16 %v245
      %v301 = vunpack.c.l.b16 %v246
      %v302 = vunpack.c.l.b16 %v247
      %v303 = vunpack.c.l.b16 %v248
      %v304 = vunpack.c.l.b16 %v249
      %v305 = vunpack.c.l.b16 %v250
      %v306 = vunpack.c.l.b16 %v251
      %v307 = vunpack.c.l.b16 %v252
      %v308 = vunpack.c.l.b16 %v253
      %v309 = vunpack.c.l.b16 %v254
      %v310 = vunpack.c.l.b16 %v255
      %v311 = vunpack.c.l.b16 %v256
      %v312 = vunpack.c.l.b16 %v257
      %v313 = vunpack.c.l.b16 %v258
      %v314 = vpack.c.b16 %v289, %v288
      %v315 = vpack.c.b16 %v291, %v290
      %v316 = vpack.c.b16 %v293, %v292
      %v317 = vpack.c.b16 %v295, %v294
      %v318 = vpack.c.b16 %v297, %v296
      %v319 = vpack.c.b16 %v299, %v298
      %v320 = vpack.c.b16 %v301, %v300
      %v321 = vpack.c.b16 %v303, %v302
      %v322 = vpack.c.b16 %v305, %v304
      %v323 = vpack.c.b16 %v307, %v306
      %v324 = vpack.c.b16 %v309, %v308
      %v325 = vpack.c.b16 %v311, %v310
      %v326 = vpack.c.b16 %v313, %v312
      %v329 = vunpack.c.l.b16 %v260
      %v330 = vunpack.c.l.b16 %v261
      %v331 = vpack.c.b16 %v330, %v329
      %vm332 = vcmask 97280
      %v334 = vsel %vm332, %v314, 0
      %v337 = vsel %vm332, %v315, 0
      %v340 = vsel %vm332, %v316, 0
      %v343 = vsel %vm332, %v317, 0
      %v346 = vsel %vm332, %v318, 0
      %v349 = vsel %vm332, %v319, 0
      %v352 = vsel %vm332, %v320, 0
      %v355 = vsel %vm332, %v321, 0
      %v358 = vsel %vm332, %v322, 0
      %v361 = vsel %vm332, %v323, 0
      %v364 = vsel %vm332, %v324, 0
      %v367 = vsel %vm332, %v325, 0
      %v370 = vsel %vm332, %v326, 0
      %vm372 = vcmask 1045504
      %v374 = vsel %vm372, %v331, 0
      %376 = vmatprep.subr.bf16.mxu0 0
      %377 = vmatpush1.bf16.msra.mxu0 %v374
      %378 = vmatprep.subr.bf16.mxu0 0
      %379 = vmatpush1.bf16.msra.mxu0 0
      %380 = vmatprep.subr.bf16.mxu0 0
      %381 = vmatpush1.bf16.msra.mxu0 0
      %382 = vmatprep.subr.bf16.mxu0 0
      %383 = vmatpush1.bf16.msra.mxu0 0
      %384 = vmatprep.subr.bf16.mxu0 0
      %385 = vmatpush1.bf16.msra.mxu0 0
      %386 = vmatprep.subr.bf16.mxu0 0
      %387 = vmatpush1.bf16.msra.mxu0 0
      %388 = vmatprep.subr.bf16.mxu0 0
      %389 = vmatpush1.bf16.msra.mxu0 0
      %390 = vmatprep.subr.bf16.mxu0 0
      %391 = vmatpush1.bf16.msra.mxu0 0
      %392 = vmatprep.subr.bf16.mxu0 0
      %393 = vmatpush1.bf16.msra.mxu0 0
      %394 = vmatprep.subr.bf16.mxu0 0
      %395 = vmatpush1.bf16.msra.mxu0 0
      %396 = vmatprep.subr.bf16.mxu0 0
      %397 = vmatpush1.bf16.msra.mxu0 0
      %398 = vmatprep.subr.bf16.mxu0 0
      %399 = vmatpush1.bf16.msra.mxu0 0
      %400 = vmatprep.subr.bf16.mxu0 0
      %401 = vmatpush1.bf16.msra.mxu0 0
      %402 = vmatprep.subr.bf16.mxu0 0
      %403 = vmatpush1.bf16.msra.mxu0 0
      %404 = vmatprep.subr.bf16.mxu0 0
      %405 = vmatpush1.bf16.msra.mxu0 0
      %406 = vmatprep.subr.bf16.mxu0 0
      %407 = vmatpush1.bf16.msra.mxu0 0
      %408 = vmatprep.mubr.bf16.mxu0 0
      %409 = vmatmul.mubr.bf16.gmra.mrb[0].mxu0 %v334
      %v410 = vpop.f32.mrb[0].mxu0
      %v411 = vadd.f32 0.0, %v410
      %v412 = vpop.f32.mrb[0].mxu0
      %v413 = vpop.f32.mrb[0].mxu0
      %v414 = vadd.f32 0.0, %v413
      %v415 = vpop.f32.mrb[0].mxu0
      %416 = vmatprep.mubr.bf16.mxu0 0
      %417 = vmatmul.mubr.bf16.gmra.mrb[0].mxu0 %v337
      %v418 = vpop.f32.mrb[0].mxu0
      %v419 = vadd.f32 0.0, %v418
      %v420 = vpop.f32.mrb[0].mxu0
      %v421 = vpop.f32.mrb[0].mxu0
      %v422 = vadd.f32 0.0, %v421
      %v423 = vpop.f32.mrb[0].mxu0
      %424 = vmatprep.mubr.bf16.mxu0 0
      %425 = vmatmul.mubr.bf16.gmra.mrb[0].mxu0 %v340
      %v426 = vpop.f32.mrb[0].mxu0
      %v427 = vadd.f32 0.0, %v426
      %v428 = vpop.f32.mrb[0].mxu0
      %v429 = vpop.f32.mrb[0].mxu0
      %v430 = vadd.f32 0.0, %v429
      %v431 = vpop.f32.mrb[0].mxu0
      %432 = vmatprep.mubr.bf16.mxu0 0
      %433 = vmatmul.mubr.bf16.gmra.mrb[0].mxu0 %v343
      %v434 = vpop.f32.mrb[0].mxu0
      %v435 = vadd.f32 0.0, %v434
      %v436 = vpop.f32.mrb[0].mxu0
      %v437 = vpop.f32.mrb[0].mxu0
      %v438 = vadd.f32 0.0, %v437
      %v439 = vpop.f32.mrb[0].mxu0
      %440 = vmatprep.mubr.bf16.mxu0 0
      %441 = vmatmul.mubr.bf16.gmra.mrb[0].mxu0 %v346
      %v442 = vpop.f32.mrb[0].mxu0
      %v443 = vadd.f32 0.0, %v442
      %v444 = vpop.f32.mrb[0].mxu0
      %v445 = vpop.f32.mrb[0].mxu0
      %v446 = vadd.f32 0.0, %v445
      %v447 = vpop.f32.mrb[0].mxu0
      %448 = vmatprep.mubr.bf16.mxu0 0
      %449 = vmatmul.mubr.bf16.gmra.mrb[0].mxu0 %v349
      %v450 = vpop.f32.mrb[0].mxu0
      %v451 = vadd.f32 0.0, %v450
      %v452 = vpop.f32.mrb[0].mxu0
      %v453 = vpop.f32.mrb[0].mxu0
      %v454 = vadd.f32 0.0, %v453
      %v455 = vpop.f32.mrb[0].mxu0
      %456 = vmatprep.mubr.bf16.mxu0 0
      %457 = vmatmul.mubr.bf16.gmra.mrb[0].mxu0 %v352
      %v458 = vpop.f32.mrb[0].mxu0
      %v459 = vadd.f32 0.0, %v458
      %v460 = vpop.f32.mrb[0].mxu0
      %v461 = vpop.f32.mrb[0].mxu0
      %v462 = vadd.f32 0.0, %v461
      %v463 = vpop.f32.mrb[0].mxu0
      %464 = vmatprep.mubr.bf16.mxu0 0
      %465 = vmatmul.mubr.bf16.gmra.mrb[0].mxu0 %v355
      %v466 = vpop.f32.mrb[0].mxu0
      %v467 = vadd.f32 0.0, %v466
      %v468 = vpop.f32.mrb[0].mxu0
      %v469 = vpop.f32.mrb[0].mxu0
      %v470 = vadd.f32 0.0, %v469
      %v471 = vpop.f32.mrb[0].mxu0
      %472 = vmatprep.mubr.bf16.mxu0 0
      %473 = vmatmul.mubr.bf16.gmra.mrb[0].mxu0 %v358
      %v474 = vpop.f32.mrb[0].mxu0
      %v475 = vadd.f32 0.0, %v474
      %v476 = vpop.f32.mrb[0].mxu0
      %v477 = vpop.f32.mrb[0].mxu0
      %v478 = vadd.f32 0.0, %v477
      %v479 = vpop.f32.mrb[0].mxu0
      %480 = vmatprep.mubr.bf16.mxu0 0
      %481 = vmatmul.mubr.bf16.gmra.mrb[0].mxu0 %v361
      %v482 = vpop.f32.mrb[0].mxu0
      %v483 = vadd.f32 0.0, %v482
      %v484 = vpop.f32.mrb[0].mxu0
      %v485 = vpop.f32.mrb[0].mxu0
      %v486 = vadd.f32 0.0, %v485
      %v487 = vpop.f32.mrb[0].mxu0
      %488 = vmatprep.mubr.bf16.mxu0 0
      %489 = vmatmul.mubr.bf16.gmra.mrb[0].mxu0 %v364
      %v490 = vpop.f32.mrb[0].mxu0
      %v491 = vadd.f32 0.0, %v490
      %v492 = vpop.f32.mrb[0].mxu0
      %v493 = vpop.f32.mrb[0].mxu0
      %v494 = vadd.f32 0.0, %v493
      %v495 = vpop.f32.mrb[0].mxu0
      %496 = vmatprep.mubr.bf16.mxu0 0
      %497 = vmatmul.mubr.bf16.gmra.mrb[0].mxu0 %v367
      %v498 = vpop.f32.mrb[0].mxu0
      %v499 = vadd.f32 0.0, %v498
      %v500 = vpop.f32.mrb[0].mxu0
      %v501 = vpop.f32.mrb[0].mxu0
      %v502 = vadd.f32 0.0, %v501
      %v503 = vpop.f32.mrb[0].mxu0
      %504 = vmatprep.mubr.bf16.mxu0 0
      %505 = vmatmul.mubr.bf16.gmra.mrb[0].mxu0 %v370
      %v506 = vpop.f32.mrb[0].mxu0
      %v507 = vadd.f32 0.0, %v506
      %v508 = vpop.f32.mrb[0].mxu0
      %v509 = vpop.f32.mrb[0].mxu0
      %v510 = vadd.f32 0.0, %v509
      %v511 = vpop.f32.mrb[0].mxu0
      %512 = vdwg.mxu0
      %v539 = vunpack.c.l.b16 %v200
      %v540 = vunpack.c.l.b16 %v201
      %v541 = vunpack.c.l.b16 %v202
      %v542 = vunpack.c.l.b16 %v203
      %v543 = vunpack.c.l.b16 %v204
      %v544 = vunpack.c.l.b16 %v205
      %v545 = vunpack.c.l.b16 %v206
      %v546 = vunpack.c.l.b16 %v207
      %v547 = vunpack.c.l.b16 %v208
      %v548 = vunpack.c.l.b16 %v209
      %v549 = vunpack.c.l.b16 %v210
      %v550 = vunpack.c.l.b16 %v211
      %v551 = vunpack.c.l.b16 %v212
      %v552 = vunpack.c.l.b16 %v213
      %v553 = vunpack.c.l.b16 %v214
      %v554 = vunpack.c.l.b16 %v215
      %v555 = vunpack.c.l.b16 %v216
      %v556 = vunpack.c.l.b16 %v217
      %v557 = vunpack.c.l.b16 %v218
      %v558 = vunpack.c.l.b16 %v219
      %v559 = vunpack.c.l.b16 %v220
      %v560 = vunpack.c.l.b16 %v221
      %v561 = vunpack.c.l.b16 %v222
      %v562 = vunpack.c.l.b16 %v223
      %v563 = vunpack.c.l.b16 %v224
      %v564 = vunpack.c.l.b16 %v225
      %v565 = vpack.c.b16 %v540, %v539
      %v566 = vpack.c.b16 %v542, %v541
      %v567 = vpack.c.b16 %v544, %v543
      %v568 = vpack.c.b16 %v546, %v545
      %v569 = vpack.c.b16 %v548, %v547
      %v570 = vpack.c.b16 %v550, %v549
      %v571 = vpack.c.b16 %v552, %v551
      %v572 = vpack.c.b16 %v554, %v553
      %v573 = vpack.c.b16 %v556, %v555
      %v574 = vpack.c.b16 %v558, %v557
      %v575 = vpack.c.b16 %v560, %v559
      %v576 = vpack.c.b16 %v562, %v561
      %v577 = vpack.c.b16 %v564, %v563
      %v580 = vunpack.c.l.b16 %v226
      %v581 = vunpack.c.l.b16 %v227
      %v582 = vpack.c.b16 %v581, %v580
      %v584 = vsel %vm332, %v565, 0
      %v587 = vsel %vm332, %v566, 0
      %v590 = vsel %vm332, %v567, 0
      %v593 = vsel %vm332, %v568, 0
      %v596 = vsel %vm332, %v569, 0
      %v599 = vsel %vm332, %v570, 0
      %v602 = vsel %vm332, %v571, 0
      %v605 = vsel %vm332, %v572, 0
      %v608 = vsel %vm332, %v573, 0
      %v611 = vsel %vm332, %v574, 0
      %v614 = vsel %vm332, %v575, 0
      %v617 = vsel %vm332, %v576, 0
      %v620 = vsel %vm332, %v577, 0
      %v623 = vsel %vm372, %v582, 0
      %625 = vmatprep.subr.bf16.mxu0 0
      %626 = vmatpush1.bf16.msra.mxu0 %v623
      %627 = vmatprep.subr.bf16.mxu0 0
      %628 = vmatpush1.bf16.msra.mxu0 0
      %629 = vmatprep.subr.bf16.mxu0 0
      %630 = vmatpush1.bf16.msra.mxu0 0
      %631 = vmatprep.subr.bf16.mxu0 0
      %632 = vmatpush1.bf16.msra.mxu0 0
      %633 = vmatprep.subr.bf16.mxu0 0
      %634 = vmatpush1.bf16.msra.mxu0 0
      %635 = vmatprep.subr.bf16.mxu0 0
      %636 = vmatpush1.bf16.msra.mxu0 0
      %637 = vmatprep.subr.bf16.mxu0 0
      %638 = vmatpush1.bf16.msra.mxu0 0
      %639 = vmatprep.subr.bf16.mxu0 0
      %640 = vmatpush1.bf16.msra.mxu0 0
      %641 = vmatprep.subr.bf16.mxu0 0
      %642 = vmatpush1.bf16.msra.mxu0 0
      %643 = vmatprep.subr.bf16.mxu0 0
      %644 = vmatpush1.bf16.msra.mxu0 0
      %645 = vmatprep.subr.bf16.mxu0 0
      %646 = vmatpush1.bf16.msra.mxu0 0
      %647 = vmatprep.subr.bf16.mxu0 0
      %648 = vmatpush1.bf16.msra.mxu0 0
      %649 = vmatprep.subr.bf16.mxu0 0
      %650 = vmatpush1.bf16.msra.mxu0 0
      %651 = vmatprep.subr.bf16.mxu0 0
      %652 = vmatpush1.bf16.msra.mxu0 0
      %653 = vmatprep.subr.bf16.mxu0 0
      %654 = vmatpush1.bf16.msra.mxu0 0
      %655 = vmatprep.subr.bf16.mxu0 0
      %656 = vmatpush1.bf16.msra.mxu0 0
      %657 = vmatprep.mubr.bf16.mxu0 0
      %658 = vmatmul.mubr.bf16.gmra.mrb[0].mxu0 %v584
      %v659 = vpop.f32.mrb[0].mxu0
      %v660 = vadd.f32 %v411, %v659
      %v661 = vpop.f32.mrb[0].mxu0
      %v662 = vpop.f32.mrb[0].mxu0
      %v663 = vadd.f32 %v414, %v662
      %v664 = vpop.f32.mrb[0].mxu0
      %665 = vmatprep.mubr.bf16.mxu0 0
      %666 = vmatmul.mubr.bf16.gmra.mrb[0].mxu0 %v587
      %v667 = vpop.f32.mrb[0].mxu0
      %v668 = vadd.f32 %v419, %v667
      %v669 = vpop.f32.mrb[0].mxu0
      %v670 = vpop.f32.mrb[0].mxu0
      %v671 = vadd.f32 %v422, %v670
      %v672 = vpop.f32.mrb[0].mxu0
      %673 = vmatprep.mubr.bf16.mxu0 0
      %674 = vmatmul.mubr.bf16.gmra.mrb[0].mxu0 %v590
      %v675 = vpop.f32.mrb[0].mxu0
      %v676 = vadd.f32 %v427, %v675
      %v677 = vpop.f32.mrb[0].mxu0
      %v678 = vpop.f32.mrb[0].mxu0
      %v679 = vadd.f32 %v430, %v678
      %v680 = vpop.f32.mrb[0].mxu0
      %681 = vmatprep.mubr.bf16.mxu0 0
      %682 = vmatmul.mubr.bf16.gmra.mrb[0].mxu0 %v593
      %v683 = vpop.f32.mrb[0].mxu0
      %v684 = vadd.f32 %v435, %v683
      %v685 = vpop.f32.mrb[0].mxu0
      %v686 = vpop.f32.mrb[0].mxu0
      %v687 = vadd.f32 %v438, %v686
      %v688 = vpop.f32.mrb[0].mxu0
      %689 = vmatprep.mubr.bf16.mxu0 0
      %690 = vmatmul.mubr.bf16.gmra.mrb[0].mxu0 %v596
      %v691 = vpop.f32.mrb[0].mxu0
      %v692 = vadd.f32 %v443, %v691
      %v693 = vpop.f32.mrb[0].mxu0
      %v694 = vpop.f32.mrb[0].mxu0
      %v695 = vadd.f32 %v446, %v694
      %v696 = vpop.f32.mrb[0].mxu0
      %697 = vmatprep.mubr.bf16.mxu0 0
      %698 = vmatmul.mubr.bf16.gmra.mrb[0].mxu0 %v599
      %v699 = vpop.f32.mrb[0].mxu0
      %v700 = vadd.f32 %v451, %v699
      %v701 = vpop.f32.mrb[0].mxu0
      %v702 = vpop.f32.mrb[0].mxu0
      %v703 = vadd.f32 %v454, %v702
      %v704 = vpop.f32.mrb[0].mxu0
      %705 = vmatprep.mubr.bf16.mxu0 0
      %706 = vmatmul.mubr.bf16.gmra.mrb[0].mxu0 %v602
      %v707 = vpop.f32.mrb[0].mxu0
      %v708 = vadd.f32 %v459, %v707
      %v709 = vpop.f32.mrb[0].mxu0
      %v710 = vpop.f32.mrb[0].mxu0
      %v711 = vadd.f32 %v462, %v710
      %v712 = vpop.f32.mrb[0].mxu0
      %713 = vmatprep.mubr.bf16.mxu0 0
      %714 = vmatmul.mubr.bf16.gmra.mrb[0].mxu0 %v605
      %v715 = vpop.f32.mrb[0].mxu0
      %v716 = vadd.f32 %v467, %v715
      %v717 = vpop.f32.mrb[0].mxu0
      %v718 = vpop.f32.mrb[0].mxu0
      %v719 = vadd.f32 %v470, %v718
      %v720 = vpop.f32.mrb[0].mxu0
      %721 = vmatprep.mubr.bf16.mxu0 0
      %722 = vmatmul.mubr.bf16.gmra.mrb[0].mxu0 %v608
      %v723 = vpop.f32.mrb[0].mxu0
      %v724 = vadd.f32 %v475, %v723
      %v725 = vpop.f32.mrb[0].mxu0
      %v726 = vpop.f32.mrb[0].mxu0
      %v727 = vadd.f32 %v478, %v726
      %v728 = vpop.f32.mrb[0].mxu0
      %729 = vmatprep.mubr.bf16.mxu0 0
      %730 = vmatmul.mubr.bf16.gmra.mrb[0].mxu0 %v611
      %v731 = vpop.f32.mrb[0].mxu0
      %v732 = vadd.f32 %v483, %v731
      %v733 = vpop.f32.mrb[0].mxu0
      %v734 = vpop.f32.mrb[0].mxu0
      %v735 = vadd.f32 %v486, %v734
      %v736 = vpop.f32.mrb[0].mxu0
      %737 = vmatprep.mubr.bf16.mxu0 0
      %738 = vmatmul.mubr.bf16.gmra.mrb[0].mxu0 %v614
      %v739 = vpop.f32.mrb[0].mxu0
      %v740 = vadd.f32 %v491, %v739
      %v741 = vpop.f32.mrb[0].mxu0
      %v742 = vpop.f32.mrb[0].mxu0
      %v743 = vadd.f32 %v494, %v742
      %v744 = vpop.f32.mrb[0].mxu0
      %745 = vmatprep.mubr.bf16.mxu0 0
      %746 = vmatmul.mubr.bf16.gmra.mrb[0].mxu0 %v617
      %v747 = vpop.f32.mrb[0].mxu0
      %v748 = vadd.f32 %v499, %v747
      %v749 = vpop.f32.mrb[0].mxu0
      %v750 = vpop.f32.mrb[0].mxu0
      %v751 = vadd.f32 %v502, %v750
      %v752 = vpop.f32.mrb[0].mxu0
      %753 = vmatprep.mubr.bf16.mxu0 0
      %754 = vmatmul.mubr.bf16.gmra.mrb[0].mxu0 %v620
      %v755 = vpop.f32.mrb[0].mxu0
      %v756 = vadd.f32 %v507, %v755
      %v757 = vpop.f32.mrb[0].mxu0
      %v758 = vpop.f32.mrb[0].mxu0
      %v759 = vadd.f32 %v510, %v758
      %v760 = vpop.f32.mrb[0].mxu0
      %761 = vdwg.mxu0
      %s762 = sadd.s32 %s195, 32
      %s763 = sshra.s32 %s762, 3
      %s764 = sand.u32 %s762, 7
      %s765 = smul.addr %s763, 4
      %s766 = scalar_lea.vmem %s183, %s765
      %v767 = vld [vmem:[%s766] sm:$0xf]
      %v768 = vld [vmem:[%s766 + $0x4] sm:$0xf]
      %v769 = vld [vmem:[%s766 + $0x8] sm:$0xf]
      %v770 = vld [vmem:[%s766 + $0xc] sm:$0xf]
      %v771 = vld [vmem:[%s766 + $0x10] sm:$0xf]
      %v772 = vld [vmem:[%s766 + $0x14] sm:$0xf]
      %v773 = vld [vmem:[%s766 + $0x18] sm:$0xf]
      %v774 = vld [vmem:[%s766 + $0x1c] sm:$0xf]
      %v775 = vld [vmem:[%s766 + $0x20] sm:$0xf]
      %v776 = vld [vmem:[%s766 + $0x24] sm:$0xf]
      %v777 = vld [vmem:[%s766 + $0x28] sm:$0xf]
      %v778 = vld [vmem:[%s766 + $0x2c] sm:$0xf]
      %v779 = vld [vmem:[%s766 + $0x30] sm:$0xf]
      %v780 = vld [vmem:[%s766 + $0x34] sm:$0xf]
      %v781 = vld [vmem:[%s766 + $0x38] sm:$0xf]
      %v782 = vld [vmem:[%s766 + $0x3c] sm:$0xf]
      %v783 = vld [vmem:[%s766 + $0x40] sm:$0xf]
      %v784 = vld [vmem:[%s766 + $0x44] sm:$0xf]
      %v785 = vld [vmem:[%s766 + $0x48] sm:$0xf]
      %v786 = vld [vmem:[%s766 + $0x4c] sm:$0xf]
      %v787 = vld [vmem:[%s766 + $0x50] sm:$0xf]
      %v788 = vld [vmem:[%s766 + $0x54] sm:$0xf]
      %v789 = vld [vmem:[%s766 + $0x58] sm:$0xf]
      %v790 = vld [vmem:[%s766 + $0x5c] sm:$0xf]
      %v791 = vld [vmem:[%s766 + $0x60] sm:$0xf]
      %v792 = vld [vmem:[%s766 + $0x64] sm:$0xf]
      %s793 = scalar_lea.vmem %s1, 16
      %v794 = vld [vmem:[%s793] sm:$0xf]
      %v795 = vld [vmem:[%s793 + $0x4] sm:$0x3]
      %v822 = vunpack.c.l.b16 %v767
      %v823 = vunpack.c.l.b16 %v768
      %v824 = vunpack.c.l.b16 %v769
      %v825 = vunpack.c.l.b16 %v770
      %v826 = vunpack.c.l.b16 %v771
      %v827 = vunpack.c.l.b16 %v772
      %v828 = vunpack.c.l.b16 %v773
      %v829 = vunpack.c.l.b16 %v774
      %v830 = vunpack.c.l.b16 %v775
      %v831 = vunpack.c.l.b16 %v776
      %v832 = vunpack.c.l.b16 %v777
      %v833 = vunpack.c.l.b16 %v778
      %v834 = vunpack.c.l.b16 %v779
      %v835 = vunpack.c.l.b16 %v780
      %v836 = vunpack.c.l.b16 %v781
      %v837 = vunpack.c.l.b16 %v782
      %v838 = vunpack.c.l.b16 %v783
      %v839 = vunpack.c.l.b16 %v784
      %v840 = vunpack.c.l.b16 %v785
      %v841 = vunpack.c.l.b16 %v786
      %v842 = vunpack.c.l.b16 %v787
      %v843 = vunpack.c.l.b16 %v788
      %v844 = vunpack.c.l.b16 %v789
      %v845 = vunpack.c.l.b16 %v790
      %v846 = vunpack.c.l.b16 %v791
      %v847 = vunpack.c.l.b16 %v792
      %v848 = vpack.c.b16 %v823, %v822
      %v849 = vpack.c.b16 %v825, %v824
      %v850 = vpack.c.b16 %v827, %v826
      %v851 = vpack.c.b16 %v829, %v828
      %v852 = vpack.c.b16 %v831, %v830
      %v853 = vpack.c.b16 %v833, %v832
      %v854 = vpack.c.b16 %v835, %v834
      %v855 = vpack.c.b16 %v837, %v836
      %v856 = vpack.c.b16 %v839, %v838
      %v857 = vpack.c.b16 %v841, %v840
      %v858 = vpack.c.b16 %v843, %v842
      %v859 = vpack.c.b16 %v845, %v844
      %v860 = vpack.c.b16 %v847, %v846
      %v863 = vunpack.c.l.b16 %v794
      %v864 = vunpack.c.l.b16 %v795
      %v865 = vpack.c.b16 %v864, %v863
      %v867 = vsel %vm332, %v848, 0
      %v870 = vsel %vm332, %v849, 0
      %v873 = vsel %vm332, %v850, 0
      %v876 = vsel %vm332, %v851, 0
      %v879 = vsel %vm332, %v852, 0
      %v882 = vsel %vm332, %v853, 0
      %v885 = vsel %vm332, %v854, 0
      %v888 = vsel %vm332, %v855, 0
      %v891 = vsel %vm332, %v856, 0
      %v894 = vsel %vm332, %v857, 0
      %v897 = vsel %vm332, %v858, 0
      %v900 = vsel %vm332, %v859, 0
      %v903 = vsel %vm332, %v860, 0
      %v906 = vsel %vm372, %v865, 0
      %908 = vmatprep.subr.bf16.mxu0 0
      %909 = vmatpush1.bf16.msra.mxu0 %v906
      %910 = vmatprep.subr.bf16.mxu0 0
      %911 = vmatpush1.bf16.msra.mxu0 0
      %912 = vmatprep.subr.bf16.mxu0 0
      %913 = vmatpush1.bf16.msra.mxu0 0
      %914 = vmatprep.subr.bf16.mxu0 0
      %915 = vmatpush1.bf16.msra.mxu0 0
      %916 = vmatprep.subr.bf16.mxu0 0
      %917 = vmatpush1.bf16.msra.mxu0 0
      %918 = vmatprep.subr.bf16.mxu0 0
      %919 = vmatpush1.bf16.msra.mxu0 0
      %920 = vmatprep.subr.bf16.mxu0 0
      %921 = vmatpush1.bf16.msra.mxu0 0
      %922 = vmatprep.subr.bf16.mxu0 0
      %923 = vmatpush1.bf16.msra.mxu0 0
      %924 = vmatprep.subr.bf16.mxu0 0
      %925 = vmatpush1.bf16.msra.mxu0 0
      %926 = vmatprep.subr.bf16.mxu0 0
      %927 = vmatpush1.bf16.msra.mxu0 0
      %928 = vmatprep.subr.bf16.mxu0 0
      %929 = vmatpush1.bf16.msra.mxu0 0
      %930 = vmatprep.subr.bf16.mxu0 0
      %931 = vmatpush1.bf16.msra.mxu0 0
      %932 = vmatprep.subr.bf16.mxu0 0
      %933 = vmatpush1.bf16.msra.mxu0 0
      %934 = vmatprep.subr.bf16.mxu0 0
      %935 = vmatpush1.bf16.msra.mxu0 0
      %936 = vmatprep.subr.bf16.mxu0 0
      %937 = vmatpush1.bf16.msra.mxu0 0
      %938 = vmatprep.subr.bf16.mxu0 0
      %939 = vmatpush1.bf16.msra.mxu0 0
      %940 = vmatprep.mubr.bf16.mxu0 0
      %941 = vmatmul.mubr.bf16.gmra.mrb[0].mxu0 %v867
      %v942 = vpop.f32.mrb[0].mxu0
      %v943 = vadd.f32 0.0, %v942
      %v944 = vpop.f32.mrb[0].mxu0
      %v945 = vpop.f32.mrb[0].mxu0
      %v946 = vadd.f32 0.0, %v945
      %v947 = vpop.f32.mrb[0].mxu0
      %948 = vmatprep.mubr.bf16.mxu0 0
      %949 = vmatmul.mubr.bf16.gmra.mrb[0].mxu0 %v870
      %v950 = vpop.f32.mrb[0].mxu0
      %v951 = vadd.f32 0.0, %v950
      %v952 = vpop.f32.mrb[0].mxu0
      %v953 = vpop.f32.mrb[0].mxu0
      %v954 = vadd.f32 0.0, %v953
      %v955 = vpop.f32.mrb[0].mxu0
      %956 = vmatprep.mubr.bf16.mxu0 0
      %957 = vmatmul.mubr.bf16.gmra.mrb[0].mxu0 %v873
      %v958 = vpop.f32.mrb[0].mxu0
      %v959 = vadd.f32 0.0, %v958
      %v960 = vpop.f32.mrb[0].mxu0
      %v961 = vpop.f32.mrb[0].mxu0
      %v962 = vadd.f32 0.0, %v961
      %v963 = vpop.f32.mrb[0].mxu0
      %964 = vmatprep.mubr.bf16.mxu0 0
      %965 = vmatmul.mubr.bf16.gmra.mrb[0].mxu0 %v876
      %v966 = vpop.f32.mrb[0].mxu0
      %v967 = vadd.f32 0.0, %v966
      %v968 = vpop.f32.mrb[0].mxu0
      %v969 = vpop.f32.mrb[0].mxu0
      %v970 = vadd.f32 0.0, %v969
      %v971 = vpop.f32.mrb[0].mxu0
      %972 = vmatprep.mubr.bf16.mxu0 0
      %973 = vmatmul.mubr.bf16.gmra.mrb[0].mxu0 %v879
      %v974 = vpop.f32.mrb[0].mxu0
      %v975 = vadd.f32 0.0, %v974
      %v976 = vpop.f32.mrb[0].mxu0
      %v977 = vpop.f32.mrb[0].mxu0
      %v978 = vadd.f32 0.0, %v977
      %v979 = vpop.f32.mrb[0].mxu0
      %980 = vmatprep.mubr.bf16.mxu0 0
      %981 = vmatmul.mubr.bf16.gmra.mrb[0].mxu0 %v882
      %v982 = vpop.f32.mrb[0].mxu0
      %v983 = vadd.f32 0.0, %v982
      %v984 = vpop.f32.mrb[0].mxu0
      %v985 = vpop.f32.mrb[0].mxu0
      %v986 = vadd.f32 0.0, %v985
      %v987 = vpop.f32.mrb[0].mxu0
      %988 = vmatprep.mubr.bf16.mxu0 0
      %989 = vmatmul.mubr.bf16.gmra.mrb[0].mxu0 %v885
      %v990 = vpop.f32.mrb[0].mxu0
      %v991 = vadd.f32 0.0, %v990
      %v992 = vpop.f32.mrb[0].mxu0
      %v993 = vpop.f32.mrb[0].mxu0
      %v994 = vadd.f32 0.0, %v993
      %v995 = vpop.f32.mrb[0].mxu0
      %996 = vmatprep.mubr.bf16.mxu0 0
      %997 = vmatmul.mubr.bf16.gmra.mrb[0].mxu0 %v888
      %v998 = vpop.f32.mrb[0].mxu0
      %v999 = vadd.f32 0.0, %v998
      %v1000 = vpop.f32.mrb[0].mxu0
      %v1001 = vpop.f32.mrb[0].mxu0
      %v1002 = vadd.f32 0.0, %v1001
      %v1003 = vpop.f32.mrb[0].mxu0
      %1004 = vmatprep.mubr.bf16.mxu0 0
      %1005 = vmatmul.mubr.bf16.gmra.mrb[0].mxu0 %v891
      %v1006 = vpop.f32.mrb[0].mxu0
      %v1007 = vadd.f32 0.0, %v1006
      %v1008 = vpop.f32.mrb[0].mxu0
      %v1009 = vpop.f32.mrb[0].mxu0
      %v1010 = vadd.f32 0.0, %v1009
      %v1011 = vpop.f32.mrb[0].mxu0
      %1012 = vmatprep.mubr.bf16.mxu0 0
      %1013 = vmatmul.mubr.bf16.gmra.mrb[0].mxu0 %v894
      %v1014 = vpop.f32.mrb[0].mxu0
      %v1015 = vadd.f32 0.0, %v1014
      %v1016 = vpop.f32.mrb[0].mxu0
      %v1017 = vpop.f32.mrb[0].mxu0
      %v1018 = vadd.f32 0.0, %v1017
      %v1019 = vpop.f32.mrb[0].mxu0
      %1020 = vmatprep.mubr.bf16.mxu0 0
      %1021 = vmatmul.mubr.bf16.gmra.mrb[0].mxu0 %v897
      %v1022 = vpop.f32.mrb[0].mxu0
      %v1023 = vadd.f32 0.0, %v1022
      %v1024 = vpop.f32.mrb[0].mxu0
      %v1025 = vpop.f32.mrb[0].mxu0
      %v1026 = vadd.f32 0.0, %v1025
      %v1027 = vpop.f32.mrb[0].mxu0
      %1028 = vmatprep.mubr.bf16.mxu0 0
      %1029 = vmatmul.mubr.bf16.gmra.mrb[0].mxu0 %v900
      %v1030 = vpop.f32.mrb[0].mxu0
      %v1031 = vadd.f32 0.0, %v1030
      %v1032 = vpop.f32.mrb[0].mxu0
      %v1033 = vpop.f32.mrb[0].mxu0
      %v1034 = vadd.f32 0.0, %v1033
      %v1035 = vpop.f32.mrb[0].mxu0
      %1036 = vmatprep.mubr.bf16.mxu0 0
      %1037 = vmatmul.mubr.bf16.gmra.mrb[0].mxu0 %v903
      %v1038 = vpop.f32.mrb[0].mxu0
      %v1039 = vadd.f32 0.0, %v1038
      %v1040 = vpop.f32.mrb[0].mxu0
      %v1041 = vpop.f32.mrb[0].mxu0
      %v1042 = vadd.f32 0.0, %v1041
      %v1043 = vpop.f32.mrb[0].mxu0
      %1044 = vdwg.mxu0
      %v1045 = vadd.f32 %v660, %v943
      %v1046 = vadd.f32 %v663, %v946
      %v1047 = vadd.f32 %v668, %v951
      %v1048 = vadd.f32 %v671, %v954
      %v1049 = vadd.f32 %v676, %v959
      %v1050 = vadd.f32 %v679, %v962
      %v1051 = vadd.f32 %v684, %v967
      %v1052 = vadd.f32 %v687, %v970
      %v1053 = vadd.f32 %v692, %v975
      %v1054 = vadd.f32 %v695, %v978
      %v1055 = vadd.f32 %v700, %v983
      %v1056 = vadd.f32 %v703, %v986
      %v1057 = vadd.f32 %v708, %v991
      %v1058 = vadd.f32 %v711, %v994
      %v1059 = vadd.f32 %v716, %v999
      %v1060 = vadd.f32 %v719, %v1002
      %v1061 = vadd.f32 %v724, %v1007
      %v1062 = vadd.f32 %v727, %v1010
      %v1063 = vadd.f32 %v732, %v1015
      %v1064 = vadd.f32 %v735, %v1018
      %v1065 = vadd.f32 %v740, %v1023
      %v1066 = vadd.f32 %v743, %v1026
      %v1067 = vadd.f32 %v748, %v1031
      %v1068 = vadd.f32 %v751, %v1034
      %v1069 = vadd.f32 %v756, %v1039
      %v1070 = vadd.f32 %v759, %v1042
      %v1071 = vld [vmem:[%s2] sm:$0x1]
      %v1073 = vlaneseq
      %v1074 = vshrl.u32 %v1073, 7
      %v1075 = vsub.s32 0, %v1074
      %v1076 = vrot.slane %v1071, %v1075
      %v1078 = vadd.f32 %v1045, %v1076
      %v1079 = vadd.f32 %v1046, %v1076
      %v1080 = vadd.f32 %v1047, %v1076
      %v1081 = vadd.f32 %v1048, %v1076
      %v1082 = vadd.f32 %v1049, %v1076
      %v1083 = vadd.f32 %v1050, %v1076
      %v1084 = vadd.f32 %v1051, %v1076
      %v1085 = vadd.f32 %v1052, %v1076
      %v1086 = vadd.f32 %v1053, %v1076
      %v1087 = vadd.f32 %v1054, %v1076
      %v1088 = vadd.f32 %v1055, %v1076
      %v1089 = vadd.f32 %v1056, %v1076
      %v1090 = vadd.f32 %v1057, %v1076
      %v1091 = vadd.f32 %v1058, %v1076
      %v1092 = vadd.f32 %v1059, %v1076
      %v1093 = vadd.f32 %v1060, %v1076
      %v1094 = vadd.f32 %v1061, %v1076
      %v1095 = vadd.f32 %v1062, %v1076
      %v1096 = vadd.f32 %v1063, %v1076
      %v1097 = vadd.f32 %v1064, %v1076
      %v1098 = vadd.f32 %v1065, %v1076
      %v1099 = vadd.f32 %v1066, %v1076
      %v1100 = vadd.f32 %v1067, %v1076
      %v1101 = vadd.f32 %v1068, %v1076
      %v1102 = vadd.f32 %v1069, %v1076
      %v1103 = vadd.f32 %v1070, %v1076
      %v1104 = vmax.f32 %v1078, 0.0
      %v1105 = vmax.f32 %v1079, 0.0
      %v1106 = vmax.f32 %v1080, 0.0
      %v1107 = vmax.f32 %v1081, 0.0
      %v1108 = vmax.f32 %v1082, 0.0
      %v1109 = vmax.f32 %v1083, 0.0
      %v1110 = vmax.f32 %v1084, 0.0
      %v1111 = vmax.f32 %v1085, 0.0
      %v1112 = vmax.f32 %v1086, 0.0
      %v1113 = vmax.f32 %v1087, 0.0
      %v1114 = vmax.f32 %v1088, 0.0
      %v1115 = vmax.f32 %v1089, 0.0
      %v1116 = vmax.f32 %v1090, 0.0
      %v1117 = vmax.f32 %v1091, 0.0
      %v1118 = vmax.f32 %v1092, 0.0
      %v1119 = vmax.f32 %v1093, 0.0
      %v1120 = vmax.f32 %v1094, 0.0
      %v1121 = vmax.f32 %v1095, 0.0
      %v1122 = vmax.f32 %v1096, 0.0
      %v1123 = vmax.f32 %v1097, 0.0
      %v1124 = vmax.f32 %v1098, 0.0
      %v1125 = vmax.f32 %v1099, 0.0
      %v1126 = vmax.f32 %v1100, 0.0
      %v1127 = vmax.f32 %v1101, 0.0
      %v1128 = vmax.f32 %v1102, 0.0
      %v1129 = vmax.f32 %v1103, 0.0
      %v1130 = vpack.c.bf16 %v1105, %v1104
      %v1131 = vpack.c.bf16 %v1107, %v1106
      %v1132 = vpack.c.bf16 %v1109, %v1108
      %v1133 = vpack.c.bf16 %v1111, %v1110
      %v1134 = vpack.c.bf16 %v1113, %v1112
      %v1135 = vpack.c.bf16 %v1115, %v1114
      %v1136 = vpack.c.bf16 %v1117, %v1116
      %v1137 = vpack.c.bf16 %v1119, %v1118
      %v1138 = vpack.c.bf16 %v1121, %v1120
      %v1139 = vpack.c.bf16 %v1123, %v1122
      %v1140 = vpack.c.bf16 %v1125, %v1124
      %v1141 = vpack.c.bf16 %v1127, %v1126
      %v1142 = vpack.c.bf16 %v1129, %v1128
      %v1156 = vunpack.c.l.b16 %v1130
      %v1157 = vunpack.c.h.b16 %v1130
      %v1158 = vunpack.c.l.b16 %v1131
      %v1159 = vunpack.c.h.b16 %v1131
      %v1160 = vunpack.c.l.b16 %v1132
      %v1161 = vunpack.c.h.b16 %v1132
      %v1162 = vunpack.c.l.b16 %v1133
      %v1163 = vunpack.c.h.b16 %v1133
      %v1164 = vunpack.c.l.b16 %v1134
      %v1165 = vunpack.c.h.b16 %v1134
      %v1166 = vunpack.c.l.b16 %v1135
      %v1167 = vunpack.c.h.b16 %v1135
      %v1168 = vunpack.c.l.b16 %v1136
      %v1169 = vunpack.c.h.b16 %v1136
      %v1170 = vunpack.c.l.b16 %v1137
      %v1171 = vunpack.c.h.b16 %v1137
      %v1172 = vunpack.c.l.b16 %v1138
      %v1173 = vunpack.c.h.b16 %v1138
      %v1174 = vunpack.c.l.b16 %v1139
      %v1175 = vunpack.c.h.b16 %v1139
      %v1176 = vunpack.c.l.b16 %v1140
      %v1177 = vunpack.c.h.b16 %v1140
      %v1178 = vunpack.c.l.b16 %v1141
      %v1179 = vunpack.c.h.b16 %v1141
      %v1180 = vunpack.c.l.b16 %v1142
      %v1181 = vunpack.c.h.b16 %v1142
      %v1182 = vpack.c.b16 %v1156, %v1156
      %v1183 = vpack.c.b16 %v1157, %v1157
      %v1184 = vpack.c.b16 %v1158, %v1158
      %v1185 = vpack.c.b16 %v1159, %v1159
      %v1186 = vpack.c.b16 %v1160, %v1160
      %v1187 = vpack.c.b16 %v1161, %v1161
      %v1188 = vpack.c.b16 %v1162, %v1162
      %v1189 = vpack.c.b16 %v1163, %v1163
      %v1190 = vpack.c.b16 %v1164, %v1164
      %v1191 = vpack.c.b16 %v1165, %v1165
      %v1192 = vpack.c.b16 %v1166, %v1166
      %v1193 = vpack.c.b16 %v1167, %v1167
      %v1194 = vpack.c.b16 %v1168, %v1168
      %v1195 = vpack.c.b16 %v1169, %v1169
      %v1196 = vpack.c.b16 %v1170, %v1170
      %v1197 = vpack.c.b16 %v1171, %v1171
      %v1198 = vpack.c.b16 %v1172, %v1172
      %v1199 = vpack.c.b16 %v1173, %v1173
      %v1200 = vpack.c.b16 %v1174, %v1174
      %v1201 = vpack.c.b16 %v1175, %v1175
      %v1202 = vpack.c.b16 %v1176, %v1176
      %v1203 = vpack.c.b16 %v1177, %v1177
      %v1204 = vpack.c.b16 %v1178, %v1178
      %v1205 = vpack.c.b16 %v1179, %v1179
      %v1206 = vpack.c.b16 %v1180, %v1180
      %v1207 = vpack.c.b16 %v1181, %v1181
      %1234 = vst [vmem:[%s192] sm:$0xf] %v1182
      %1235 = vst [vmem:[%s192 + $0x4] sm:$0xf] %v1183
      %1236 = vst [vmem:[%s192 + $0x8] sm:$0xf] %v1184
      %1237 = vst [vmem:[%s192 + $0xc] sm:$0xf] %v1185
      %1238 = vst [vmem:[%s192 + $0x10] sm:$0xf] %v1186
      %1239 = vst [vmem:[%s192 + $0x14] sm:$0xf] %v1187
      %1240 = vst [vmem:[%s192 + $0x18] sm:$0xf] %v1188
      %1241 = vst [vmem:[%s192 + $0x1c] sm:$0xf] %v1189
      %1242 = vst [vmem:[%s192 + $0x20] sm:$0xf] %v1190
      %1243 = vst [vmem:[%s192 + $0x24] sm:$0xf] %v1191
      %1244 = vst [vmem:[%s192 + $0x28] sm:$0xf] %v1192
      %1245 = vst [vmem:[%s192 + $0x2c] sm:$0xf] %v1193
      %1246 = vst [vmem:[%s192 + $0x30] sm:$0xf] %v1194
      %1247 = vst [vmem:[%s192 + $0x34] sm:$0xf] %v1195
      %1248 = vst [vmem:[%s192 + $0x38] sm:$0xf] %v1196
      %1249 = vst [vmem:[%s192 + $0x3c] sm:$0xf] %v1197
      %1250 = vst [vmem:[%s192 + $0x40] sm:$0xf] %v1198
      %1251 = vst [vmem:[%s192 + $0x44] sm:$0xf] %v1199
      %1252 = vst [vmem:[%s192 + $0x48] sm:$0xf] %v1200
      %1253 = vst [vmem:[%s192 + $0x4c] sm:$0xf] %v1201
      %1254 = vst [vmem:[%s192 + $0x50] sm:$0xf] %v1202
      %1255 = vst [vmem:[%s192 + $0x54] sm:$0xf] %v1203
      %1256 = vst [vmem:[%s192 + $0x58] sm:$0xf] %v1204
      %1257 = vst [vmem:[%s192 + $0x5c] sm:$0xf] %v1205
      %1258 = vst [vmem:[%s192 + $0x60] sm:$0xf] %v1206
      %1259 = vst [vmem:[%s192 + $0x64] sm:$0xf] %v1207
      %s1260 = smul.u32 26, %s19
      %p1261 = scmp.lt.s32.totalorder %s18, 1
      %s1262 = scalar_select %p1261, %s18, 1
      %p1263 = scmp.lt.s32.totalorder %s1260, 25
      %s1264 = scalar_select %p1263, %s1260, 25
      %s1265 = smul.addr %s1262, 26
      %s1266 = sadd.s32 %s1264, %s1265
      %s1267 = smul.addr %s1266, 4
      %s1268 = scalar_lea.vmem %s3, %s1267
      // Predicated region
      $region33: #{depth_corr_forward.4} parent=31 // pred_check
        %p1269 = pneg %p114
      $region34: #{depth_corr_forward.4} parent=31 // pred_check_branch
        %1271 = sbr.rel (%p1269) target = $region36
      $region35: #{depth_corr_forward.4} parent=31 // pred_region
        %s1272 = smul.u32 26, %s19
      $region36: #{depth_corr_forward.4} parent=31 // pred_fallthru
        _
    $region32: #{depth_corr_forward.4} parent=5 // pred_fallthru
      _
    %p1273 = scmp.le.s32.totalorder 2, %s9
    // Predicated region
    $region37: #{depth_corr_forward.4} parent=5 // pred_check
      %p1274 = pneg %p1273
    $region38: #{depth_corr_forward.4} parent=5 // pred_check_branch
      %1276 = sbr.rel (%p1274) target = $region40
    $region39: #{depth_corr_forward.4} parent=5 // pred_region
      %s1277 = ssub.s32 %s9, 2
      // Predicated region
      $region41: #{depth_corr_forward.4} parent=39 // pred_check
        %p1278 = pneg %p120
      $region42: #{depth_corr_forward.4} parent=39 // pred_check_branch
        %1280 = sbr.rel (%p1278) target = $region44
      $region43: #{depth_corr_forward.4} parent=39 // pred_region
        %s1281 = smul.u32 26, %s21
        %p1282 = scmp.lt.s32.totalorder %s20, 1
        %s1283 = scalar_select %p1282, %s20, 1
        %p1284 = scmp.lt.s32.totalorder %s1281, 25
        %s1285 = scalar_select %p1284, %s1281, 25
        %s1286 = smul.addr %s1283, 26
        %s1287 = sadd.s32 %s1285, %s1286
        %s1288 = smul.addr %s1287, 4
        %s1289 = scalar_lea.vmem %s3, %s1288
      $region44: #{depth_corr_forward.4} parent=39 // pred_fallthru
        _
    $region40: #{depth_corr_forward.4} parent=5 // pred_fallthru
      _
  $region6: #{depth_corr_forward.4} parent=0 // loop_footer
    %s13 = sadd.s32 1, %s9
  $region7: #{depth_corr_forward.4} parent=0 // loop_footer_branch
    %8 = sbr.rel target = $region3
  $region8: #{depth_corr_forward.4} parent=0 // loop_exit
    _

// kernel: depth_corr_forward.3
$region0: #{depth_corr_forward.3}
  #allocation0 [shape = 'u32[]', space=smem, size = 0x4, offset = 0x4, fixed_abs, tag = 'smem constant byte address 0x4 - core index']
  #allocation1 [shape = 'u32[144,128]{1,0:T(1,128)}', space=vmem, size = 0x12000, scoped, tag = 'internal scratch']
  %s0 = inlined_call_operand.vmem [shape: bf16[2,112,12], index: 0, kind: input, shape index: {}]
  %s1 = inlined_call_operand.vmem [shape: bf16[3,12,128], index: 1, kind: input, shape index: {}]
  %s2 = inlined_call_operand.vmem [shape: f32[1,128], index: 2, kind: input, shape index: {}]
  %s3 = inlined_call_operand.vmem [shape: bf16[2,80,128], index: 3, kind: output, shape index: {}]
  %s4 = sld [smem:[#allocation0]]
  $region45: #{depth_corr_forward.3} parent=0
    _
  %s6 = ssub.s32 1, %s4
  %s7 = scalar_select 0, %s6, %s4
  loop: start=0, step=1, limit=4
  $region2: #{depth_corr_forward.3} parent=0 // loop_pre_header
    _
  $region3: #{depth_corr_forward.3} parent=0 // loop_header
    %s9 = sphi 0, %s13
    %p10 = scmp.ge.s32.totalorder %s9, 4
    %s16 = sphi 0, %s28
    %s17 = sphi 0, %s24
    %s18 = sphi 0, %s16
    %s19 = sphi 0, %s17
    %s20 = sphi 0, %s18
    %s21 = sphi 0, %s19
    %s31 = sphi 0, %s33
    %s34 = sphi 0, %s31
    %s35 = sphi 0, %s34
    %s51 = sphi 0, %s35
    %s55 = sphi 0, %s55
    %s57 = sphi 0, %s55
    %s58 = sphi 0, %s57
    %s72 = sphi 0, %s58
    %s76 = sphi 0, %s76
    %s78 = sphi 0, %s76
    %s79 = sphi 0, %s78
    %s93 = sphi 0, %s79
    %s101 = sphi 0, %s103
    %s104 = sphi 0, %s101
    %s105 = sphi 0, %s104
    %s121 = sphi 0, %s105
  $region4: #{depth_corr_forward.3} parent=0 // loop_header_branch
    %12 = sbr.rel (%p10) target = $region8
  $region5: #{depth_corr_forward.3} parent=0 // loop_body
    %s14 = ssub.s32 %s9, 1
    %s15 = ssub.s32 %s9, 2
    %s22 = sadd.s32 1, %s17
    %p23 = scmp.ge.s32.totalorder %s22, 1
    %s24 = scalar_select %p23, 0, %s22
    %s25 = sadd.s32 1, %s16
    %s26 = scalar_select %p23, %s25, %s16
    %p27 = scmp.ge.s32.totalorder %s26, 2
    %s28 = scalar_select %p27, 0, %s26
    %s29 = ssub.s32 %s16, %s28
    %p30 = scmp.eq.s32.totalorder %s29, 0
    %s32 = sadd.s32 %s31, 1
    %s33 = scalar_select %p30, %s31, %s32
    %p36 = pneg %p30
    %p37 = scmp.eq.s32.totalorder %s9, 1
    %p38 = por %p36, %p37
    %p39 = scmp.ne.s32.totalorder %s31, %s34
    %p40 = scmp.eq.s32.totalorder %s9, 0
    %p41 = por %p39, %p40
    %p42 = scmp.ne.s32.totalorder %s31, %s34
    %p43 = scmp.eq.s32.totalorder %s14, 1
    %p44 = por %p42, %p43
    %p45 = scmp.ne.s32.totalorder %s34, %s35
    %p46 = scmp.eq.s32.totalorder %s14, 0
    %p47 = por %p45, %p46
    %p48 = scmp.ne.s32.totalorder %s34, %s35
    %p49 = scmp.eq.s32.totalorder %s15, 1
    %p50 = por %p48, %p49
    %p52 = scmp.ne.s32.totalorder %s35, %s51
    %p53 = scmp.eq.s32.totalorder %s15, 0
    %p54 = por %p52, %p53
    %s56 = sadd.s32 %s55, 1
    %p59 = scmp.eq.s32.totalorder %s9, 1
    %p60 = scmp.ne.s32.totalorder %s55, %s57
    %p61 = scmp.eq.s32.totalorder %s9, 0
    %p62 = por %p60, %p61
    %p63 = scmp.ne.s32.totalorder %s55, %s57
    %p64 = scmp.eq.s32.totalorder %s14, 1
    %p65 = por %p63, %p64
    %p66 = scmp.ne.s32.totalorder %s57, %s58
    %p67 = scmp.eq.s32.totalorder %s14, 0
    %p68 = por %p66, %p67
    %p69 = scmp.ne.s32.totalorder %s57, %s58
    %p70 = scmp.eq.s32.totalorder %s15, 1
    %p71 = por %p69, %p70
    %p73 = scmp.ne.s32.totalorder %s58, %s72
    %p74 = scmp.eq.s32.totalorder %s15, 0
    %p75 = por %p73, %p74
    %s77 = sadd.s32 %s76, 1
    %p80 = scmp.eq.s32.totalorder %s9, 1
    %p81 = scmp.ne.s32.totalorder %s76, %s78
    %p82 = scmp.eq.s32.totalorder %s9, 0
    %p83 = por %p81, %p82
    %p84 = scmp.ne.s32.totalorder %s76, %s78
    %p85 = scmp.eq.s32.totalorder %s14, 1
    %p86 = por %p84, %p85
    %p87 = scmp.ne.s32.totalorder %s78, %s79
    %p88 = scmp.eq.s32.totalorder %s14, 0
    %p89 = por %p87, %p88
    %p90 = scmp.ne.s32.totalorder %s78, %s79
    %p91 = scmp.eq.s32.totalorder %s15, 1
    %p92 = por %p90, %p91
    %p94 = scmp.ne.s32.totalorder %s79, %s93
    %p95 = scmp.eq.s32.totalorder %s15, 0
    %p96 = por %p94, %p95
    %s97 = ssub.s32 %s16, %s28
    %s98 = ssub.s32 %s17, %s24
    %s99 = sor.u32 %s97, %s98
    %p100 = scmp.eq.s32.totalorder %s99, 0
    %s102 = sadd.s32 %s101, 1
    %s103 = scalar_select %p100, %s101, %s102
    %p106 = pneg %p100
    %p107 = scmp.eq.s32.totalorder %s9, 1
    %p108 = por %p106, %p107
    %p109 = scmp.ne.s32.totalorder %s101, %s104
    %p110 = scmp.eq.s32.totalorder %s9, 0
    %p111 = por %p109, %p110
    %p112 = scmp.ne.s32.totalorder %s101, %s104
    %p113 = scmp.eq.s32.totalorder %s14, 1
    %p114 = por %p112, %p113
    %p115 = scmp.ne.s32.totalorder %s104, %s105
    %p116 = scmp.eq.s32.totalorder %s14, 0
    %p117 = por %p115, %p116
    %p118 = scmp.ne.s32.totalorder %s104, %s105
    %p119 = scmp.eq.s32.totalorder %s15, 1
    %p120 = por %p118, %p119
    %p122 = scmp.ne.s32.totalorder %s105, %s121
    %p123 = scmp.eq.s32.totalorder %s15, 0
    %p124 = por %p122, %p123
    %p125 = scmp.le.s32.totalorder 1, %s9
    %p126 = scmp.lt.s32.totalorder %s9, 3
    %p127 = pnand %p125, %p126
    %p128 = pneg %p127
    // Predicated region
    $region9: #{depth_corr_forward.3} parent=5 // pred_check
      _
    $region10: #{depth_corr_forward.3} parent=5 // pred_check_branch
      %130 = sbr.rel (%p127) target = $region12
    $region11: #{depth_corr_forward.3} parent=5 // pred_region
      %s131 = ssub.s32 %s9, 1
      // Predicated region
      $region13: #{depth_corr_forward.3} parent=11 // pred_check
        %p132 = pneg %p68
      $region14: #{depth_corr_forward.3} parent=11 // pred_check_branch
        %134 = sbr.rel (%p132) target = $region16
      $region15: #{depth_corr_forward.3} parent=11 // pred_region
        _
      $region16: #{depth_corr_forward.3} parent=11 // pred_fallthru
        _
      // Predicated region
      $region17: #{depth_corr_forward.3} parent=11 // pred_check
        %p135 = pneg %p89
      $region18: #{depth_corr_forward.3} parent=11 // pred_check_branch
        %137 = sbr.rel (%p135) target = $region20
      $region19: #{depth_corr_forward.3} parent=11 // pred_region
        _
      $region20: #{depth_corr_forward.3} parent=11 // pred_fallthru
        _
    $region12: #{depth_corr_forward.3} parent=5 // pred_fallthru
      _
    %p138 = scmp.lt.s32.totalorder %s9, 2
    // Predicated region
    $region21: #{depth_corr_forward.3} parent=5 // pred_check
      %p139 = pneg %p138
    $region22: #{depth_corr_forward.3} parent=5 // pred_check_branch
      %141 = sbr.rel (%p139) target = $region24
    $region23: #{depth_corr_forward.3} parent=5 // pred_region
      // Predicated region
      $region25: #{depth_corr_forward.3} parent=23 // pred_check
        %p142 = pneg %p41
      $region26: #{depth_corr_forward.3} parent=23 // pred_check_branch
        %144 = sbr.rel (%p142) target = $region28
      $region27: #{depth_corr_forward.3} parent=23 // pred_region
        %p145 = scmp.lt.s32.totalorder %s16, 1
        %s146 = scalar_select %p145, %s16, 1
        %s147 = smul.addr %s146, 14
        %s148 = smul.addr %s147, 4
        %s149 = scalar_lea.vmem %s0, %s148
      $region28: #{depth_corr_forward.3} parent=23 // pred_fallthru
        _
    $region24: #{depth_corr_forward.3} parent=5 // pred_fallthru
      _
    %p150 = scmp.le.s32.totalorder 1, %s9
    %p151 = scmp.lt.s32.totalorder %s9, 3
    %p152 = pnand %p150, %p151
    %p153 = pneg %p152
    // Predicated region
    $region29: #{depth_corr_forward.3} parent=5 // pred_check
      _
    $region30: #{depth_corr_forward.3} parent=5 // pred_check_branch
      %155 = sbr.rel (%p152) target = $region32
    $region31: #{depth_corr_forward.3} parent=5 // pred_region
      %s156 = ssub.s32 %s9, 1
      %p157 = scmp.lt.s32.totalorder %s18, 1
      %s158 = scalar_select %p157, %s18, 1
      %s159 = smul.addr %s158, 14
      %s160 = smul.addr %s159, 4
      %s161 = scalar_lea.vmem %s0, %s160
      %p162 = pneg %p47
      %p163 = pneg %p44
      %p164 = pneg %p68
      %p165 = pneg %p65
      %p166 = pneg %p89
      %p167 = pneg %p86
      %p168 = pneg %p117
      %p169 = pneg %p114
      %s170 = smul.u32 10, %s19
      %p171 = scmp.lt.s32.totalorder %s18, 1
      %s172 = scalar_select %p171, %s18, 1
      %p173 = scmp.lt.s32.totalorder %s170, 9
      %s174 = scalar_select %p173, %s170, 9
      %s175 = smul.addr %s172, 10
      %s176 = sadd.s32 %s174, %s175
      %s177 = smul.addr %s176, 4
      %s178 = scalar_lea.vmem %s3, %s177
      %p179 = scmp.lt.s32.totalorder %s18, 1
      %s180 = scalar_select %p179, %s18, 1
      %s181 = smul.addr %s180, 14
      %s182 = smul.addr %s181, 4
      %s183 = scalar_lea.vmem %s0, %s182
      %s184 = smul.u32 10, %s19
      %p185 = scmp.lt.s32.totalorder %s18, 1
      %s186 = scalar_select %p185, %s18, 1
      %p187 = scmp.lt.s32.totalorder %s184, 9
      %s188 = scalar_select %p187, %s184, 9
      %s189 = smul.addr %s186, 10
      %s190 = sadd.s32 %s188, %s189
      %s191 = smul.addr %s190, 4
      %s192 = scalar_lea.vmem %s3, %s191
      %s193 = smul.u32 10, %s19
      %s195 = smul.u32 %s19, 80
      %s196 = sshra.s32 %s195, 3
      %s197 = sand.u32 %s195, 7
      %s198 = smul.addr %s196, 4
      %s199 = scalar_lea.vmem %s183, %s198
      %v200 = vld [vmem:[%s199] sm:$0xf]
      %v201 = vld [vmem:[%s199 + $0x4] sm:$0xf]
      %v202 = vld [vmem:[%s199 + $0x8] sm:$0xf]
      %v203 = vld [vmem:[%s199 + $0xc] sm:$0xf]
      %v204 = vld [vmem:[%s199 + $0x10] sm:$0xf]
      %v205 = vld [vmem:[%s199 + $0x14] sm:$0xf]
      %v206 = vld [vmem:[%s199 + $0x18] sm:$0xf]
      %v207 = vld [vmem:[%s199 + $0x1c] sm:$0xf]
      %v208 = vld [vmem:[%s199 + $0x20] sm:$0xf]
      %v209 = vld [vmem:[%s199 + $0x24] sm:$0xf]
      %v210 = vld [vmem:[%s1] sm:$0xf]
      %v211 = vld [vmem:[%s1 + $0x4] sm:$0x3]
      %s212 = sadd.s32 %s195, 16
      %s213 = sshra.s32 %s212, 3
      %s214 = sand.u32 %s212, 7
      %s215 = smul.addr %s213, 4
      %s216 = scalar_lea.vmem %s183, %s215
      %v217 = vld [vmem:[%s216] sm:$0xf]
      %v218 = vld [vmem:[%s216 + $0x4] sm:$0xf]
      %v219 = vld [vmem:[%s216 + $0x8] sm:$0xf]
      %v220 = vld [vmem:[%s216 + $0xc] sm:$0xf]
      %v221 = vld [vmem:[%s216 + $0x10] sm:$0xf]
      %v222 = vld [vmem:[%s216 + $0x14] sm:$0xf]
      %v223 = vld [vmem:[%s216 + $0x18] sm:$0xf]
      %v224 = vld [vmem:[%s216 + $0x1c] sm:$0xf]
      %v225 = vld [vmem:[%s216 + $0x20] sm:$0xf]
      %v226 = vld [vmem:[%s216 + $0x24] sm:$0xf]
      %s227 = scalar_lea.vmem %s1, 8
      %v228 = vld [vmem:[%s227] sm:$0xf]
      %v229 = vld [vmem:[%s227 + $0x4] sm:$0x3]
      %v240 = vunpack.c.l.b16 %v217
      %v241 = vunpack.c.l.b16 %v218
      %v242 = vunpack.c.l.b16 %v219
      %v243 = vunpack.c.l.b16 %v220
      %v244 = vunpack.c.l.b16 %v221
      %v245 = vunpack.c.l.b16 %v222
      %v246 = vunpack.c.l.b16 %v223
      %v247 = vunpack.c.l.b16 %v224
      %v248 = vunpack.c.l.b16 %v225
      %v249 = vunpack.c.l.b16 %v226
      %v250 = vpack.c.b16 %v241, %v240
      %v251 = vpack.c.b16 %v243, %v242
      %v252 = vpack.c.b16 %v245, %v244
      %v253 = vpack.c.b16 %v247, %v246
      %v254 = vpack.c.b16 %v249, %v248
      %v257 = vunpack.c.l.b16 %v228
      %v258 = vunpack.c.l.b16 %v229
      %v259 = vpack.c.b16 %v258, %v257
      %vm260 = vcmask 97280
      %v262 = vsel %vm260, %v250, 0
      %v265 = vsel %vm260, %v251, 0
      %v268 = vsel %vm260, %v252, 0
      %v271 = vsel %vm260, %v253, 0
      %v274 = vsel %vm260, %v254, 0
      %vm276 = vcmask 1045504
      %v278 = vsel %vm276, %v259, 0
      %280 = vmatprep.subr.bf16.mxu0 0
      %281 = vmatpush1.bf16.msra.mxu0 %v278
      %282 = vmatprep.subr.bf16.mxu0 0
      %283 = vmatpush1.bf16.msra.mxu0 0
      %284 = vmatprep.subr.bf16.mxu0 0
      %285 = vmatpush1.bf16.msra.mxu0 0
      %286 = vmatprep.subr.bf16.mxu0 0
      %287 = vmatpush1.bf16.msra.mxu0 0
      %288 = vmatprep.subr.bf16.mxu0 0
      %289 = vmatpush1.bf16.msra.mxu0 0
      %290 = vmatprep.subr.bf16.mxu0 0
      %291 = vmatpush1.bf16.msra.mxu0 0
      %292 = vmatprep.subr.bf16.mxu0 0
      %293 = vmatpush1.bf16.msra.mxu0 0
      %294 = vmatprep.subr.bf16.mxu0 0
      %295 = vmatpush1.bf16.msra.mxu0 0
      %296 = vmatprep.subr.bf16.mxu0 0
      %297 = vmatpush1.bf16.msra.mxu0 0
      %298 = vmatprep.subr.bf16.mxu0 0
      %299 = vmatpush1.bf16.msra.mxu0 0
      %300 = vmatprep.subr.bf16.mxu0 0
      %301 = vmatpush1.bf16.msra.mxu0 0
      %302 = vmatprep.subr.bf16.mxu0 0
      %303 = vmatpush1.bf16.msra.mxu0 0
      %304 = vmatprep.subr.bf16.mxu0 0
      %305 = vmatpush1.bf16.msra.mxu0 0
      %306 = vmatprep.subr.bf16.mxu0 0
      %307 = vmatpush1.bf16.msra.mxu0 0
      %308 = vmatprep.subr.bf16.mxu0 0
      %309 = vmatpush1.bf16.msra.mxu0 0
      %310 = vmatprep.subr.bf16.mxu0 0
      %311 = vmatpush1.bf16.msra.mxu0 0
      %312 = vmatprep.mubr.bf16.mxu0 0
      %313 = vmatmul.mubr.bf16.gmra.mrb[0].mxu0 %v262
      %v314 = vpop.f32.mrb[0].mxu0
      %v315 = vadd.f32 0.0, %v314
      %v316 = vpop.f32.mrb[0].mxu0
      %v317 = vpop.f32.mrb[0].mxu0
      %v318 = vadd.f32 0.0, %v317
      %v319 = vpop.f32.mrb[0].mxu0
      %320 = vmatprep.mubr.bf16.mxu0 0
      %321 = vmatmul.mubr.bf16.gmra.mrb[0].mxu0 %v265
      %v322 = vpop.f32.mrb[0].mxu0
      %v323 = vadd.f32 0.0, %v322
      %v324 = vpop.f32.mrb[0].mxu0
      %v325 = vpop.f32.mrb[0].mxu0
      %v326 = vadd.f32 0.0, %v325
      %v327 = vpop.f32.mrb[0].mxu0
      %328 = vmatprep.mubr.bf16.mxu0 0
      %329 = vmatmul.mubr.bf16.gmra.mrb[0].mxu0 %v268
      %v330 = vpop.f32.mrb[0].mxu0
      %v331 = vadd.f32 0.0, %v330
      %v332 = vpop.f32.mrb[0].mxu0
      %v333 = vpop.f32.mrb[0].mxu0
      %v334 = vadd.f32 0.0, %v333
      %v335 = vpop.f32.mrb[0].mxu0
      %336 = vmatprep.mubr.bf16.mxu0 0
      %337 = vmatmul.mubr.bf16.gmra.mrb[0].mxu0 %v271
      %v338 = vpop.f32.mrb[0].mxu0
      %v339 = vadd.f32 0.0, %v338
      %v340 = vpop.f32.mrb[0].mxu0
      %v341 = vpop.f32.mrb[0].mxu0
      %v342 = vadd.f32 0.0, %v341
      %v343 = vpop.f32.mrb[0].mxu0
      %344 = vmatprep.mubr.bf16.mxu0 0
      %345 = vmatmul.mubr.bf16.gmra.mrb[0].mxu0 %v274
      %v346 = vpop.f32.mrb[0].mxu0
      %v347 = vadd.f32 0.0, %v346
      %v348 = vpop.f32.mrb[0].mxu0
      %v349 = vpop.f32.mrb[0].mxu0
      %v350 = vadd.f32 0.0, %v349
      %v351 = vpop.f32.mrb[0].mxu0
      %352 = vdwg.mxu0
      %v363 = vunpack.c.l.b16 %v200
      %v364 = vunpack.c.l.b16 %v201
      %v365 = vunpack.c.l.b16 %v202
      %v366 = vunpack.c.l.b16 %v203
      %v367 = vunpack.c.l.b16 %v204
      %v368 = vunpack.c.l.b16 %v205
      %v369 = vunpack.c.l.b16 %v206
      %v370 = vunpack.c.l.b16 %v207
      %v371 = vunpack.c.l.b16 %v208
      %v372 = vunpack.c.l.b16 %v209
      %v373 = vpack.c.b16 %v364, %v363
      %v374 = vpack.c.b16 %v366, %v365
      %v375 = vpack.c.b16 %v368, %v367
      %v376 = vpack.c.b16 %v370, %v369
      %v377 = vpack.c.b16 %v372, %v371
      %v380 = vunpack.c.l.b16 %v210
      %v381 = vunpack.c.l.b16 %v211
      %v382 = vpack.c.b16 %v381, %v380
      %v384 = vsel %vm260, %v373, 0
      %v387 = vsel %vm260, %v374, 0
      %v390 = vsel %vm260, %v375, 0
      %v393 = vsel %vm260, %v376, 0
      %v396 = vsel %vm260, %v377, 0
      %v399 = vsel %vm276, %v382, 0
      %401 = vmatprep.subr.bf16.mxu0 0
      %402 = vmatpush1.bf16.msra.mxu0 %v399
      %403 = vmatprep.subr.bf16.mxu0 0
      %404 = vmatpush1.bf16.msra.mxu0 0
      %405 = vmatprep.subr.bf16.mxu0 0
      %406 = vmatpush1.bf16.msra.mxu0 0
      %407 = vmatprep.subr.bf16.mxu0 0
      %408 = vmatpush1.bf16.msra.mxu0 0
      %409 = vmatprep.subr.bf16.mxu0 0
      %410 = vmatpush1.bf16.msra.mxu0 0
      %411 = vmatprep.subr.bf16.mxu0 0
      %412 = vmatpush1.bf16.msra.mxu0 0
      %413 = vmatprep.subr.bf16.mxu0 0
      %414 = vmatpush1.bf16.msra.mxu0 0
      %415 = vmatprep.subr.bf16.mxu0 0
      %416 = vmatpush1.bf16.msra.mxu0 0
      %417 = vmatprep.subr.bf16.mxu0 0
      %418 = vmatpush1.bf16.msra.mxu0 0
      %419 = vmatprep.subr.bf16.mxu0 0
      %420 = vmatpush1.bf16.msra.mxu0 0
      %421 = vmatprep.subr.bf16.mxu0 0
      %422 = vmatpush1.bf16.msra.mxu0 0
      %423 = vmatprep.subr.bf16.mxu0 0
      %424 = vmatpush1.bf16.msra.mxu0 0
      %425 = vmatprep.subr.bf16.mxu0 0
      %426 = vmatpush1.bf16.msra.mxu0 0
      %427 = vmatprep.subr.bf16.mxu0 0
      %428 = vmatpush1.bf16.msra.mxu0 0
      %429 = vmatprep.subr.bf16.mxu0 0
      %430 = vmatpush1.bf16.msra.mxu0 0
      %431 = vmatprep.subr.bf16.mxu0 0
      %432 = vmatpush1.bf16.msra.mxu0 0
      %433 = vmatprep.mubr.bf16.mxu0 0
      %434 = vmatmul.mubr.bf16.gmra.mrb[0].mxu0 %v384
      %v435 = vpop.f32.mrb[0].mxu0
      %v436 = vadd.f32 %v315, %v435
      %v437 = vpop.f32.mrb[0].mxu0
      %v438 = vpop.f32.mrb[0].mxu0
      %v439 = vadd.f32 %v318, %v438
      %v440 = vpop.f32.mrb[0].mxu0
      %441 = vmatprep.mubr.bf16.mxu0 0
      %442 = vmatmul.mubr.bf16.gmra.mrb[0].mxu0 %v387
      %v443 = vpop.f32.mrb[0].mxu0
      %v444 = vadd.f32 %v323, %v443
      %v445 = vpop.f32.mrb[0].mxu0
      %v446 = vpop.f32.mrb[0].mxu0
      %v447 = vadd.f32 %v326, %v446
      %v448 = vpop.f32.mrb[0].mxu0
      %449 = vmatprep.mubr.bf16.mxu0 0
      %450 = vmatmul.mubr.bf16.gmra.mrb[0].mxu0 %v390
      %v451 = vpop.f32.mrb[0].mxu0
      %v452 = vadd.f32 %v331, %v451
      %v453 = vpop.f32.mrb[0].mxu0
      %v454 = vpop.f32.mrb[0].mxu0
      %v455 = vadd.f32 %v334, %v454
      %v456 = vpop.f32.mrb[0].mxu0
      %457 = vmatprep.mubr.bf16.mxu0 0
      %458 = vmatmul.mubr.bf16.gmra.mrb[0].mxu0 %v393
      %v459 = vpop.f32.mrb[0].mxu0
      %v460 = vadd.f32 %v339, %v459
      %v461 = vpop.f32.mrb[0].mxu0
      %v462 = vpop.f32.mrb[0].mxu0
      %v463 = vadd.f32 %v342, %v462
      %v464 = vpop.f32.mrb[0].mxu0
      %465 = vmatprep.mubr.bf16.mxu0 0
      %466 = vmatmul.mubr.bf16.gmra.mrb[0].mxu0 %v396
      %v467 = vpop.f32.mrb[0].mxu0
      %v468 = vadd.f32 %v347, %v467
      %v469 = vpop.f32.mrb[0].mxu0
      %v470 = vpop.f32.mrb[0].mxu0
      %v471 = vadd.f32 %v350, %v470
      %v472 = vpop.f32.mrb[0].mxu0
      %473 = vdwg.mxu0
      %s474 = sadd.s32 %s195, 32
      %s475 = sshra.s32 %s474, 3
      %s476 = sand.u32 %s474, 7
      %s477 = smul.addr %s475, 4
      %s478 = scalar_lea.vmem %s183, %s477
      %v479 = vld [vmem:[%s478] sm:$0xf]
      %v480 = vld [vmem:[%s478 + $0x4] sm:$0xf]
      %v481 = vld [vmem:[%s478 + $0x8] sm:$0xf]
      %v482 = vld [vmem:[%s478 + $0xc] sm:$0xf]
      %v483 = vld [vmem:[%s478 + $0x10] sm:$0xf]
      %v484 = vld [vmem:[%s478 + $0x14] sm:$0xf]
      %v485 = vld [vmem:[%s478 + $0x18] sm:$0xf]
      %v486 = vld [vmem:[%s478 + $0x1c] sm:$0xf]
      %v487 = vld [vmem:[%s478 + $0x20] sm:$0xf]
      %v488 = vld [vmem:[%s478 + $0x24] sm:$0xf]
      %s489 = scalar_lea.vmem %s1, 16
      %v490 = vld [vmem:[%s489] sm:$0xf]
      %v491 = vld [vmem:[%s489 + $0x4] sm:$0x3]
      %v502 = vunpack.c.l.b16 %v479
      %v503 = vunpack.c.l.b16 %v480
      %v504 = vunpack.c.l.b16 %v481
      %v505 = vunpack.c.l.b16 %v482
      %v506 = vunpack.c.l.b16 %v483
      %v507 = vunpack.c.l.b16 %v484
      %v508 = vunpack.c.l.b16 %v485
      %v509 = vunpack.c.l.b16 %v486
      %v510 = vunpack.c.l.b16 %v487
      %v511 = vunpack.c.l.b16 %v488
      %v512 = vpack.c.b16 %v503, %v502
      %v513 = vpack.c.b16 %v505, %v504
      %v514 = vpack.c.b16 %v507, %v506
      %v515 = vpack.c.b16 %v509, %v508
      %v516 = vpack.c.b16 %v511, %v510
      %v519 = vunpack.c.l.b16 %v490
      %v520 = vunpack.c.l.b16 %v491
      %v521 = vpack.c.b16 %v520, %v519
      %v523 = vsel %vm260, %v512, 0
      %v526 = vsel %vm260, %v513, 0
      %v529 = vsel %vm260, %v514, 0
      %v532 = vsel %vm260, %v515, 0
      %v535 = vsel %vm260, %v516, 0
      %v538 = vsel %vm276, %v521, 0
      %540 = vmatprep.subr.bf16.mxu0 0
      %541 = vmatpush1.bf16.msra.mxu0 %v538
      %542 = vmatprep.subr.bf16.mxu0 0
      %543 = vmatpush1.bf16.msra.mxu0 0
      %544 = vmatprep.subr.bf16.mxu0 0
      %545 = vmatpush1.bf16.msra.mxu0 0
      %546 = vmatprep.subr.bf16.mxu0 0
      %547 = vmatpush1.bf16.msra.mxu0 0
      %548 = vmatprep.subr.bf16.mxu0 0
      %549 = vmatpush1.bf16.msra.mxu0 0
      %550 = vmatprep.subr.bf16.mxu0 0
      %551 = vmatpush1.bf16.msra.mxu0 0
      %552 = vmatprep.subr.bf16.mxu0 0
      %553 = vmatpush1.bf16.msra.mxu0 0
      %554 = vmatprep.subr.bf16.mxu0 0
      %555 = vmatpush1.bf16.msra.mxu0 0
      %556 = vmatprep.subr.bf16.mxu0 0
      %557 = vmatpush1.bf16.msra.mxu0 0
      %558 = vmatprep.subr.bf16.mxu0 0
      %559 = vmatpush1.bf16.msra.mxu0 0
      %560 = vmatprep.subr.bf16.mxu0 0
      %561 = vmatpush1.bf16.msra.mxu0 0
      %562 = vmatprep.subr.bf16.mxu0 0
      %563 = vmatpush1.bf16.msra.mxu0 0
      %564 = vmatprep.subr.bf16.mxu0 0
      %565 = vmatpush1.bf16.msra.mxu0 0
      %566 = vmatprep.subr.bf16.mxu0 0
      %567 = vmatpush1.bf16.msra.mxu0 0
      %568 = vmatprep.subr.bf16.mxu0 0
      %569 = vmatpush1.bf16.msra.mxu0 0
      %570 = vmatprep.subr.bf16.mxu0 0
      %571 = vmatpush1.bf16.msra.mxu0 0
      %572 = vmatprep.mubr.bf16.mxu0 0
      %573 = vmatmul.mubr.bf16.gmra.mrb[0].mxu0 %v523
      %v574 = vpop.f32.mrb[0].mxu0
      %v575 = vadd.f32 0.0, %v574
      %v576 = vpop.f32.mrb[0].mxu0
      %v577 = vpop.f32.mrb[0].mxu0
      %v578 = vadd.f32 0.0, %v577
      %v579 = vpop.f32.mrb[0].mxu0
      %580 = vmatprep.mubr.bf16.mxu0 0
      %581 = vmatmul.mubr.bf16.gmra.mrb[0].mxu0 %v526
      %v582 = vpop.f32.mrb[0].mxu0
      %v583 = vadd.f32 0.0, %v582
      %v584 = vpop.f32.mrb[0].mxu0
      %v585 = vpop.f32.mrb[0].mxu0
      %v586 = vadd.f32 0.0, %v585
      %v587 = vpop.f32.mrb[0].mxu0
      %588 = vmatprep.mubr.bf16.mxu0 0
      %589 = vmatmul.mubr.bf16.gmra.mrb[0].mxu0 %v529
      %v590 = vpop.f32.mrb[0].mxu0
      %v591 = vadd.f32 0.0, %v590
      %v592 = vpop.f32.mrb[0].mxu0
      %v593 = vpop.f32.mrb[0].mxu0
      %v594 = vadd.f32 0.0, %v593
      %v595 = vpop.f32.mrb[0].mxu0
      %596 = vmatprep.mubr.bf16.mxu0 0
      %597 = vmatmul.mubr.bf16.gmra.mrb[0].mxu0 %v532
      %v598 = vpop.f32.mrb[0].mxu0
      %v599 = vadd.f32 0.0, %v598
      %v600 = vpop.f32.mrb[0].mxu0
      %v601 = vpop.f32.mrb[0].mxu0
      %v602 = vadd.f32 0.0, %v601
      %v603 = vpop.f32.mrb[0].mxu0
      %604 = vmatprep.mubr.bf16.mxu0 0
      %605 = vmatmul.mubr.bf16.gmra.mrb[0].mxu0 %v535
      %v606 = vpop.f32.mrb[0].mxu0
      %v607 = vadd.f32 0.0, %v606
      %v608 = vpop.f32.mrb[0].mxu0
      %v609 = vpop.f32.mrb[0].mxu0
      %v610 = vadd.f32 0.0, %v609
      %v611 = vpop.f32.mrb[0].mxu0
      %612 = vdwg.mxu0
      %v613 = vadd.f32 %v436, %v575
      %v614 = vadd.f32 %v439, %v578
      %v615 = vadd.f32 %v444, %v583
      %v616 = vadd.f32 %v447, %v586
      %v617 = vadd.f32 %v452, %v591
      %v618 = vadd.f32 %v455, %v594
      %v619 = vadd.f32 %v460, %v599
      %v620 = vadd.f32 %v463, %v602
      %v621 = vadd.f32 %v468, %v607
      %v622 = vadd.f32 %v471, %v610
      %v623 = vld [vmem:[%s2] sm:$0x1]
      %v625 = vlaneseq
      %v626 = vshrl.u32 %v625, 7
      %v627 = vsub.s32 0, %v626
      %v628 = vrot.slane %v623, %v627
      %v630 = vadd.f32 %v613, %v628
      %v631 = vadd.f32 %v614, %v628
      %v632 = vadd.f32 %v615, %v628
      %v633 = vadd.f32 %v616, %v628
      %v634 = vadd.f32 %v617, %v628
      %v635 = vadd.f32 %v618, %v628
      %v636 = vadd.f32 %v619, %v628
      %v637 = vadd.f32 %v620, %v628
      %v638 = vadd.f32 %v621, %v628
      %v639 = vadd.f32 %v622, %v628
      %v640 = vmax.f32 %v630, 0.0
      %v641 = vmax.f32 %v631, 0.0
      %v642 = vmax.f32 %v632, 0.0
      %v643 = vmax.f32 %v633, 0.0
      %v644 = vmax.f32 %v634, 0.0
      %v645 = vmax.f32 %v635, 0.0
      %v646 = vmax.f32 %v636, 0.0
      %v647 = vmax.f32 %v637, 0.0
      %v648 = vmax.f32 %v638, 0.0
      %v649 = vmax.f32 %v639, 0.0
      %v650 = vpack.c.bf16 %v641, %v640
      %v651 = vpack.c.bf16 %v643, %v642
      %v652 = vpack.c.bf16 %v645, %v644
      %v653 = vpack.c.bf16 %v647, %v646
      %v654 = vpack.c.bf16 %v649, %v648
      %v660 = vunpack.c.l.b16 %v650
      %v661 = vunpack.c.h.b16 %v650
      %v662 = vunpack.c.l.b16 %v651
      %v663 = vunpack.c.h.b16 %v651
      %v664 = vunpack.c.l.b16 %v652
      %v665 = vunpack.c.h.b16 %v652
      %v666 = vunpack.c.l.b16 %v653
      %v667 = vunpack.c.h.b16 %v653
      %v668 = vunpack.c.l.b16 %v654
      %v669 = vunpack.c.h.b16 %v654
      %v670 = vpack.c.b16 %v660, %v660
      %v671 = vpack.c.b16 %v661, %v661
      %v672 = vpack.c.b16 %v662, %v662
      %v673 = vpack.c.b16 %v663, %v663
      %v674 = vpack.c.b16 %v664, %v664
      %v675 = vpack.c.b16 %v665, %v665
      %v676 = vpack.c.b16 %v666, %v666
      %v677 = vpack.c.b16 %v667, %v667
      %v678 = vpack.c.b16 %v668, %v668
      %v679 = vpack.c.b16 %v669, %v669
      %690 = vst [vmem:[%s192] sm:$0xf] %v670
      %691 = vst [vmem:[%s192 + $0x4] sm:$0xf] %v671
      %692 = vst [vmem:[%s192 + $0x8] sm:$0xf] %v672
      %693 = vst [vmem:[%s192 + $0xc] sm:$0xf] %v673
      %694 = vst [vmem:[%s192 + $0x10] sm:$0xf] %v674
      %695 = vst [vmem:[%s192 + $0x14] sm:$0xf] %v675
      %696 = vst [vmem:[%s192 + $0x18] sm:$0xf] %v676
      %697 = vst [vmem:[%s192 + $0x1c] sm:$0xf] %v677
      %698 = vst [vmem:[%s192 + $0x20] sm:$0xf] %v678
      %699 = vst [vmem:[%s192 + $0x24] sm:$0xf] %v679
      %s700 = smul.u32 10, %s19
      %p701 = scmp.lt.s32.totalorder %s18, 1
      %s702 = scalar_select %p701, %s18, 1
      %p703 = scmp.lt.s32.totalorder %s700, 9
      %s704 = scalar_select %p703, %s700, 9
      %s705 = smul.addr %s702, 10
      %s706 = sadd.s32 %s704, %s705
      %s707 = smul.addr %s706, 4
      %s708 = scalar_lea.vmem %s3, %s707
      // Predicated region
      $region33: #{depth_corr_forward.3} parent=31 // pred_check
        %p709 = pneg %p114
      $region34: #{depth_corr_forward.3} parent=31 // pred_check_branch
        %711 = sbr.rel (%p709) target = $region36
      $region35: #{depth_corr_forward.3} parent=31 // pred_region
        %s712 = smul.u32 10, %s19
      $region36: #{depth_corr_forward.3} parent=31 // pred_fallthru
        _
    $region32: #{depth_corr_forward.3} parent=5 // pred_fallthru
      _
    %p713 = scmp.le.s32.totalorder 2, %s9
    // Predicated region
    $region37: #{depth_corr_forward.3} parent=5 // pred_check
      %p714 = pneg %p713
    $region38: #{depth_corr_forward.3} parent=5 // pred_check_branch
      %716 = sbr.rel (%p714) target = $region40
    $region39: #{depth_corr_forward.3} parent=5 // pred_region
      %s717 = ssub.s32 %s9, 2
      // Predicated region
      $region41: #{depth_corr_forward.3} parent=39 // pred_check
        %p718 = pneg %p120
      $region42: #{depth_corr_forward.3} parent=39 // pred_check_branch
        %720 = sbr.rel (%p718) target = $region44
      $region43: #{depth_corr_forward.3} parent=39 // pred_region
        %s721 = smul.u32 10, %s21
        %p722 = scmp.lt.s32.totalorder %s20, 1
        %s723 = scalar_select %p722, %s20, 1
        %p724 = scmp.lt.s32.totalorder %s721, 9
        %s725 = scalar_select %p724, %s721, 9
        %s726 = smul.addr %s723, 10
        %s727 = sadd.s32 %s725, %s726
        %s728 = smul.addr %s727, 4
        %s729 = scalar_lea.vmem %s3, %s728
      $region44: #{depth_corr_forward.3} parent=39 // pred_fallthru
        _
    $region40: #{depth_corr_forward.3} parent=5 // pred_fallthru
      _
  $region6: #{depth_corr_forward.3} parent=0 // loop_footer
    %s13 = sadd.s32 1, %s9
  $region7: #{depth_corr_forward.3} parent=0 // loop_footer_branch
    %8 = sbr.rel target = $region3
  $region8: #{depth_corr_forward.3} parent=0 // loop_exit
    _

// kernel: depth_corr_forward.5
$region0: #{depth_corr_forward.5}
  #allocation0 [shape = 'u32[]', space=smem, size = 0x4, offset = 0x4, fixed_abs, tag = 'smem constant byte address 0x4 - core index']
  #allocation1 [shape = 'u32[144,128]{1,0:T(1,128)}', space=vmem, size = 0x12000, scoped, tag = 'internal scratch']
  %s0 = inlined_call_operand.vmem [shape: bf16[2,5,208,128], index: 0, kind: input, shape index: {}]
  %s1 = inlined_call_operand.vmem [shape: bf16[2,25,128], index: 1, kind: input, shape index: {}]
  %s2 = inlined_call_operand.vmem [shape: bf16[128,128], index: 2, kind: input, shape index: {}]
  %s3 = inlined_call_operand.vmem [shape: f32[1,128], index: 3, kind: input, shape index: {}]
  %s4 = inlined_call_operand.vmem [shape: bf16[128,128], index: 4, kind: input, shape index: {}]
  %s5 = inlined_call_operand.vmem [shape: f32[1,128], index: 5, kind: input, shape index: {}]
  %s6 = inlined_call_operand.vmem [shape: f32[2,144,128], index: 6, kind: output, shape index: {}]
  %s7 = sld [smem:[#allocation0]]
  $region57: #{depth_corr_forward.5} parent=0
    _
  %s9 = ssub.s32 1, %s7
  %s10 = scalar_select 0, %s9, %s7
  loop: start=0, step=1, limit=4
  $region2: #{depth_corr_forward.5} parent=0 // loop_pre_header
    _
  $region3: #{depth_corr_forward.5} parent=0 // loop_header
    %s12 = sphi 0, %s16
    %p13 = scmp.ge.s32.totalorder %s12, 4
    %s19 = sphi 0, %s31
    %s20 = sphi 0, %s27
    %s21 = sphi 0, %s19
    %s22 = sphi 0, %s20
    %s23 = sphi 0, %s21
    %s24 = sphi 0, %s22
    %s34 = sphi 0, %s36
    %s37 = sphi 0, %s34
    %s38 = sphi 0, %s37
    %s54 = sphi 0, %s38
    %s60 = sphi 0, %s62
    %s63 = sphi 0, %s60
    %s64 = sphi 0, %s63
    %s80 = sphi 0, %s64
    %s84 = sphi 0, %s84
    %s86 = sphi 0, %s84
    %s87 = sphi 0, %s86
    %s101 = sphi 0, %s87
    %s105 = sphi 0, %s105
    %s107 = sphi 0, %s105
    %s108 = sphi 0, %s107
    %s122 = sphi 0, %s108
    %s126 = sphi 0, %s126
    %s128 = sphi 0, %s126
    %s129 = sphi 0, %s128
    %s143 = sphi 0, %s129
    %s147 = sphi 0, %s147
    %s149 = sphi 0, %s147
    %s150 = sphi 0, %s149
    %s164 = sphi 0, %s150
    %s172 = sphi 0, %s174
    %s175 = sphi 0, %s172
    %s176 = sphi 0, %s175
    %s192 = sphi 0, %s176
  $region4: #{depth_corr_forward.5} parent=0 // loop_header_branch
    %15 = sbr.rel (%p13) target = $region8
  $region5: #{depth_corr_forward.5} parent=0 // loop_body
    %s17 = ssub.s32 %s12, 1
    %s18 = ssub.s32 %s12, 2
    %s25 = sadd.s32 1, %s20
    %p26 = scmp.ge.s32.totalorder %s25, 1
    %s27 = scalar_select %p26, 0, %s25
    %s28 = sadd.s32 1, %s19
    %s29 = scalar_select %p26, %s28, %s19
    %p30 = scmp.ge.s32.totalorder %s29, 2
    %s31 = scalar_select %p30, 0, %s29
    %s32 = ssub.s32 %s19, %s31
    %p33 = scmp.eq.s32.totalorder %s32, 0
    %s35 = sadd.s32 %s34, 1
    %s36 = scalar_select %p33, %s34, %s35
    %p39 = pneg %p33
    %p40 = scmp.eq.s32.totalorder %s12, 1
    %p41 = por %p39, %p40
    %p42 = scmp.ne.s32.totalorder %s34, %s37
    %p43 = scmp.eq.s32.totalorder %s12, 0
    %p44 = por %p42, %p43
    %p45 = scmp.ne.s32.totalorder %s34, %s37
    %p46 = scmp.eq.s32.totalorder %s17, 1
    %p47 = por %p45, %p46
    %p48 = scmp.ne.s32.totalorder %s37, %s38
    %p49 = scmp.eq.s32.totalorder %s17, 0
    %p50 = por %p48, %p49
    %p51 = scmp.ne.s32.totalorder %s37, %s38
    %p52 = scmp.eq.s32.totalorder %s18, 1
    %p53 = por %p51, %p52
    %p55 = scmp.ne.s32.totalorder %s38, %s54
    %p56 = scmp.eq.s32.totalorder %s18, 0
    %p57 = por %p55, %p56
    %s58 = ssub.s32 %s19, %s31
    %p59 = scmp.eq.s32.totalorder %s58, 0
    %s61 = sadd.s32 %s60, 1
    %s62 = scalar_select %p59, %s60, %s61
    %p65 = pneg %p59
    %p66 = scmp.eq.s32.totalorder %s12, 1
    %p67 = por %p65, %p66
    %p68 = scmp.ne.s32.totalorder %s60, %s63
    %p69 = scmp.eq.s32.totalorder %s12, 0
    %p70 = por %p68, %p69
    %p71 = scmp.ne.s32.totalorder %s60, %s63
    %p72 = scmp.eq.s32.totalorder %s17, 1
    %p73 = por %p71, %p72
    %p74 = scmp.ne.s32.totalorder %s63, %s64
    %p75 = scmp.eq.s32.totalorder %s17, 0
    %p76 = por %p74, %p75
    %p77 = scmp.ne.s32.totalorder %s63, %s64
    %p78 = scmp.eq.s32.totalorder %s18, 1
    %p79 = por %p77, %p78
    %p81 = scmp.ne.s32.totalorder %s64, %s80
    %p82 = scmp.eq.s32.totalorder %s18, 0
    %p83 = por %p81, %p82
    %s85 = sadd.s32 %s84, 1
    %p88 = scmp.eq.s32.totalorder %s12, 1
    %p89 = scmp.ne.s32.totalorder %s84, %s86
    %p90 = scmp.eq.s32.totalorder %s12, 0
    %p91 = por %p89, %p90
    %p92 = scmp.ne.s32.totalorder %s84, %s86
    %p93 = scmp.eq.s32.totalorder %s17, 1
    %p94 = por %p92, %p93
    %p95 = scmp.ne.s32.totalorder %s86, %s87
    %p96 = scmp.eq.s32.totalorder %s17, 0
    %p97 = por %p95, %p96
    %p98 = scmp.ne.s32.totalorder %s86, %s87
    %p99 = scmp.eq.s32.totalorder %s18, 1
    %p100 = por %p98, %p99
    %p102 = scmp.ne.s32.totalorder %s87, %s101
    %p103 = scmp.eq.s32.totalorder %s18, 0
    %p104 = por %p102, %p103
    %s106 = sadd.s32 %s105, 1
    %p109 = scmp.eq.s32.totalorder %s12, 1
    %p110 = scmp.ne.s32.totalorder %s105, %s107
    %p111 = scmp.eq.s32.totalorder %s12, 0
    %p112 = por %p110, %p111
    %p113 = scmp.ne.s32.totalorder %s105, %s107
    %p114 = scmp.eq.s32.totalorder %s17, 1
    %p115 = por %p113, %p114
    %p116 = scmp.ne.s32.totalorder %s107, %s108
    %p117 = scmp.eq.s32.totalorder %s17, 0
    %p118 = por %p116, %p117
    %p119 = scmp.ne.s32.totalorder %s107, %s108
    %p120 = scmp.eq.s32.totalorder %s18, 1
    %p121 = por %p119, %p120
    %p123 = scmp.ne.s32.totalorder %s108, %s122
    %p124 = scmp.eq.s32.totalorder %s18, 0
    %p125 = por %p123, %p124
    %s127 = sadd.s32 %s126, 1
    %p130 = scmp.eq.s32.totalorder %s12, 1
    %p131 = scmp.ne.s32.totalorder %s126, %s128
    %p132 = scmp.eq.s32.totalorder %s12, 0
    %p133 = por %p131, %p132
    %p134 = scmp.ne.s32.totalorder %s126, %s128
    %p135 = scmp.eq.s32.totalorder %s17, 1
    %p136 = por %p134, %p135
    %p137 = scmp.ne.s32.totalorder %s128, %s129
    %p138 = scmp.eq.s32.totalorder %s17, 0
    %p139 = por %p137, %p138
    %p140 = scmp.ne.s32.totalorder %s128, %s129
    %p141 = scmp.eq.s32.totalorder %s18, 1
    %p142 = por %p140, %p141
    %p144 = scmp.ne.s32.totalorder %s129, %s143
    %p145 = scmp.eq.s32.totalorder %s18, 0
    %p146 = por %p144, %p145
    %s148 = sadd.s32 %s147, 1
    %p151 = scmp.eq.s32.totalorder %s12, 1
    %p152 = scmp.ne.s32.totalorder %s147, %s149
    %p153 = scmp.eq.s32.totalorder %s12, 0
    %p154 = por %p152, %p153
    %p155 = scmp.ne.s32.totalorder %s147, %s149
    %p156 = scmp.eq.s32.totalorder %s17, 1
    %p157 = por %p155, %p156
    %p158 = scmp.ne.s32.totalorder %s149, %s150
    %p159 = scmp.eq.s32.totalorder %s17, 0
    %p160 = por %p158, %p159
    %p161 = scmp.ne.s32.totalorder %s149, %s150
    %p162 = scmp.eq.s32.totalorder %s18, 1
    %p163 = por %p161, %p162
    %p165 = scmp.ne.s32.totalorder %s150, %s164
    %p166 = scmp.eq.s32.totalorder %s18, 0
    %p167 = por %p165, %p166
    %s168 = ssub.s32 %s19, %s31
    %s169 = ssub.s32 %s20, %s27
    %s170 = sor.u32 %s168, %s169
    %p171 = scmp.eq.s32.totalorder %s170, 0
    %s173 = sadd.s32 %s172, 1
    %s174 = scalar_select %p171, %s172, %s173
    %p177 = pneg %p171
    %p178 = scmp.eq.s32.totalorder %s12, 1
    %p179 = por %p177, %p178
    %p180 = scmp.ne.s32.totalorder %s172, %s175
    %p181 = scmp.eq.s32.totalorder %s12, 0
    %p182 = por %p180, %p181
    %p183 = scmp.ne.s32.totalorder %s172, %s175
    %p184 = scmp.eq.s32.totalorder %s17, 1
    %p185 = por %p183, %p184
    %p186 = scmp.ne.s32.totalorder %s175, %s176
    %p187 = scmp.eq.s32.totalorder %s17, 0
    %p188 = por %p186, %p187
    %p189 = scmp.ne.s32.totalorder %s175, %s176
    %p190 = scmp.eq.s32.totalorder %s18, 1
    %p191 = por %p189, %p190
    %p193 = scmp.ne.s32.totalorder %s176, %s192
    %p194 = scmp.eq.s32.totalorder %s18, 0
    %p195 = por %p193, %p194
    %p196 = scmp.le.s32.totalorder 1, %s12
    %p197 = scmp.lt.s32.totalorder %s12, 3
    %p198 = pnand %p196, %p197
    %p199 = pneg %p198
    // Predicated region
    $region9: #{depth_corr_forward.5} parent=5 // pred_check
      _
    $region10: #{depth_corr_forward.5} parent=5 // pred_check_branch
      %201 = sbr.rel (%p198) target = $region12
    $region11: #{depth_corr_forward.5} parent=5 // pred_region
      %s202 = ssub.s32 %s12, 1
      // Predicated region
      $region13: #{depth_corr_forward.5} parent=11 // pred_check
        %p203 = pneg %p97
      $region14: #{depth_corr_forward.5} parent=11 // pred_check_branch
        %205 = sbr.rel (%p203) target = $region16
      $region15: #{depth_corr_forward.5} parent=11 // pred_region
        _
      $region16: #{depth_corr_forward.5} parent=11 // pred_fallthru
        _
      // Predicated region
      $region17: #{depth_corr_forward.5} parent=11 // pred_check
        %p206 = pneg %p118
      $region18: #{depth_corr_forward.5} parent=11 // pred_check_branch
        %208 = sbr.rel (%p206) target = $region20
      $region19: #{depth_corr_forward.5} parent=11 // pred_region
        _
      $region20: #{depth_corr_forward.5} parent=11 // pred_fallthru
        _
      // Predicated region
      $region21: #{depth_corr_forward.5} parent=11 // pred_check
        %p209 = pneg %p139
      $region22: #{depth_corr_forward.5} parent=11 // pred_check_branch
        %211 = sbr.rel (%p209) target = $region24
      $region23: #{depth_corr_forward.5} parent=11 // pred_region
        _
      $region24: #{depth_corr_forward.5} parent=11 // pred_fallthru
        _
      // Predicated region
      $region25: #{depth_corr_forward.5} parent=11 // pred_check
        %p212 = pneg %p160
      $region26: #{depth_corr_forward.5} parent=11 // pred_check_branch
        %214 = sbr.rel (%p212) target = $region28
      $region27: #{depth_corr_forward.5} parent=11 // pred_region
        _
      $region28: #{depth_corr_forward.5} parent=11 // pred_fallthru
        _
    $region12: #{depth_corr_forward.5} parent=5 // pred_fallthru
      _
    %p215 = scmp.lt.s32.totalorder %s12, 2
    // Predicated region
    $region29: #{depth_corr_forward.5} parent=5 // pred_check
      %p216 = pneg %p215
    $region30: #{depth_corr_forward.5} parent=5 // pred_check_branch
      %218 = sbr.rel (%p216) target = $region32
    $region31: #{depth_corr_forward.5} parent=5 // pred_region
      // Predicated region
      $region33: #{depth_corr_forward.5} parent=31 // pred_check
        %p219 = pneg %p44
      $region34: #{depth_corr_forward.5} parent=31 // pred_check_branch
        %221 = sbr.rel (%p219) target = $region36
      $region35: #{depth_corr_forward.5} parent=31 // pred_region
        %p222 = scmp.lt.s32.totalorder %s19, 1
        %s223 = scalar_select %p222, %s19, 1
        %s224 = smul.addr %s223, 130
        %s225 = smul.addr %s224, 4
        %s226 = scalar_lea.vmem %s0, %s225
      $region36: #{depth_corr_forward.5} parent=31 // pred_fallthru
        _
      // Predicated region
      $region37: #{depth_corr_forward.5} parent=31 // pred_check
        %p227 = pneg %p70
      $region38: #{depth_corr_forward.5} parent=31 // pred_check_branch
        %229 = sbr.rel (%p227) target = $region40
      $region39: #{depth_corr_forward.5} parent=31 // pred_region
        %p230 = scmp.lt.s32.totalorder %s19, 1
        %s231 = scalar_select %p230, %s19, 1
        %s232 = smul.addr %s231, 4
        %s233 = smul.addr %s232, 4
        %s234 = scalar_lea.vmem %s1, %s233
      $region40: #{depth_corr_forward.5} parent=31 // pred_fallthru
        _
    $region32: #{depth_corr_forward.5} parent=5 // pred_fallthru
      _
    %p235 = scmp.le.s32.totalorder 1, %s12
    %p236 = scmp.lt.s32.totalorder %s12, 3
    %p237 = pnand %p235, %p236
    %p238 = pneg %p237
    // Predicated region
    $region41: #{depth_corr_forward.5} parent=5 // pred_check
      _
    $region42: #{depth_corr_forward.5} parent=5 // pred_check_branch
      %240 = sbr.rel (%p237) target = $region44
    $region43: #{depth_corr_forward.5} parent=5 // pred_region
      %s241 = ssub.s32 %s12, 1
      %p242 = scmp.lt.s32.totalorder %s21, 1
      %s243 = scalar_select %p242, %s21, 1
      %s244 = smul.addr %s243, 130
      %s245 = smul.addr %s244, 4
      %s246 = scalar_lea.vmem %s0, %s245
      %p247 = pneg %p50
      %p248 = pneg %p47
      %p249 = scmp.lt.s32.totalorder %s21, 1
      %s250 = scalar_select %p249, %s21, 1
      %s251 = smul.addr %s250, 4
      %s252 = smul.addr %s251, 4
      %s253 = scalar_lea.vmem %s1, %s252
      %p254 = pneg %p76
      %p255 = pneg %p73
      %p256 = pneg %p97
      %p257 = pneg %p94
      %p258 = pneg %p118
      %p259 = pneg %p115
      %p260 = pneg %p139
      %p261 = pneg %p136
      %p262 = pneg %p160
      %p263 = pneg %p157
      %p264 = pneg %p188
      %p265 = pneg %p185
      %s266 = smul.u32 18, %s22
      %p267 = scmp.lt.s32.totalorder %s21, 1
      %s268 = scalar_select %p267, %s21, 1
      %p269 = scmp.lt.s32.totalorder %s266, 17
      %s270 = scalar_select %p269, %s266, 17
      %s271 = smul.addr %s268, 18
      %s272 = sadd.s32 %s270, %s271
      %s273 = smul.addr %s272, 8
      %s274 = scalar_lea.vmem %s6, %s273
      %p275 = scmp.lt.s32.totalorder %s21, 1
      %s276 = scalar_select %p275, %s21, 1
      %s277 = smul.addr %s276, 130
      %s278 = smul.addr %s277, 4
      %s279 = scalar_lea.vmem %s0, %s278
      %p280 = scmp.lt.s32.totalorder %s21, 1
      %s281 = scalar_select %p280, %s21, 1
      %s282 = smul.addr %s281, 4
      %s283 = smul.addr %s282, 4
      %s284 = scalar_lea.vmem %s1, %s283
      %s285 = smul.u32 18, %s22
      %p286 = scmp.lt.s32.totalorder %s21, 1
      %s287 = scalar_select %p286, %s21, 1
      %p288 = scmp.lt.s32.totalorder %s285, 17
      %s289 = scalar_select %p288, %s285, 17
      %s290 = smul.addr %s287, 18
      %s291 = sadd.s32 %s289, %s290
      %s292 = smul.addr %s291, 8
      %s293 = scalar_lea.vmem %s6, %s292
      %s294 = smul.u32 18, %s22
      %s296 = smul.u32 %s22, 144
      %s297 = sshra.s32 %s296, 3
      %s298 = sand.u32 %s296, 7
      %s299 = smul.addr %s297, 4
      %s300 = scalar_lea.vmem %s279, %s299
      %v301 = vld [vmem:[%s300] sm:$0xf]
      %v302 = vld [vmem:[%s300 + $0x4] sm:$0xf]
      %v303 = vld [vmem:[%s300 + $0x8] sm:$0xf]
      %v304 = vld [vmem:[%s300 + $0xc] sm:$0xf]
      %v305 = vld [vmem:[%s300 + $0x10] sm:$0xf]
      %v306 = vld [vmem:[%s300 + $0x14] sm:$0xf]
      %v307 = vld [vmem:[%s300 + $0x18] sm:$0xf]
      %v308 = vld [vmem:[%s300 + $0x1c] sm:$0xf]
      %v309 = vld [vmem:[%s300 + $0x20] sm:$0xf]
      %v310 = vld [vmem:[%s300 + $0x24] sm:$0xf]
      %v311 = vld [vmem:[%s300 + $0x28] sm:$0xf]
      %v312 = vld [vmem:[%s300 + $0x2c] sm:$0xf]
      %v313 = vld [vmem:[%s300 + $0x30] sm:$0xf]
      %v314 = vld [vmem:[%s300 + $0x34] sm:$0xf]
      %v315 = vld [vmem:[%s300 + $0x38] sm:$0xf]
      %v316 = vld [vmem:[%s300 + $0x3c] sm:$0xf]
      %v317 = vld [vmem:[%s300 + $0x40] sm:$0xf]
      %v318 = vld [vmem:[%s300 + $0x44] sm:$0xf]
      %v319 = vunpack.c.l.bf16 %v301
      %v320 = vunpack.c.l.bf16 %v302
      %v321 = vunpack.c.l.bf16 %v303
      %v322 = vunpack.c.l.bf16 %v304
      %v323 = vunpack.c.l.bf16 %v305
      %v324 = vunpack.c.l.bf16 %v306
      %v325 = vunpack.c.l.bf16 %v307
      %v326 = vunpack.c.l.bf16 %v308
      %v327 = vunpack.c.l.bf16 %v309
      %v328 = vunpack.c.l.bf16 %v310
      %v329 = vunpack.c.l.bf16 %v311
      %v330 = vunpack.c.l.bf16 %v312
      %v331 = vunpack.c.l.bf16 %v313
      %v332 = vunpack.c.l.bf16 %v314
      %v333 = vunpack.c.l.bf16 %v315
      %v334 = vunpack.c.l.bf16 %v316
      %v335 = vunpack.c.l.bf16 %v317
      %v336 = vunpack.c.l.bf16 %v318
      %v337 = vld [vmem:[%s284] sm:$0x1]
      %v338 = vunpack.c.l.bf16 %v337
      %v339 = vlaneseq
      %v340 = vshrl.u32 %v339, 7
      %v341 = vsub.s32 0, %v340
      %v342 = vrot.slane %v338, %v341
      %v343 = vmul.f32 %v319, %v342
      %v344 = vmul.f32 %v320, %v342
      %v345 = vmul.f32 %v321, %v342
      %v346 = vmul.f32 %v322, %v342
      %v347 = vmul.f32 %v323, %v342
      %v348 = vmul.f32 %v324, %v342
      %v349 = vmul.f32 %v325, %v342
      %v350 = vmul.f32 %v326, %v342
      %v351 = vmul.f32 %v327, %v342
      %v352 = vmul.f32 %v328, %v342
      %v353 = vmul.f32 %v329, %v342
      %v354 = vmul.f32 %v330, %v342
      %v355 = vmul.f32 %v331, %v342
      %v356 = vmul.f32 %v332, %v342
      %v357 = vmul.f32 %v333, %v342
      %v358 = vmul.f32 %v334, %v342
      %v359 = vmul.f32 %v335, %v342
      %v360 = vmul.f32 %v336, %v342
      %v361 = vadd.f32 %v343, 0.0
      %v362 = vadd.f32 %v344, 0.0
      %v363 = vadd.f32 %v345, 0.0
      %v364 = vadd.f32 %v346, 0.0
      %v365 = vadd.f32 %v347, 0.0
      %v366 = vadd.f32 %v348, 0.0
      %v367 = vadd.f32 %v349, 0.0
      %v368 = vadd.f32 %v350, 0.0
      %v369 = vadd.f32 %v351, 0.0
      %v370 = vadd.f32 %v352, 0.0
      %v371 = vadd.f32 %v353, 0.0
      %v372 = vadd.f32 %v354, 0.0
      %v373 = vadd.f32 %v355, 0.0
      %v374 = vadd.f32 %v356, 0.0
      %v375 = vadd.f32 %v357, 0.0
      %v376 = vadd.f32 %v358, 0.0
      %v377 = vadd.f32 %v359, 0.0
      %v378 = vadd.f32 %v360, 0.0
      %s379 = sadd.s32 %s297, 26
      %s380 = smul.addr %s379, 4
      %s381 = scalar_lea.vmem %s279, %s380
      %v382 = vld [vmem:[%s381] sm:$0xf]
      %v383 = vld [vmem:[%s381 + $0x4] sm:$0xf]
      %v384 = vld [vmem:[%s381 + $0x8] sm:$0xf]
      %v385 = vld [vmem:[%s381 + $0xc] sm:$0xf]
      %v386 = vld [vmem:[%s381 + $0x10] sm:$0xf]
      %v387 = vld [vmem:[%s381 + $0x14] sm:$0xf]
      %v388 = vld [vmem:[%s381 + $0x18] sm:$0xf]
      %v389 = vld [vmem:[%s381 + $0x1c] sm:$0xf]
      %v390 = vld [vmem:[%s381 + $0x20] sm:$0xf]
      %v391 = vld [vmem:[%s381 + $0x24] sm:$0xf]
      %v392 = vld [vmem:[%s381 + $0x28] sm:$0xf]
      %v393 = vld [vmem:[%s381 + $0x2c] sm:$0xf]
      %v394 = vld [vmem:[%s381 + $0x30] sm:$0xf]
      %v395 = vld [vmem:[%s381 + $0x34] sm:$0xf]
      %v396 = vld [vmem:[%s381 + $0x38] sm:$0xf]
      %v397 = vld [vmem:[%s381 + $0x3c] sm:$0xf]
      %v398 = vld [vmem:[%s381 + $0x40] sm:$0xf]
      %v399 = vld [vmem:[%s381 + $0x44] sm:$0xf]
      %v400 = vunpack.c.l.bf16 %v382
      %v401 = vunpack.c.l.bf16 %v383
      %v402 = vunpack.c.l.bf16 %v384
      %v403 = vunpack.c.l.bf16 %v385
      %v404 = vunpack.c.l.bf16 %v386
      %v405 = vunpack.c.l.bf16 %v387
      %v406 = vunpack.c.l.bf16 %v388
      %v407 = vunpack.c.l.bf16 %v389
      %v408 = vunpack.c.l.bf16 %v390
      %v409 = vunpack.c.l.bf16 %v391
      %v410 = vunpack.c.l.bf16 %v392
      %v411 = vunpack.c.l.bf16 %v393
      %v412 = vunpack.c.l.bf16 %v394
      %v413 = vunpack.c.l.bf16 %v395
      %v414 = vunpack.c.l.bf16 %v396
      %v415 = vunpack.c.l.bf16 %v397
      %v416 = vunpack.c.l.bf16 %v398
      %v417 = vunpack.c.l.bf16 %v399
      %v418 = vlaneseq
      %v419 = vshrl.u32 %v418, 7
      %v420 = vsub.s32 1, %v419
      %v421 = vrot.slane %v338, %v420
      %v422 = vmul.f32 %v400, %v421
      %v423 = vmul.f32 %v401, %v421
      %v424 = vmul.f32 %v402, %v421
      %v425 = vmul.f32 %v403, %v421
      %v426 = vmul.f32 %v404, %v421
      %v427 = vmul.f32 %v405, %v421
      %v428 = vmul.f32 %v406, %v421
      %v429 = vmul.f32 %v407, %v421
      %v430 = vmul.f32 %v408, %v421
      %v431 = vmul.f32 %v409, %v421
      %v432 = vmul.f32 %v410, %v421
      %v433 = vmul.f32 %v411, %v421
      %v434 = vmul.f32 %v412, %v421
      %v435 = vmul.f32 %v413, %v421
      %v436 = vmul.f32 %v414, %v421
      %v437 = vmul.f32 %v415, %v421
      %v438 = vmul.f32 %v416, %v421
      %v439 = vmul.f32 %v417, %v421
      %v440 = vadd.f32 %v361, %v422
      %v441 = vadd.f32 %v362, %v423
      %v442 = vadd.f32 %v363, %v424
      %v443 = vadd.f32 %v364, %v425
      %v444 = vadd.f32 %v365, %v426
      %v445 = vadd.f32 %v366, %v427
      %v446 = vadd.f32 %v367, %v428
      %v447 = vadd.f32 %v368, %v429
      %v448 = vadd.f32 %v369, %v430
      %v449 = vadd.f32 %v370, %v431
      %v450 = vadd.f32 %v371, %v432
      %v451 = vadd.f32 %v372, %v433
      %v452 = vadd.f32 %v373, %v434
      %v453 = vadd.f32 %v374, %v435
      %v454 = vadd.f32 %v375, %v436
      %v455 = vadd.f32 %v376, %v437
      %v456 = vadd.f32 %v377, %v438
      %v457 = vadd.f32 %v378, %v439
      %s458 = sadd.s32 %s297, 52
      %s459 = smul.addr %s458, 4
      %s460 = scalar_lea.vmem %s279, %s459
      %v461 = vld [vmem:[%s460] sm:$0xf]
      %v462 = vld [vmem:[%s460 + $0x4] sm:$0xf]
      %v463 = vld [vmem:[%s460 + $0x8] sm:$0xf]
      %v464 = vld [vmem:[%s460 + $0xc] sm:$0xf]
      %v465 = vld [vmem:[%s460 + $0x10] sm:$0xf]
      %v466 = vld [vmem:[%s460 + $0x14] sm:$0xf]
      %v467 = vld [vmem:[%s460 + $0x18] sm:$0xf]
      %v468 = vld [vmem:[%s460 + $0x1c] sm:$0xf]
      %v469 = vld [vmem:[%s460 + $0x20] sm:$0xf]
      %v470 = vld [vmem:[%s460 + $0x24] sm:$0xf]
      %v471 = vld [vmem:[%s460 + $0x28] sm:$0xf]
      %v472 = vld [vmem:[%s460 + $0x2c] sm:$0xf]
      %v473 = vld [vmem:[%s460 + $0x30] sm:$0xf]
      %v474 = vld [vmem:[%s460 + $0x34] sm:$0xf]
      %v475 = vld [vmem:[%s460 + $0x38] sm:$0xf]
      %v476 = vld [vmem:[%s460 + $0x3c] sm:$0xf]
      %v477 = vld [vmem:[%s460 + $0x40] sm:$0xf]
      %v478 = vld [vmem:[%s460 + $0x44] sm:$0xf]
      %v479 = vunpack.c.l.bf16 %v461
      %v480 = vunpack.c.l.bf16 %v462
      %v481 = vunpack.c.l.bf16 %v463
      %v482 = vunpack.c.l.bf16 %v464
      %v483 = vunpack.c.l.bf16 %v465
      %v484 = vunpack.c.l.bf16 %v466
      %v485 = vunpack.c.l.bf16 %v467
      %v486 = vunpack.c.l.bf16 %v468
      %v487 = vunpack.c.l.bf16 %v469
      %v488 = vunpack.c.l.bf16 %v470
      %v489 = vunpack.c.l.bf16 %v471
      %v490 = vunpack.c.l.bf16 %v472
      %v491 = vunpack.c.l.bf16 %v473
      %v492 = vunpack.c.l.bf16 %v474
      %v493 = vunpack.c.l.bf16 %v475
      %v494 = vunpack.c.l.bf16 %v476
      %v495 = vunpack.c.l.bf16 %v477
      %v496 = vunpack.c.l.bf16 %v478
      %v497 = vld [vmem:[%s284] sm:$0x2]
      %v498 = vunpack.c.l.bf16 %v497
      %v499 = vlaneseq
      %v500 = vshrl.u32 %v499, 7
      %v501 = vsub.s32 2, %v500
      %v502 = vrot.slane %v498, %v501
      %v503 = vmul.f32 %v479, %v502
      %v504 = vmul.f32 %v480, %v502
      %v505 = vmul.f32 %v481, %v502
      %v506 = vmul.f32 %v482, %v502
      %v507 = vmul.f32 %v483, %v502
      %v508 = vmul.f32 %v484, %v502
      %v509 = vmul.f32 %v485, %v502
      %v510 = vmul.f32 %v486, %v502
      %v511 = vmul.f32 %v487, %v502
      %v512 = vmul.f32 %v488, %v502
      %v513 = vmul.f32 %v489, %v502
      %v514 = vmul.f32 %v490, %v502
      %v515 = vmul.f32 %v491, %v502
      %v516 = vmul.f32 %v492, %v502
      %v517 = vmul.f32 %v493, %v502
      %v518 = vmul.f32 %v494, %v502
      %v519 = vmul.f32 %v495, %v502
      %v520 = vmul.f32 %v496, %v502
      %v521 = vadd.f32 %v440, %v503
      %v522 = vadd.f32 %v441, %v504
      %v523 = vadd.f32 %v442, %v505
      %v524 = vadd.f32 %v443, %v506
      %v525 = vadd.f32 %v444, %v507
      %v526 = vadd.f32 %v445, %v508
      %v527 = vadd.f32 %v446, %v509
      %v528 = vadd.f32 %v447, %v510
      %v529 = vadd.f32 %v448, %v511
      %v530 = vadd.f32 %v449, %v512
      %v531 = vadd.f32 %v450, %v513
      %v532 = vadd.f32 %v451, %v514
      %v533 = vadd.f32 %v452, %v515
      %v534 = vadd.f32 %v453, %v516
      %v535 = vadd.f32 %v454, %v517
      %v536 = vadd.f32 %v455, %v518
      %v537 = vadd.f32 %v456, %v519
      %v538 = vadd.f32 %v457, %v520
      %s539 = sadd.s32 %s297, 78
      %s540 = smul.addr %s539, 4
      %s541 = scalar_lea.vmem %s279, %s540
      %v542 = vld [vmem:[%s541] sm:$0xf]
      %v543 = vld [vmem:[%s541 + $0x4] sm:$0xf]
      %v544 = vld [vmem:[%s541 + $0x8] sm:$0xf]
      %v545 = vld [vmem:[%s541 + $0xc] sm:$0xf]
      %v546 = vld [vmem:[%s541 + $0x10] sm:$0xf]
      %v547 = vld [vmem:[%s541 + $0x14] sm:$0xf]
      %v548 = vld [vmem:[%s541 + $0x18] sm:$0xf]
      %v549 = vld [vmem:[%s541 + $0x1c] sm:$0xf]
      %v550 = vld [vmem:[%s541 + $0x20] sm:$0xf]
      %v551 = vld [vmem:[%s541 + $0x24] sm:$0xf]
      %v552 = vld [vmem:[%s541 + $0x28] sm:$0xf]
      %v553 = vld [vmem:[%s541 + $0x2c] sm:$0xf]
      %v554 = vld [vmem:[%s541 + $0x30] sm:$0xf]
      %v555 = vld [vmem:[%s541 + $0x34] sm:$0xf]
      %v556 = vld [vmem:[%s541 + $0x38] sm:$0xf]
      %v557 = vld [vmem:[%s541 + $0x3c] sm:$0xf]
      %v558 = vld [vmem:[%s541 + $0x40] sm:$0xf]
      %v559 = vld [vmem:[%s541 + $0x44] sm:$0xf]
      %v560 = vunpack.c.l.bf16 %v542
      %v561 = vunpack.c.l.bf16 %v543
      %v562 = vunpack.c.l.bf16 %v544
      %v563 = vunpack.c.l.bf16 %v545
      %v564 = vunpack.c.l.bf16 %v546
      %v565 = vunpack.c.l.bf16 %v547
      %v566 = vunpack.c.l.bf16 %v548
      %v567 = vunpack.c.l.bf16 %v549
      %v568 = vunpack.c.l.bf16 %v550
      %v569 = vunpack.c.l.bf16 %v551
      %v570 = vunpack.c.l.bf16 %v552
      %v571 = vunpack.c.l.bf16 %v553
      %v572 = vunpack.c.l.bf16 %v554
      %v573 = vunpack.c.l.bf16 %v555
      %v574 = vunpack.c.l.bf16 %v556
      %v575 = vunpack.c.l.bf16 %v557
      %v576 = vunpack.c.l.bf16 %v558
      %v577 = vunpack.c.l.bf16 %v559
      %v578 = vlaneseq
      %v579 = vshrl.u32 %v578, 7
      %v580 = vsub.s32 3, %v579
      %v581 = vrot.slane %v498, %v580
      %v582 = vmul.f32 %v560, %v581
      %v583 = vmul.f32 %v561, %v581
      %v584 = vmul.f32 %v562, %v581
      %v585 = vmul.f32 %v563, %v581
      %v586 = vmul.f32 %v564, %v581
      %v587 = vmul.f32 %v565, %v581
      %v588 = vmul.f32 %v566, %v581
      %v589 = vmul.f32 %v567, %v581
      %v590 = vmul.f32 %v568, %v581
      %v591 = vmul.f32 %v569, %v581
      %v592 = vmul.f32 %v570, %v581
      %v593 = vmul.f32 %v571, %v581
      %v594 = vmul.f32 %v572, %v581
      %v595 = vmul.f32 %v573, %v581
      %v596 = vmul.f32 %v574, %v581
      %v597 = vmul.f32 %v575, %v581
      %v598 = vmul.f32 %v576, %v581
      %v599 = vmul.f32 %v577, %v581
      %v600 = vadd.f32 %v521, %v582
      %v601 = vadd.f32 %v522, %v583
      %v602 = vadd.f32 %v523, %v584
      %v603 = vadd.f32 %v524, %v585
      %v604 = vadd.f32 %v525, %v586
      %v605 = vadd.f32 %v526, %v587
      %v606 = vadd.f32 %v527, %v588
      %v607 = vadd.f32 %v528, %v589
      %v608 = vadd.f32 %v529, %v590
      %v609 = vadd.f32 %v530, %v591
      %v610 = vadd.f32 %v531, %v592
      %v611 = vadd.f32 %v532, %v593
      %v612 = vadd.f32 %v533, %v594
      %v613 = vadd.f32 %v534, %v595
      %v614 = vadd.f32 %v535, %v596
      %v615 = vadd.f32 %v536, %v597
      %v616 = vadd.f32 %v537, %v598
      %v617 = vadd.f32 %v538, %v599
      %s618 = sadd.s32 %s297, 104
      %s619 = smul.addr %s618, 4
      %s620 = scalar_lea.vmem %s279, %s619
      %v621 = vld [vmem:[%s620] sm:$0xf]
      %v622 = vld [vmem:[%s620 + $0x4] sm:$0xf]
      %v623 = vld [vmem:[%s620 + $0x8] sm:$0xf]
      %v624 = vld [vmem:[%s620 + $0xc] sm:$0xf]
      %v625 = vld [vmem:[%s620 + $0x10] sm:$0xf]
      %v626 = vld [vmem:[%s620 + $0x14] sm:$0xf]
      %v627 = vld [vmem:[%s620 + $0x18] sm:$0xf]
      %v628 = vld [vmem:[%s620 + $0x1c] sm:$0xf]
      %v629 = vld [vmem:[%s620 + $0x20] sm:$0xf]
      %v630 = vld [vmem:[%s620 + $0x24] sm:$0xf]
      %v631 = vld [vmem:[%s620 + $0x28] sm:$0xf]
      %v632 = vld [vmem:[%s620 + $0x2c] sm:$0xf]
      %v633 = vld [vmem:[%s620 + $0x30] sm:$0xf]
      %v634 = vld [vmem:[%s620 + $0x34] sm:$0xf]
      %v635 = vld [vmem:[%s620 + $0x38] sm:$0xf]
      %v636 = vld [vmem:[%s620 + $0x3c] sm:$0xf]
      %v637 = vld [vmem:[%s620 + $0x40] sm:$0xf]
      %v638 = vld [vmem:[%s620 + $0x44] sm:$0xf]
      %v639 = vunpack.c.l.bf16 %v621
      %v640 = vunpack.c.l.bf16 %v622
      %v641 = vunpack.c.l.bf16 %v623
      %v642 = vunpack.c.l.bf16 %v624
      %v643 = vunpack.c.l.bf16 %v625
      %v644 = vunpack.c.l.bf16 %v626
      %v645 = vunpack.c.l.bf16 %v627
      %v646 = vunpack.c.l.bf16 %v628
      %v647 = vunpack.c.l.bf16 %v629
      %v648 = vunpack.c.l.bf16 %v630
      %v649 = vunpack.c.l.bf16 %v631
      %v650 = vunpack.c.l.bf16 %v632
      %v651 = vunpack.c.l.bf16 %v633
      %v652 = vunpack.c.l.bf16 %v634
      %v653 = vunpack.c.l.bf16 %v635
      %v654 = vunpack.c.l.bf16 %v636
      %v655 = vunpack.c.l.bf16 %v637
      %v656 = vunpack.c.l.bf16 %v638
      %v657 = vld [vmem:[%s284] sm:$0x4]
      %v658 = vunpack.c.l.bf16 %v657
      %v659 = vlaneseq
      %v660 = vshrl.u32 %v659, 7
      %v661 = vsub.s32 4, %v660
      %v662 = vrot.slane %v658, %v661
      %v663 = vmul.f32 %v639, %v662
      %v664 = vmul.f32 %v640, %v662
      %v665 = vmul.f32 %v641, %v662
      %v666 = vmul.f32 %v642, %v662
      %v667 = vmul.f32 %v643, %v662
      %v668 = vmul.f32 %v644, %v662
      %v669 = vmul.f32 %v645, %v662
      %v670 = vmul.f32 %v646, %v662
      %v671 = vmul.f32 %v647, %v662
      %v672 = vmul.f32 %v648, %v662
      %v673 = vmul.f32 %v649, %v662
      %v674 = vmul.f32 %v650, %v662
      %v675 = vmul.f32 %v651, %v662
      %v676 = vmul.f32 %v652, %v662
      %v677 = vmul.f32 %v653, %v662
      %v678 = vmul.f32 %v654, %v662
      %v679 = vmul.f32 %v655, %v662
      %v680 = vmul.f32 %v656, %v662
      %v681 = vadd.f32 %v600, %v663
      %v682 = vadd.f32 %v601, %v664
      %v683 = vadd.f32 %v602, %v665
      %v684 = vadd.f32 %v603, %v666
      %v685 = vadd.f32 %v604, %v667
      %v686 = vadd.f32 %v605, %v668
      %v687 = vadd.f32 %v606, %v669
      %v688 = vadd.f32 %v607, %v670
      %v689 = vadd.f32 %v608, %v671
      %v690 = vadd.f32 %v609, %v672
      %v691 = vadd.f32 %v610, %v673
      %v692 = vadd.f32 %v611, %v674
      %v693 = vadd.f32 %v612, %v675
      %v694 = vadd.f32 %v613, %v676
      %v695 = vadd.f32 %v614, %v677
      %v696 = vadd.f32 %v615, %v678
      %v697 = vadd.f32 %v616, %v679
      %v698 = vadd.f32 %v617, %v680
      %s699 = sadd.s32 %s296, 16
      %s700 = sshra.s32 %s699, 3
      %s701 = sand.u32 %s699, 7
      %s702 = smul.addr %s700, 4
      %s703 = scalar_lea.vmem %s279, %s702
      %v704 = vld [vmem:[%s703] sm:$0xf]
      %v705 = vld [vmem:[%s703 + $0x4] sm:$0xf]
      %v706 = vld [vmem:[%s703 + $0x8] sm:$0xf]
      %v707 = vld [vmem:[%s703 + $0xc] sm:$0xf]
      %v708 = vld [vmem:[%s703 + $0x10] sm:$0xf]
      %v709 = vld [vmem:[%s703 + $0x14] sm:$0xf]
      %v710 = vld [vmem:[%s703 + $0x18] sm:$0xf]
      %v711 = vld [vmem:[%s703 + $0x1c] sm:$0xf]
      %v712 = vld [vmem:[%s703 + $0x20] sm:$0xf]
      %v713 = vld [vmem:[%s703 + $0x24] sm:$0xf]
      %v714 = vld [vmem:[%s703 + $0x28] sm:$0xf]
      %v715 = vld [vmem:[%s703 + $0x2c] sm:$0xf]
      %v716 = vld [vmem:[%s703 + $0x30] sm:$0xf]
      %v717 = vld [vmem:[%s703 + $0x34] sm:$0xf]
      %v718 = vld [vmem:[%s703 + $0x38] sm:$0xf]
      %v719 = vld [vmem:[%s703 + $0x3c] sm:$0xf]
      %v720 = vld [vmem:[%s703 + $0x40] sm:$0xf]
      %v721 = vld [vmem:[%s703 + $0x44] sm:$0xf]
      %v722 = vunpack.c.l.bf16 %v704
      %v723 = vunpack.c.l.bf16 %v705
      %v724 = vunpack.c.l.bf16 %v706
      %v725 = vunpack.c.l.bf16 %v707
      %v726 = vunpack.c.l.bf16 %v708
      %v727 = vunpack.c.l.bf16 %v709
      %v728 = vunpack.c.l.bf16 %v710
      %v729 = vunpack.c.l.bf16 %v711
      %v730 = vunpack.c.l.bf16 %v712
      %v731 = vunpack.c.l.bf16 %v713
      %v732 = vunpack.c.l.bf16 %v714
      %v733 = vunpack.c.l.bf16 %v715
      %v734 = vunpack.c.l.bf16 %v716
      %v735 = vunpack.c.l.bf16 %v717
      %v736 = vunpack.c.l.bf16 %v718
      %v737 = vunpack.c.l.bf16 %v719
      %v738 = vunpack.c.l.bf16 %v720
      %v739 = vunpack.c.l.bf16 %v721
      %v740 = vlaneseq
      %v741 = vshrl.u32 %v740, 7
      %v742 = vsub.s32 5, %v741
      %v743 = vrot.slane %v658, %v742
      %v744 = vmul.f32 %v722, %v743
      %v745 = vmul.f32 %v723, %v743
      %v746 = vmul.f32 %v724, %v743
      %v747 = vmul.f32 %v725, %v743
      %v748 = vmul.f32 %v726, %v743
      %v749 = vmul.f32 %v727, %v743
      %v750 = vmul.f32 %v728, %v743
      %v751 = vmul.f32 %v729, %v743
      %v752 = vmul.f32 %v730, %v743
      %v753 = vmul.f32 %v731, %v743
      %v754 = vmul.f32 %v732, %v743
      %v755 = vmul.f32 %v733, %v743
      %v756 = vmul.f32 %v734, %v743
      %v757 = vmul.f32 %v735, %v743
      %v758 = vmul.f32 %v736, %v743
      %v759 = vmul.f32 %v737, %v743
      %v760 = vmul.f32 %v738, %v743
      %v761 = vmul.f32 %v739, %v743
      %v762 = vadd.f32 %v681, %v744
      %v763 = vadd.f32 %v682, %v745
      %v764 = vadd.f32 %v683, %v746
      %v765 = vadd.f32 %v684, %v747
      %v766 = vadd.f32 %v685, %v748
      %v767 = vadd.f32 %v686, %v749
      %v768 = vadd.f32 %v687, %v750
      %v769 = vadd.f32 %v688, %v751
      %v770 = vadd.f32 %v689, %v752
      %v771 = vadd.f32 %v690, %v753
      %v772 = vadd.f32 %v691, %v754
      %v773 = vadd.f32 %v692, %v755
      %v774 = vadd.f32 %v693, %v756
      %v775 = vadd.f32 %v694, %v757
      %v776 = vadd.f32 %v695, %v758
      %v777 = vadd.f32 %v696, %v759
      %v778 = vadd.f32 %v697, %v760
      %v779 = vadd.f32 %v698, %v761
      %s780 = sadd.s32 %s700, 26
      %s781 = smul.addr %s780, 4
      %s782 = scalar_lea.vmem %s279, %s781
      %v783 = vld [vmem:[%s782] sm:$0xf]
      %v784 = vld [vmem:[%s782 + $0x4] sm:$0xf]
      %v785 = vld [vmem:[%s782 + $0x8] sm:$0xf]
      %v786 = vld [vmem:[%s782 + $0xc] sm:$0xf]
      %v787 = vld [vmem:[%s782 + $0x10] sm:$0xf]
      %v788 = vld [vmem:[%s782 + $0x14] sm:$0xf]
      %v789 = vld [vmem:[%s782 + $0x18] sm:$0xf]
      %v790 = vld [vmem:[%s782 + $0x1c] sm:$0xf]
      %v791 = vld [vmem:[%s782 + $0x20] sm:$0xf]
      %v792 = vld [vmem:[%s782 + $0x24] sm:$0xf]
      %v793 = vld [vmem:[%s782 + $0x28] sm:$0xf]
      %v794 = vld [vmem:[%s782 + $0x2c] sm:$0xf]
      %v795 = vld [vmem:[%s782 + $0x30] sm:$0xf]
      %v796 = vld [vmem:[%s782 + $0x34] sm:$0xf]
      %v797 = vld [vmem:[%s782 + $0x38] sm:$0xf]
      %v798 = vld [vmem:[%s782 + $0x3c] sm:$0xf]
      %v799 = vld [vmem:[%s782 + $0x40] sm:$0xf]
      %v800 = vld [vmem:[%s782 + $0x44] sm:$0xf]
      %v801 = vunpack.c.l.bf16 %v783
      %v802 = vunpack.c.l.bf16 %v784
      %v803 = vunpack.c.l.bf16 %v785
      %v804 = vunpack.c.l.bf16 %v786
      %v805 = vunpack.c.l.bf16 %v787
      %v806 = vunpack.c.l.bf16 %v788
      %v807 = vunpack.c.l.bf16 %v789
      %v808 = vunpack.c.l.bf16 %v790
      %v809 = vunpack.c.l.bf16 %v791
      %v810 = vunpack.c.l.bf16 %v792
      %v811 = vunpack.c.l.bf16 %v793
      %v812 = vunpack.c.l.bf16 %v794
      %v813 = vunpack.c.l.bf16 %v795
      %v814 = vunpack.c.l.bf16 %v796
      %v815 = vunpack.c.l.bf16 %v797
      %v816 = vunpack.c.l.bf16 %v798
      %v817 = vunpack.c.l.bf16 %v799
      %v818 = vunpack.c.l.bf16 %v800
      %v819 = vld [vmem:[%s284] sm:$0x8]
      %v820 = vunpack.c.l.bf16 %v819
      %v821 = vlaneseq
      %v822 = vshrl.u32 %v821, 7
      %v823 = vsub.s32 6, %v822
      %v824 = vrot.slane %v820, %v823
      %v825 = vmul.f32 %v801, %v824
      %v826 = vmul.f32 %v802, %v824
      %v827 = vmul.f32 %v803, %v824
      %v828 = vmul.f32 %v804, %v824
      %v829 = vmul.f32 %v805, %v824
      %v830 = vmul.f32 %v806, %v824
      %v831 = vmul.f32 %v807, %v824
      %v832 = vmul.f32 %v808, %v824
      %v833 = vmul.f32 %v809, %v824
      %v834 = vmul.f32 %v810, %v824
      %v835 = vmul.f32 %v811, %v824
      %v836 = vmul.f32 %v812, %v824
      %v837 = vmul.f32 %v813, %v824
      %v838 = vmul.f32 %v814, %v824
      %v839 = vmul.f32 %v815, %v824
      %v840 = vmul.f32 %v816, %v824
      %v841 = vmul.f32 %v817, %v824
      %v842 = vmul.f32 %v818, %v824
      %v843 = vadd.f32 %v762, %v825
      %v844 = vadd.f32 %v763, %v826
      %v845 = vadd.f32 %v764, %v827
      %v846 = vadd.f32 %v765, %v828
      %v847 = vadd.f32 %v766, %v829
      %v848 = vadd.f32 %v767, %v830
      %v849 = vadd.f32 %v768, %v831
      %v850 = vadd.f32 %v769, %v832
      %v851 = vadd.f32 %v770, %v833
      %v852 = vadd.f32 %v771, %v834
      %v853 = vadd.f32 %v772, %v835
      %v854 = vadd.f32 %v773, %v836
      %v855 = vadd.f32 %v774, %v837
      %v856 = vadd.f32 %v775, %v838
      %v857 = vadd.f32 %v776, %v839
      %v858 = vadd.f32 %v777, %v840
      %v859 = vadd.f32 %v778, %v841
      %v860 = vadd.f32 %v779, %v842
      %s861 = sadd.s32 %s700, 52
      %s862 = smul.addr %s861, 4
      %s863 = scalar_lea.vmem %s279, %s862
      %v864 = vld [vmem:[%s863] sm:$0xf]
      %v865 = vld [vmem:[%s863 + $0x4] sm:$0xf]
      %v866 = vld [vmem:[%s863 + $0x8] sm:$0xf]
      %v867 = vld [vmem:[%s863 + $0xc] sm:$0xf]
      %v868 = vld [vmem:[%s863 + $0x10] sm:$0xf]
      %v869 = vld [vmem:[%s863 + $0x14] sm:$0xf]
      %v870 = vld [vmem:[%s863 + $0x18] sm:$0xf]
      %v871 = vld [vmem:[%s863 + $0x1c] sm:$0xf]
      %v872 = vld [vmem:[%s863 + $0x20] sm:$0xf]
      %v873 = vld [vmem:[%s863 + $0x24] sm:$0xf]
      %v874 = vld [vmem:[%s863 + $0x28] sm:$0xf]
      %v875 = vld [vmem:[%s863 + $0x2c] sm:$0xf]
      %v876 = vld [vmem:[%s863 + $0x30] sm:$0xf]
      %v877 = vld [vmem:[%s863 + $0x34] sm:$0xf]
      %v878 = vld [vmem:[%s863 + $0x38] sm:$0xf]
      %v879 = vld [vmem:[%s863 + $0x3c] sm:$0xf]
      %v880 = vld [vmem:[%s863 + $0x40] sm:$0xf]
      %v881 = vld [vmem:[%s863 + $0x44] sm:$0xf]
      %v882 = vunpack.c.l.bf16 %v864
      %v883 = vunpack.c.l.bf16 %v865
      %v884 = vunpack.c.l.bf16 %v866
      %v885 = vunpack.c.l.bf16 %v867
      %v886 = vunpack.c.l.bf16 %v868
      %v887 = vunpack.c.l.bf16 %v869
      %v888 = vunpack.c.l.bf16 %v870
      %v889 = vunpack.c.l.bf16 %v871
      %v890 = vunpack.c.l.bf16 %v872
      %v891 = vunpack.c.l.bf16 %v873
      %v892 = vunpack.c.l.bf16 %v874
      %v893 = vunpack.c.l.bf16 %v875
      %v894 = vunpack.c.l.bf16 %v876
      %v895 = vunpack.c.l.bf16 %v877
      %v896 = vunpack.c.l.bf16 %v878
      %v897 = vunpack.c.l.bf16 %v879
      %v898 = vunpack.c.l.bf16 %v880
      %v899 = vunpack.c.l.bf16 %v881
      %v900 = vlaneseq
      %v901 = vshrl.u32 %v900, 7
      %v902 = vsub.s32 7, %v901
      %v903 = vrot.slane %v820, %v902
      %v904 = vmul.f32 %v882, %v903
      %v905 = vmul.f32 %v883, %v903
      %v906 = vmul.f32 %v884, %v903
      %v907 = vmul.f32 %v885, %v903
      %v908 = vmul.f32 %v886, %v903
      %v909 = vmul.f32 %v887, %v903
      %v910 = vmul.f32 %v888, %v903
      %v911 = vmul.f32 %v889, %v903
      %v912 = vmul.f32 %v890, %v903
      %v913 = vmul.f32 %v891, %v903
      %v914 = vmul.f32 %v892, %v903
      %v915 = vmul.f32 %v893, %v903
      %v916 = vmul.f32 %v894, %v903
      %v917 = vmul.f32 %v895, %v903
      %v918 = vmul.f32 %v896, %v903
      %v919 = vmul.f32 %v897, %v903
      %v920 = vmul.f32 %v898, %v903
      %v921 = vmul.f32 %v899, %v903
      %v922 = vadd.f32 %v843, %v904
      %v923 = vadd.f32 %v844, %v905
      %v924 = vadd.f32 %v845, %v906
      %v925 = vadd.f32 %v846, %v907
      %v926 = vadd.f32 %v847, %v908
      %v927 = vadd.f32 %v848, %v909
      %v928 = vadd.f32 %v849, %v910
      %v929 = vadd.f32 %v850, %v911
      %v930 = vadd.f32 %v851, %v912
      %v931 = vadd.f32 %v852, %v913
      %v932 = vadd.f32 %v853, %v914
      %v933 = vadd.f32 %v854, %v915
      %v934 = vadd.f32 %v855, %v916
      %v935 = vadd.f32 %v856, %v917
      %v936 = vadd.f32 %v857, %v918
      %v937 = vadd.f32 %v858, %v919
      %v938 = vadd.f32 %v859, %v920
      %v939 = vadd.f32 %v860, %v921
      %s940 = sadd.s32 %s700, 78
      %s941 = smul.addr %s940, 4
      %s942 = scalar_lea.vmem %s279, %s941
      %v943 = vld [vmem:[%s942] sm:$0xf]
      %v944 = vld [vmem:[%s942 + $0x4] sm:$0xf]
      %v945 = vld [vmem:[%s942 + $0x8] sm:$0xf]
      %v946 = vld [vmem:[%s942 + $0xc] sm:$0xf]
      %v947 = vld [vmem:[%s942 + $0x10] sm:$0xf]
      %v948 = vld [vmem:[%s942 + $0x14] sm:$0xf]
      %v949 = vld [vmem:[%s942 + $0x18] sm:$0xf]
      %v950 = vld [vmem:[%s942 + $0x1c] sm:$0xf]
      %v951 = vld [vmem:[%s942 + $0x20] sm:$0xf]
      %v952 = vld [vmem:[%s942 + $0x24] sm:$0xf]
      %v953 = vld [vmem:[%s942 + $0x28] sm:$0xf]
      %v954 = vld [vmem:[%s942 + $0x2c] sm:$0xf]
      %v955 = vld [vmem:[%s942 + $0x30] sm:$0xf]
      %v956 = vld [vmem:[%s942 + $0x34] sm:$0xf]
      %v957 = vld [vmem:[%s942 + $0x38] sm:$0xf]
      %v958 = vld [vmem:[%s942 + $0x3c] sm:$0xf]
      %v959 = vld [vmem:[%s942 + $0x40] sm:$0xf]
      %v960 = vld [vmem:[%s942 + $0x44] sm:$0xf]
      %v961 = vunpack.c.l.bf16 %v943
      %v962 = vunpack.c.l.bf16 %v944
      %v963 = vunpack.c.l.bf16 %v945
      %v964 = vunpack.c.l.bf16 %v946
      %v965 = vunpack.c.l.bf16 %v947
      %v966 = vunpack.c.l.bf16 %v948
      %v967 = vunpack.c.l.bf16 %v949
      %v968 = vunpack.c.l.bf16 %v950
      %v969 = vunpack.c.l.bf16 %v951
      %v970 = vunpack.c.l.bf16 %v952
      %v971 = vunpack.c.l.bf16 %v953
      %v972 = vunpack.c.l.bf16 %v954
      %v973 = vunpack.c.l.bf16 %v955
      %v974 = vunpack.c.l.bf16 %v956
      %v975 = vunpack.c.l.bf16 %v957
      %v976 = vunpack.c.l.bf16 %v958
      %v977 = vunpack.c.l.bf16 %v959
      %v978 = vunpack.c.l.bf16 %v960
      %v979 = vld [vmem:[%s284 + $0x4] sm:$0x1]
      %v980 = vunpack.c.l.bf16 %v979
      %v981 = vlaneseq
      %v982 = vshrl.u32 %v981, 7
      %v983 = vsub.s32 0, %v982
      %v984 = vrot.slane %v980, %v983
      %v985 = vmul.f32 %v961, %v984
      %v986 = vmul.f32 %v962, %v984
      %v987 = vmul.f32 %v963, %v984
      %v988 = vmul.f32 %v964, %v984
      %v989 = vmul.f32 %v965, %v984
      %v990 = vmul.f32 %v966, %v984
      %v991 = vmul.f32 %v967, %v984
      %v992 = vmul.f32 %v968, %v984
      %v993 = vmul.f32 %v969, %v984
      %v994 = vmul.f32 %v970, %v984
      %v995 = vmul.f32 %v971, %v984
      %v996 = vmul.f32 %v972, %v984
      %v997 = vmul.f32 %v973, %v984
      %v998 = vmul.f32 %v974, %v984
      %v999 = vmul.f32 %v975, %v984
      %v1000 = vmul.f32 %v976, %v984
      %v1001 = vmul.f32 %v977, %v984
      %v1002 = vmul.f32 %v978, %v984
      %v1003 = vadd.f32 %v922, %v985
      %v1004 = vadd.f32 %v923, %v986
      %v1005 = vadd.f32 %v924, %v987
      %v1006 = vadd.f32 %v925, %v988
      %v1007 = vadd.f32 %v926, %v989
      %v1008 = vadd.f32 %v927, %v990
      %v1009 = vadd.f32 %v928, %v991
      %v1010 = vadd.f32 %v929, %v992
      %v1011 = vadd.f32 %v930, %v993
      %v1012 = vadd.f32 %v931, %v994
      %v1013 = vadd.f32 %v932, %v995
      %v1014 = vadd.f32 %v933, %v996
      %v1015 = vadd.f32 %v934, %v997
      %v1016 = vadd.f32 %v935, %v998
      %v1017 = vadd.f32 %v936, %v999
      %v1018 = vadd.f32 %v937, %v1000
      %v1019 = vadd.f32 %v938, %v1001
      %v1020 = vadd.f32 %v939, %v1002
      %s1021 = sadd.s32 %s700, 104
      %s1022 = smul.addr %s1021, 4
      %s1023 = scalar_lea.vmem %s279, %s1022
      %v1024 = vld [vmem:[%s1023] sm:$0xf]
      %v1025 = vld [vmem:[%s1023 + $0x4] sm:$0xf]
      %v1026 = vld [vmem:[%s1023 + $0x8] sm:$0xf]
      %v1027 = vld [vmem:[%s1023 + $0xc] sm:$0xf]
      %v1028 = vld [vmem:[%s1023 + $0x10] sm:$0xf]
      %v1029 = vld [vmem:[%s1023 + $0x14] sm:$0xf]
      %v1030 = vld [vmem:[%s1023 + $0x18] sm:$0xf]
      %v1031 = vld [vmem:[%s1023 + $0x1c] sm:$0xf]
      %v1032 = vld [vmem:[%s1023 + $0x20] sm:$0xf]
      %v1033 = vld [vmem:[%s1023 + $0x24] sm:$0xf]
      %v1034 = vld [vmem:[%s1023 + $0x28] sm:$0xf]
      %v1035 = vld [vmem:[%s1023 + $0x2c] sm:$0xf]
      %v1036 = vld [vmem:[%s1023 + $0x30] sm:$0xf]
      %v1037 = vld [vmem:[%s1023 + $0x34] sm:$0xf]
      %v1038 = vld [vmem:[%s1023 + $0x38] sm:$0xf]
      %v1039 = vld [vmem:[%s1023 + $0x3c] sm:$0xf]
      %v1040 = vld [vmem:[%s1023 + $0x40] sm:$0xf]
      %v1041 = vld [vmem:[%s1023 + $0x44] sm:$0xf]
      %v1042 = vunpack.c.l.bf16 %v1024
      %v1043 = vunpack.c.l.bf16 %v1025
      %v1044 = vunpack.c.l.bf16 %v1026
      %v1045 = vunpack.c.l.bf16 %v1027
      %v1046 = vunpack.c.l.bf16 %v1028
      %v1047 = vunpack.c.l.bf16 %v1029
      %v1048 = vunpack.c.l.bf16 %v1030
      %v1049 = vunpack.c.l.bf16 %v1031
      %v1050 = vunpack.c.l.bf16 %v1032
      %v1051 = vunpack.c.l.bf16 %v1033
      %v1052 = vunpack.c.l.bf16 %v1034
      %v1053 = vunpack.c.l.bf16 %v1035
      %v1054 = vunpack.c.l.bf16 %v1036
      %v1055 = vunpack.c.l.bf16 %v1037
      %v1056 = vunpack.c.l.bf16 %v1038
      %v1057 = vunpack.c.l.bf16 %v1039
      %v1058 = vunpack.c.l.bf16 %v1040
      %v1059 = vunpack.c.l.bf16 %v1041
      %v1060 = vlaneseq
      %v1061 = vshrl.u32 %v1060, 7
      %v1062 = vsub.s32 1, %v1061
      %v1063 = vrot.slane %v980, %v1062
      %v1064 = vmul.f32 %v1042, %v1063
      %v1065 = vmul.f32 %v1043, %v1063
      %v1066 = vmul.f32 %v1044, %v1063
      %v1067 = vmul.f32 %v1045, %v1063
      %v1068 = vmul.f32 %v1046, %v1063
      %v1069 = vmul.f32 %v1047, %v1063
      %v1070 = vmul.f32 %v1048, %v1063
      %v1071 = vmul.f32 %v1049, %v1063
      %v1072 = vmul.f32 %v1050, %v1063
      %v1073 = vmul.f32 %v1051, %v1063
      %v1074 = vmul.f32 %v1052, %v1063
      %v1075 = vmul.f32 %v1053, %v1063
      %v1076 = vmul.f32 %v1054, %v1063
      %v1077 = vmul.f32 %v1055, %v1063
      %v1078 = vmul.f32 %v1056, %v1063
      %v1079 = vmul.f32 %v1057, %v1063
      %v1080 = vmul.f32 %v1058, %v1063
      %v1081 = vmul.f32 %v1059, %v1063
      %v1082 = vadd.f32 %v1003, %v1064
      %v1083 = vadd.f32 %v1004, %v1065
      %v1084 = vadd.f32 %v1005, %v1066
      %v1085 = vadd.f32 %v1006, %v1067
      %v1086 = vadd.f32 %v1007, %v1068
      %v1087 = vadd.f32 %v1008, %v1069
      %v1088 = vadd.f32 %v1009, %v1070
      %v1089 = vadd.f32 %v1010, %v1071
      %v1090 = vadd.f32 %v1011, %v1072
      %v1091 = vadd.f32 %v1012, %v1073
      %v1092 = vadd.f32 %v1013, %v1074
      %v1093 = vadd.f32 %v1014, %v1075
      %v1094 = vadd.f32 %v1015, %v1076
      %v1095 = vadd.f32 %v1016, %v1077
      %v1096 = vadd.f32 %v1017, %v1078
      %v1097 = vadd.f32 %v1018, %v1079
      %v1098 = vadd.f32 %v1019, %v1080
      %v1099 = vadd.f32 %v1020, %v1081
      %s1100 = sadd.s32 %s296, 32
      %s1101 = sshra.s32 %s1100, 3
      %s1102 = sand.u32 %s1100, 7
      %s1103 = smul.addr %s1101, 4
      %s1104 = scalar_lea.vmem %s279, %s1103
      %v1105 = vld [vmem:[%s1104] sm:$0xf]
      %v1106 = vld [vmem:[%s1104 + $0x4] sm:$0xf]
      %v1107 = vld [vmem:[%s1104 + $0x8] sm:$0xf]
      %v1108 = vld [vmem:[%s1104 + $0xc] sm:$0xf]
      %v1109 = vld [vmem:[%s1104 + $0x10] sm:$0xf]
      %v1110 = vld [vmem:[%s1104 + $0x14] sm:$0xf]
      %v1111 = vld [vmem:[%s1104 + $0x18] sm:$0xf]
      %v1112 = vld [vmem:[%s1104 + $0x1c] sm:$0xf]
      %v1113 = vld [vmem:[%s1104 + $0x20] sm:$0xf]
      %v1114 = vld [vmem:[%s1104 + $0x24] sm:$0xf]
      %v1115 = vld [vmem:[%s1104 + $0x28] sm:$0xf]
      %v1116 = vld [vmem:[%s1104 + $0x2c] sm:$0xf]
      %v1117 = vld [vmem:[%s1104 + $0x30] sm:$0xf]
      %v1118 = vld [vmem:[%s1104 + $0x34] sm:$0xf]
      %v1119 = vld [vmem:[%s1104 + $0x38] sm:$0xf]
      %v1120 = vld [vmem:[%s1104 + $0x3c] sm:$0xf]
      %v1121 = vld [vmem:[%s1104 + $0x40] sm:$0xf]
      %v1122 = vld [vmem:[%s1104 + $0x44] sm:$0xf]
      %v1123 = vunpack.c.l.bf16 %v1105
      %v1124 = vunpack.c.l.bf16 %v1106
      %v1125 = vunpack.c.l.bf16 %v1107
      %v1126 = vunpack.c.l.bf16 %v1108
      %v1127 = vunpack.c.l.bf16 %v1109
      %v1128 = vunpack.c.l.bf16 %v1110
      %v1129 = vunpack.c.l.bf16 %v1111
      %v1130 = vunpack.c.l.bf16 %v1112
      %v1131 = vunpack.c.l.bf16 %v1113
      %v1132 = vunpack.c.l.bf16 %v1114
      %v1133 = vunpack.c.l.bf16 %v1115
      %v1134 = vunpack.c.l.bf16 %v1116
      %v1135 = vunpack.c.l.bf16 %v1117
      %v1136 = vunpack.c.l.bf16 %v1118
      %v1137 = vunpack.c.l.bf16 %v1119
      %v1138 = vunpack.c.l.bf16 %v1120
      %v1139 = vunpack.c.l.bf16 %v1121
      %v1140 = vunpack.c.l.bf16 %v1122
      %v1141 = vld [vmem:[%s284 + $0x4] sm:$0x2]
      %v1142 = vunpack.c.l.bf16 %v1141
      %v1143 = vlaneseq
      %v1144 = vshrl.u32 %v1143, 7
      %v1145 = vsub.s32 2, %v1144
      %v1146 = vrot.slane %v1142, %v1145
      %v1147 = vmul.f32 %v1123, %v1146
      %v1148 = vmul.f32 %v1124, %v1146
      %v1149 = vmul.f32 %v1125, %v1146
      %v1150 = vmul.f32 %v1126, %v1146
      %v1151 = vmul.f32 %v1127, %v1146
      %v1152 = vmul.f32 %v1128, %v1146
      %v1153 = vmul.f32 %v1129, %v1146
      %v1154 = vmul.f32 %v1130, %v1146
      %v1155 = vmul.f32 %v1131, %v1146
      %v1156 = vmul.f32 %v1132, %v1146
      %v1157 = vmul.f32 %v1133, %v1146
      %v1158 = vmul.f32 %v1134, %v1146
      %v1159 = vmul.f32 %v1135, %v1146
      %v1160 = vmul.f32 %v1136, %v1146
      %v1161 = vmul.f32 %v1137, %v1146
      %v1162 = vmul.f32 %v1138, %v1146
      %v1163 = vmul.f32 %v1139, %v1146
      %v1164 = vmul.f32 %v1140, %v1146
      %v1165 = vadd.f32 %v1082, %v1147
      %v1166 = vadd.f32 %v1083, %v1148
      %v1167 = vadd.f32 %v1084, %v1149
      %v1168 = vadd.f32 %v1085, %v1150
      %v1169 = vadd.f32 %v1086, %v1151
      %v1170 = vadd.f32 %v1087, %v1152
      %v1171 = vadd.f32 %v1088, %v1153
      %v1172 = vadd.f32 %v1089, %v1154
      %v1173 = vadd.f32 %v1090, %v1155
      %v1174 = vadd.f32 %v1091, %v1156
      %v1175 = vadd.f32 %v1092, %v1157
      %v1176 = vadd.f32 %v1093, %v1158
      %v1177 = vadd.f32 %v1094, %v1159
      %v1178 = vadd.f32 %v1095, %v1160
      %v1179 = vadd.f32 %v1096, %v1161
      %v1180 = vadd.f32 %v1097, %v1162
      %v1181 = vadd.f32 %v1098, %v1163
      %v1182 = vadd.f32 %v1099, %v1164
      %s1183 = sadd.s32 %s1101, 26
      %s1184 = smul.addr %s1183, 4
      %s1185 = scalar_lea.vmem %s279, %s1184
      %v1186 = vld [vmem:[%s1185] sm:$0xf]
      %v1187 = vld [vmem:[%s1185 + $0x4] sm:$0xf]
      %v1188 = vld [vmem:[%s1185 + $0x8] sm:$0xf]
      %v1189 = vld [vmem:[%s1185 + $0xc] sm:$0xf]
      %v1190 = vld [vmem:[%s1185 + $0x10] sm:$0xf]
      %v1191 = vld [vmem:[%s1185 + $0x14] sm:$0xf]
      %v1192 = vld [vmem:[%s1185 + $0x18] sm:$0xf]
      %v1193 = vld [vmem:[%s1185 + $0x1c] sm:$0xf]
      %v1194 = vld [vmem:[%s1185 + $0x20] sm:$0xf]
      %v1195 = vld [vmem:[%s1185 + $0x24] sm:$0xf]
      %v1196 = vld [vmem:[%s1185 + $0x28] sm:$0xf]
      %v1197 = vld [vmem:[%s1185 + $0x2c] sm:$0xf]
      %v1198 = vld [vmem:[%s1185 + $0x30] sm:$0xf]
      %v1199 = vld [vmem:[%s1185 + $0x34] sm:$0xf]
      %v1200 = vld [vmem:[%s1185 + $0x38] sm:$0xf]
      %v1201 = vld [vmem:[%s1185 + $0x3c] sm:$0xf]
      %v1202 = vld [vmem:[%s1185 + $0x40] sm:$0xf]
      %v1203 = vld [vmem:[%s1185 + $0x44] sm:$0xf]
      %v1204 = vunpack.c.l.bf16 %v1186
      %v1205 = vunpack.c.l.bf16 %v1187
      %v1206 = vunpack.c.l.bf16 %v1188
      %v1207 = vunpack.c.l.bf16 %v1189
      %v1208 = vunpack.c.l.bf16 %v1190
      %v1209 = vunpack.c.l.bf16 %v1191
      %v1210 = vunpack.c.l.bf16 %v1192
      %v1211 = vunpack.c.l.bf16 %v1193
      %v1212 = vunpack.c.l.bf16 %v1194
      %v1213 = vunpack.c.l.bf16 %v1195
      %v1214 = vunpack.c.l.bf16 %v1196
      %v1215 = vunpack.c.l.bf16 %v1197
      %v1216 = vunpack.c.l.bf16 %v1198
      %v1217 = vunpack.c.l.bf16 %v1199
      %v1218 = vunpack.c.l.bf16 %v1200
      %v1219 = vunpack.c.l.bf16 %v1201
      %v1220 = vunpack.c.l.bf16 %v1202
      %v1221 = vunpack.c.l.bf16 %v1203
      %v1222 = vlaneseq
      %v1223 = vshrl.u32 %v1222, 7
      %v1224 = vsub.s32 3, %v1223
      %v1225 = vrot.slane %v1142, %v1224
      %v1226 = vmul.f32 %v1204, %v1225
      %v1227 = vmul.f32 %v1205, %v1225
      %v1228 = vmul.f32 %v1206, %v1225
      %v1229 = vmul.f32 %v1207, %v1225
      %v1230 = vmul.f32 %v1208, %v1225
      %v1231 = vmul.f32 %v1209, %v1225
      %v1232 = vmul.f32 %v1210, %v1225
      %v1233 = vmul.f32 %v1211, %v1225
      %v1234 = vmul.f32 %v1212, %v1225
      %v1235 = vmul.f32 %v1213, %v1225
      %v1236 = vmul.f32 %v1214, %v1225
      %v1237 = vmul.f32 %v1215, %v1225
      %v1238 = vmul.f32 %v1216, %v1225
      %v1239 = vmul.f32 %v1217, %v1225
      %v1240 = vmul.f32 %v1218, %v1225
      %v1241 = vmul.f32 %v1219, %v1225
      %v1242 = vmul.f32 %v1220, %v1225
      %v1243 = vmul.f32 %v1221, %v1225
      %v1244 = vadd.f32 %v1165, %v1226
      %v1245 = vadd.f32 %v1166, %v1227
      %v1246 = vadd.f32 %v1167, %v1228
      %v1247 = vadd.f32 %v1168, %v1229
      %v1248 = vadd.f32 %v1169, %v1230
      %v1249 = vadd.f32 %v1170, %v1231
      %v1250 = vadd.f32 %v1171, %v1232
      %v1251 = vadd.f32 %v1172, %v1233
      %v1252 = vadd.f32 %v1173, %v1234
      %v1253 = vadd.f32 %v1174, %v1235
      %v1254 = vadd.f32 %v1175, %v1236
      %v1255 = vadd.f32 %v1176, %v1237
      %v1256 = vadd.f32 %v1177, %v1238
      %v1257 = vadd.f32 %v1178, %v1239
      %v1258 = vadd.f32 %v1179, %v1240
      %v1259 = vadd.f32 %v1180, %v1241
      %v1260 = vadd.f32 %v1181, %v1242
      %v1261 = vadd.f32 %v1182, %v1243
      %s1262 = sadd.s32 %s1101, 52
      %s1263 = smul.addr %s1262, 4
      %s1264 = scalar_lea.vmem %s279, %s1263
      %v1265 = vld [vmem:[%s1264] sm:$0xf]
      %v1266 = vld [vmem:[%s1264 + $0x4] sm:$0xf]
      %v1267 = vld [vmem:[%s1264 + $0x8] sm:$0xf]
      %v1268 = vld [vmem:[%s1264 + $0xc] sm:$0xf]
      %v1269 = vld [vmem:[%s1264 + $0x10] sm:$0xf]
      %v1270 = vld [vmem:[%s1264 + $0x14] sm:$0xf]
      %v1271 = vld [vmem:[%s1264 + $0x18] sm:$0xf]
      %v1272 = vld [vmem:[%s1264 + $0x1c] sm:$0xf]
      %v1273 = vld [vmem:[%s1264 + $0x20] sm:$0xf]
      %v1274 = vld [vmem:[%s1264 + $0x24] sm:$0xf]
      %v1275 = vld [vmem:[%s1264 + $0x28] sm:$0xf]
      %v1276 = vld [vmem:[%s1264 + $0x2c] sm:$0xf]
      %v1277 = vld [vmem:[%s1264 + $0x30] sm:$0xf]
      %v1278 = vld [vmem:[%s1264 + $0x34] sm:$0xf]
      %v1279 = vld [vmem:[%s1264 + $0x38] sm:$0xf]
      %v1280 = vld [vmem:[%s1264 + $0x3c] sm:$0xf]
      %v1281 = vld [vmem:[%s1264 + $0x40] sm:$0xf]
      %v1282 = vld [vmem:[%s1264 + $0x44] sm:$0xf]
      %v1283 = vunpack.c.l.bf16 %v1265
      %v1284 = vunpack.c.l.bf16 %v1266
      %v1285 = vunpack.c.l.bf16 %v1267
      %v1286 = vunpack.c.l.bf16 %v1268
      %v1287 = vunpack.c.l.bf16 %v1269
      %v1288 = vunpack.c.l.bf16 %v1270
      %v1289 = vunpack.c.l.bf16 %v1271
      %v1290 = vunpack.c.l.bf16 %v1272
      %v1291 = vunpack.c.l.bf16 %v1273
      %v1292 = vunpack.c.l.bf16 %v1274
      %v1293 = vunpack.c.l.bf16 %v1275
      %v1294 = vunpack.c.l.bf16 %v1276
      %v1295 = vunpack.c.l.bf16 %v1277
      %v1296 = vunpack.c.l.bf16 %v1278
      %v1297 = vunpack.c.l.bf16 %v1279
      %v1298 = vunpack.c.l.bf16 %v1280
      %v1299 = vunpack.c.l.bf16 %v1281
      %v1300 = vunpack.c.l.bf16 %v1282
      %v1301 = vld [vmem:[%s284 + $0x4] sm:$0x4]
      %v1302 = vunpack.c.l.bf16 %v1301
      %v1303 = vlaneseq
      %v1304 = vshrl.u32 %v1303, 7
      %v1305 = vsub.s32 4, %v1304
      %v1306 = vrot.slane %v1302, %v1305
      %v1307 = vmul.f32 %v1283, %v1306
      %v1308 = vmul.f32 %v1284, %v1306
      %v1309 = vmul.f32 %v1285, %v1306
      %v1310 = vmul.f32 %v1286, %v1306
      %v1311 = vmul.f32 %v1287, %v1306
      %v1312 = vmul.f32 %v1288, %v1306
      %v1313 = vmul.f32 %v1289, %v1306
      %v1314 = vmul.f32 %v1290, %v1306
      %v1315 = vmul.f32 %v1291, %v1306
      %v1316 = vmul.f32 %v1292, %v1306
      %v1317 = vmul.f32 %v1293, %v1306
      %v1318 = vmul.f32 %v1294, %v1306
      %v1319 = vmul.f32 %v1295, %v1306
      %v1320 = vmul.f32 %v1296, %v1306
      %v1321 = vmul.f32 %v1297, %v1306
      %v1322 = vmul.f32 %v1298, %v1306
      %v1323 = vmul.f32 %v1299, %v1306
      %v1324 = vmul.f32 %v1300, %v1306
      %v1325 = vadd.f32 %v1244, %v1307
      %v1326 = vadd.f32 %v1245, %v1308
      %v1327 = vadd.f32 %v1246, %v1309
      %v1328 = vadd.f32 %v1247, %v1310
      %v1329 = vadd.f32 %v1248, %v1311
      %v1330 = vadd.f32 %v1249, %v1312
      %v1331 = vadd.f32 %v1250, %v1313
      %v1332 = vadd.f32 %v1251, %v1314
      %v1333 = vadd.f32 %v1252, %v1315
      %v1334 = vadd.f32 %v1253, %v1316
      %v1335 = vadd.f32 %v1254, %v1317
      %v1336 = vadd.f32 %v1255, %v1318
      %v1337 = vadd.f32 %v1256, %v1319
      %v1338 = vadd.f32 %v1257, %v1320
      %v1339 = vadd.f32 %v1258, %v1321
      %v1340 = vadd.f32 %v1259, %v1322
      %v1341 = vadd.f32 %v1260, %v1323
      %v1342 = vadd.f32 %v1261, %v1324
      %s1343 = sadd.s32 %s1101, 78
      %s1344 = smul.addr %s1343, 4
      %s1345 = scalar_lea.vmem %s279, %s1344
      %v1346 = vld [vmem:[%s1345] sm:$0xf]
      %v1347 = vld [vmem:[%s1345 + $0x4] sm:$0xf]
      %v1348 = vld [vmem:[%s1345 + $0x8] sm:$0xf]
      %v1349 = vld [vmem:[%s1345 + $0xc] sm:$0xf]
      %v1350 = vld [vmem:[%s1345 + $0x10] sm:$0xf]
      %v1351 = vld [vmem:[%s1345 + $0x14] sm:$0xf]
      %v1352 = vld [vmem:[%s1345 + $0x18] sm:$0xf]
      %v1353 = vld [vmem:[%s1345 + $0x1c] sm:$0xf]
      %v1354 = vld [vmem:[%s1345 + $0x20] sm:$0xf]
      %v1355 = vld [vmem:[%s1345 + $0x24] sm:$0xf]
      %v1356 = vld [vmem:[%s1345 + $0x28] sm:$0xf]
      %v1357 = vld [vmem:[%s1345 + $0x2c] sm:$0xf]
      %v1358 = vld [vmem:[%s1345 + $0x30] sm:$0xf]
      %v1359 = vld [vmem:[%s1345 + $0x34] sm:$0xf]
      %v1360 = vld [vmem:[%s1345 + $0x38] sm:$0xf]
      %v1361 = vld [vmem:[%s1345 + $0x3c] sm:$0xf]
      %v1362 = vld [vmem:[%s1345 + $0x40] sm:$0xf]
      %v1363 = vld [vmem:[%s1345 + $0x44] sm:$0xf]
      %v1364 = vunpack.c.l.bf16 %v1346
      %v1365 = vunpack.c.l.bf16 %v1347
      %v1366 = vunpack.c.l.bf16 %v1348
      %v1367 = vunpack.c.l.bf16 %v1349
      %v1368 = vunpack.c.l.bf16 %v1350
      %v1369 = vunpack.c.l.bf16 %v1351
      %v1370 = vunpack.c.l.bf16 %v1352
      %v1371 = vunpack.c.l.bf16 %v1353
      %v1372 = vunpack.c.l.bf16 %v1354
      %v1373 = vunpack.c.l.bf16 %v1355
      %v1374 = vunpack.c.l.bf16 %v1356
      %v1375 = vunpack.c.l.bf16 %v1357
      %v1376 = vunpack.c.l.bf16 %v1358
      %v1377 = vunpack.c.l.bf16 %v1359
      %v1378 = vunpack.c.l.bf16 %v1360
      %v1379 = vunpack.c.l.bf16 %v1361
      %v1380 = vunpack.c.l.bf16 %v1362
      %v1381 = vunpack.c.l.bf16 %v1363
      %v1382 = vlaneseq
      %v1383 = vshrl.u32 %v1382, 7
      %v1384 = vsub.s32 5, %v1383
      %v1385 = vrot.slane %v1302, %v1384
      %v1386 = vmul.f32 %v1364, %v1385
      %v1387 = vmul.f32 %v1365, %v1385
      %v1388 = vmul.f32 %v1366, %v1385
      %v1389 = vmul.f32 %v1367, %v1385
      %v1390 = vmul.f32 %v1368, %v1385
      %v1391 = vmul.f32 %v1369, %v1385
      %v1392 = vmul.f32 %v1370, %v1385
      %v1393 = vmul.f32 %v1371, %v1385
      %v1394 = vmul.f32 %v1372, %v1385
      %v1395 = vmul.f32 %v1373, %v1385
      %v1396 = vmul.f32 %v1374, %v1385
      %v1397 = vmul.f32 %v1375, %v1385
      %v1398 = vmul.f32 %v1376, %v1385
      %v1399 = vmul.f32 %v1377, %v1385
      %v1400 = vmul.f32 %v1378, %v1385
      %v1401 = vmul.f32 %v1379, %v1385
      %v1402 = vmul.f32 %v1380, %v1385
      %v1403 = vmul.f32 %v1381, %v1385
      %v1404 = vadd.f32 %v1325, %v1386
      %v1405 = vadd.f32 %v1326, %v1387
      %v1406 = vadd.f32 %v1327, %v1388
      %v1407 = vadd.f32 %v1328, %v1389
      %v1408 = vadd.f32 %v1329, %v1390
      %v1409 = vadd.f32 %v1330, %v1391
      %v1410 = vadd.f32 %v1331, %v1392
      %v1411 = vadd.f32 %v1332, %v1393
      %v1412 = vadd.f32 %v1333, %v1394
      %v1413 = vadd.f32 %v1334, %v1395
      %v1414 = vadd.f32 %v1335, %v1396
      %v1415 = vadd.f32 %v1336, %v1397
      %v1416 = vadd.f32 %v1337, %v1398
      %v1417 = vadd.f32 %v1338, %v1399
      %v1418 = vadd.f32 %v1339, %v1400
      %v1419 = vadd.f32 %v1340, %v1401
      %v1420 = vadd.f32 %v1341, %v1402
      %v1421 = vadd.f32 %v1342, %v1403
      %s1422 = sadd.s32 %s1101, 104
      %s1423 = smul.addr %s1422, 4
      %s1424 = scalar_lea.vmem %s279, %s1423
      %v1425 = vld [vmem:[%s1424] sm:$0xf]
      %v1426 = vld [vmem:[%s1424 + $0x4] sm:$0xf]
      %v1427 = vld [vmem:[%s1424 + $0x8] sm:$0xf]
      %v1428 = vld [vmem:[%s1424 + $0xc] sm:$0xf]
      %v1429 = vld [vmem:[%s1424 + $0x10] sm:$0xf]
      %v1430 = vld [vmem:[%s1424 + $0x14] sm:$0xf]
      %v1431 = vld [vmem:[%s1424 + $0x18] sm:$0xf]
      %v1432 = vld [vmem:[%s1424 + $0x1c] sm:$0xf]
      %v1433 = vld [vmem:[%s1424 + $0x20] sm:$0xf]
      %v1434 = vld [vmem:[%s1424 + $0x24] sm:$0xf]
      %v1435 = vld [vmem:[%s1424 + $0x28] sm:$0xf]
      %v1436 = vld [vmem:[%s1424 + $0x2c] sm:$0xf]
      %v1437 = vld [vmem:[%s1424 + $0x30] sm:$0xf]
      %v1438 = vld [vmem:[%s1424 + $0x34] sm:$0xf]
      %v1439 = vld [vmem:[%s1424 + $0x38] sm:$0xf]
      %v1440 = vld [vmem:[%s1424 + $0x3c] sm:$0xf]
      %v1441 = vld [vmem:[%s1424 + $0x40] sm:$0xf]
      %v1442 = vld [vmem:[%s1424 + $0x44] sm:$0xf]
      %v1443 = vunpack.c.l.bf16 %v1425
      %v1444 = vunpack.c.l.bf16 %v1426
      %v1445 = vunpack.c.l.bf16 %v1427
      %v1446 = vunpack.c.l.bf16 %v1428
      %v1447 = vunpack.c.l.bf16 %v1429
      %v1448 = vunpack.c.l.bf16 %v1430
      %v1449 = vunpack.c.l.bf16 %v1431
      %v1450 = vunpack.c.l.bf16 %v1432
      %v1451 = vunpack.c.l.bf16 %v1433
      %v1452 = vunpack.c.l.bf16 %v1434
      %v1453 = vunpack.c.l.bf16 %v1435
      %v1454 = vunpack.c.l.bf16 %v1436
      %v1455 = vunpack.c.l.bf16 %v1437
      %v1456 = vunpack.c.l.bf16 %v1438
      %v1457 = vunpack.c.l.bf16 %v1439
      %v1458 = vunpack.c.l.bf16 %v1440
      %v1459 = vunpack.c.l.bf16 %v1441
      %v1460 = vunpack.c.l.bf16 %v1442
      %v1461 = vld [vmem:[%s284 + $0x4] sm:$0x8]
      %v1462 = vunpack.c.l.bf16 %v1461
      %v1463 = vlaneseq
      %v1464 = vshrl.u32 %v1463, 7
      %v1465 = vsub.s32 6, %v1464
      %v1466 = vrot.slane %v1462, %v1465
      %v1467 = vmul.f32 %v1443, %v1466
      %v1468 = vmul.f32 %v1444, %v1466
      %v1469 = vmul.f32 %v1445, %v1466
      %v1470 = vmul.f32 %v1446, %v1466
      %v1471 = vmul.f32 %v1447, %v1466
      %v1472 = vmul.f32 %v1448, %v1466
      %v1473 = vmul.f32 %v1449, %v1466
      %v1474 = vmul.f32 %v1450, %v1466
      %v1475 = vmul.f32 %v1451, %v1466
      %v1476 = vmul.f32 %v1452, %v1466
      %v1477 = vmul.f32 %v1453, %v1466
      %v1478 = vmul.f32 %v1454, %v1466
      %v1479 = vmul.f32 %v1455, %v1466
      %v1480 = vmul.f32 %v1456, %v1466
      %v1481 = vmul.f32 %v1457, %v1466
      %v1482 = vmul.f32 %v1458, %v1466
      %v1483 = vmul.f32 %v1459, %v1466
      %v1484 = vmul.f32 %v1460, %v1466
      %v1485 = vadd.f32 %v1404, %v1467
      %v1486 = vadd.f32 %v1405, %v1468
      %v1487 = vadd.f32 %v1406, %v1469
      %v1488 = vadd.f32 %v1407, %v1470
      %v1489 = vadd.f32 %v1408, %v1471
      %v1490 = vadd.f32 %v1409, %v1472
      %v1491 = vadd.f32 %v1410, %v1473
      %v1492 = vadd.f32 %v1411, %v1474
      %v1493 = vadd.f32 %v1412, %v1475
      %v1494 = vadd.f32 %v1413, %v1476
      %v1495 = vadd.f32 %v1414, %v1477
      %v1496 = vadd.f32 %v1415, %v1478
      %v1497 = vadd.f32 %v1416, %v1479
      %v1498 = vadd.f32 %v1417, %v1480
      %v1499 = vadd.f32 %v1418, %v1481
      %v1500 = vadd.f32 %v1419, %v1482
      %v1501 = vadd.f32 %v1420, %v1483
      %v1502 = vadd.f32 %v1421, %v1484
      %s1503 = sadd.s32 %s296, 48
      %s1504 = sshra.s32 %s1503, 3
      %s1505 = sand.u32 %s1503, 7
      %s1506 = smul.addr %s1504, 4
      %s1507 = scalar_lea.vmem %s279, %s1506
      %v1508 = vld [vmem:[%s1507] sm:$0xf]
      %v1509 = vld [vmem:[%s1507 + $0x4] sm:$0xf]
      %v1510 = vld [vmem:[%s1507 + $0x8] sm:$0xf]
      %v1511 = vld [vmem:[%s1507 + $0xc] sm:$0xf]
      %v1512 = vld [vmem:[%s1507 + $0x10] sm:$0xf]
      %v1513 = vld [vmem:[%s1507 + $0x14] sm:$0xf]
      %v1514 = vld [vmem:[%s1507 + $0x18] sm:$0xf]
      %v1515 = vld [vmem:[%s1507 + $0x1c] sm:$0xf]
      %v1516 = vld [vmem:[%s1507 + $0x20] sm:$0xf]
      %v1517 = vld [vmem:[%s1507 + $0x24] sm:$0xf]
      %v1518 = vld [vmem:[%s1507 + $0x28] sm:$0xf]
      %v1519 = vld [vmem:[%s1507 + $0x2c] sm:$0xf]
      %v1520 = vld [vmem:[%s1507 + $0x30] sm:$0xf]
      %v1521 = vld [vmem:[%s1507 + $0x34] sm:$0xf]
      %v1522 = vld [vmem:[%s1507 + $0x38] sm:$0xf]
      %v1523 = vld [vmem:[%s1507 + $0x3c] sm:$0xf]
      %v1524 = vld [vmem:[%s1507 + $0x40] sm:$0xf]
      %v1525 = vld [vmem:[%s1507 + $0x44] sm:$0xf]
      %v1526 = vunpack.c.l.bf16 %v1508
      %v1527 = vunpack.c.l.bf16 %v1509
      %v1528 = vunpack.c.l.bf16 %v1510
      %v1529 = vunpack.c.l.bf16 %v1511
      %v1530 = vunpack.c.l.bf16 %v1512
      %v1531 = vunpack.c.l.bf16 %v1513
      %v1532 = vunpack.c.l.bf16 %v1514
      %v1533 = vunpack.c.l.bf16 %v1515
      %v1534 = vunpack.c.l.bf16 %v1516
      %v1535 = vunpack.c.l.bf16 %v1517
      %v1536 = vunpack.c.l.bf16 %v1518
      %v1537 = vunpack.c.l.bf16 %v1519
      %v1538 = vunpack.c.l.bf16 %v1520
      %v1539 = vunpack.c.l.bf16 %v1521
      %v1540 = vunpack.c.l.bf16 %v1522
      %v1541 = vunpack.c.l.bf16 %v1523
      %v1542 = vunpack.c.l.bf16 %v1524
      %v1543 = vunpack.c.l.bf16 %v1525
      %v1544 = vlaneseq
      %v1545 = vshrl.u32 %v1544, 7
      %v1546 = vsub.s32 7, %v1545
      %v1547 = vrot.slane %v1462, %v1546
      %v1548 = vmul.f32 %v1526, %v1547
      %v1549 = vmul.f32 %v1527, %v1547
      %v1550 = vmul.f32 %v1528, %v1547
      %v1551 = vmul.f32 %v1529, %v1547
      %v1552 = vmul.f32 %v1530, %v1547
      %v1553 = vmul.f32 %v1531, %v1547
      %v1554 = vmul.f32 %v1532, %v1547
      %v1555 = vmul.f32 %v1533, %v1547
      %v1556 = vmul.f32 %v1534, %v1547
      %v1557 = vmul.f32 %v1535, %v1547
      %v1558 = vmul.f32 %v1536, %v1547
      %v1559 = vmul.f32 %v1537, %v1547
      %v1560 = vmul.f32 %v1538, %v1547
      %v1561 = vmul.f32 %v1539, %v1547
      %v1562 = vmul.f32 %v1540, %v1547
      %v1563 = vmul.f32 %v1541, %v1547
      %v1564 = vmul.f32 %v1542, %v1547
      %v1565 = vmul.f32 %v1543, %v1547
      %v1566 = vadd.f32 %v1485, %v1548
      %v1567 = vadd.f32 %v1486, %v1549
      %v1568 = vadd.f32 %v1487, %v1550
      %v1569 = vadd.f32 %v1488, %v1551
      %v1570 = vadd.f32 %v1489, %v1552
      %v1571 = vadd.f32 %v1490, %v1553
      %v1572 = vadd.f32 %v1491, %v1554
      %v1573 = vadd.f32 %v1492, %v1555
      %v1574 = vadd.f32 %v1493, %v1556
      %v1575 = vadd.f32 %v1494, %v1557
      %v1576 = vadd.f32 %v1495, %v1558
      %v1577 = vadd.f32 %v1496, %v1559
      %v1578 = vadd.f32 %v1497, %v1560
      %v1579 = vadd.f32 %v1498, %v1561
      %v1580 = vadd.f32 %v1499, %v1562
      %v1581 = vadd.f32 %v1500, %v1563
      %v1582 = vadd.f32 %v1501, %v1564
      %v1583 = vadd.f32 %v1502, %v1565
      %s1584 = sadd.s32 %s1504, 26
      %s1585 = smul.addr %s1584, 4
      %s1586 = scalar_lea.vmem %s279, %s1585
      %v1587 = vld [vmem:[%s1586] sm:$0xf]
      %v1588 = vld [vmem:[%s1586 + $0x4] sm:$0xf]
      %v1589 = vld [vmem:[%s1586 + $0x8] sm:$0xf]
      %v1590 = vld [vmem:[%s1586 + $0xc] sm:$0xf]
      %v1591 = vld [vmem:[%s1586 + $0x10] sm:$0xf]
      %v1592 = vld [vmem:[%s1586 + $0x14] sm:$0xf]
      %v1593 = vld [vmem:[%s1586 + $0x18] sm:$0xf]
      %v1594 = vld [vmem:[%s1586 + $0x1c] sm:$0xf]
      %v1595 = vld [vmem:[%s1586 + $0x20] sm:$0xf]
      %v1596 = vld [vmem:[%s1586 + $0x24] sm:$0xf]
      %v1597 = vld [vmem:[%s1586 + $0x28] sm:$0xf]
      %v1598 = vld [vmem:[%s1586 + $0x2c] sm:$0xf]
      %v1599 = vld [vmem:[%s1586 + $0x30] sm:$0xf]
      %v1600 = vld [vmem:[%s1586 + $0x34] sm:$0xf]
      %v1601 = vld [vmem:[%s1586 + $0x38] sm:$0xf]
      %v1602 = vld [vmem:[%s1586 + $0x3c] sm:$0xf]
      %v1603 = vld [vmem:[%s1586 + $0x40] sm:$0xf]
      %v1604 = vld [vmem:[%s1586 + $0x44] sm:$0xf]
      %v1605 = vunpack.c.l.bf16 %v1587
      %v1606 = vunpack.c.l.bf16 %v1588
      %v1607 = vunpack.c.l.bf16 %v1589
      %v1608 = vunpack.c.l.bf16 %v1590
      %v1609 = vunpack.c.l.bf16 %v1591
      %v1610 = vunpack.c.l.bf16 %v1592
      %v1611 = vunpack.c.l.bf16 %v1593
      %v1612 = vunpack.c.l.bf16 %v1594
      %v1613 = vunpack.c.l.bf16 %v1595
      %v1614 = vunpack.c.l.bf16 %v1596
      %v1615 = vunpack.c.l.bf16 %v1597
      %v1616 = vunpack.c.l.bf16 %v1598
      %v1617 = vunpack.c.l.bf16 %v1599
      %v1618 = vunpack.c.l.bf16 %v1600
      %v1619 = vunpack.c.l.bf16 %v1601
      %v1620 = vunpack.c.l.bf16 %v1602
      %v1621 = vunpack.c.l.bf16 %v1603
      %v1622 = vunpack.c.l.bf16 %v1604
      %v1623 = vld [vmem:[%s284 + $0x8] sm:$0x1]
      %v1624 = vunpack.c.l.bf16 %v1623
      %v1625 = vlaneseq
      %v1626 = vshrl.u32 %v1625, 7
      %v1627 = vsub.s32 0, %v1626
      %v1628 = vrot.slane %v1624, %v1627
      %v1629 = vmul.f32 %v1605, %v1628
      %v1630 = vmul.f32 %v1606, %v1628
      %v1631 = vmul.f32 %v1607, %v1628
      %v1632 = vmul.f32 %v1608, %v1628
      %v1633 = vmul.f32 %v1609, %v1628
      %v1634 = vmul.f32 %v1610, %v1628
      %v1635 = vmul.f32 %v1611, %v1628
      %v1636 = vmul.f32 %v1612, %v1628
      %v1637 = vmul.f32 %v1613, %v1628
      %v1638 = vmul.f32 %v1614, %v1628
      %v1639 = vmul.f32 %v1615, %v1628
      %v1640 = vmul.f32 %v1616, %v1628
      %v1641 = vmul.f32 %v1617, %v1628
      %v1642 = vmul.f32 %v1618, %v1628
      %v1643 = vmul.f32 %v1619, %v1628
      %v1644 = vmul.f32 %v1620, %v1628
      %v1645 = vmul.f32 %v1621, %v1628
      %v1646 = vmul.f32 %v1622, %v1628
      %v1647 = vadd.f32 %v1566, %v1629
      %v1648 = vadd.f32 %v1567, %v1630
      %v1649 = vadd.f32 %v1568, %v1631
      %v1650 = vadd.f32 %v1569, %v1632
      %v1651 = vadd.f32 %v1570, %v1633
      %v1652 = vadd.f32 %v1571, %v1634
      %v1653 = vadd.f32 %v1572, %v1635
      %v1654 = vadd.f32 %v1573, %v1636
      %v1655 = vadd.f32 %v1574, %v1637
      %v1656 = vadd.f32 %v1575, %v1638
      %v1657 = vadd.f32 %v1576, %v1639
      %v1658 = vadd.f32 %v1577, %v1640
      %v1659 = vadd.f32 %v1578, %v1641
      %v1660 = vadd.f32 %v1579, %v1642
      %v1661 = vadd.f32 %v1580, %v1643
      %v1662 = vadd.f32 %v1581, %v1644
      %v1663 = vadd.f32 %v1582, %v1645
      %v1664 = vadd.f32 %v1583, %v1646
      %s1665 = sadd.s32 %s1504, 52
      %s1666 = smul.addr %s1665, 4
      %s1667 = scalar_lea.vmem %s279, %s1666
      %v1668 = vld [vmem:[%s1667] sm:$0xf]
      %v1669 = vld [vmem:[%s1667 + $0x4] sm:$0xf]
      %v1670 = vld [vmem:[%s1667 + $0x8] sm:$0xf]
      %v1671 = vld [vmem:[%s1667 + $0xc] sm:$0xf]
      %v1672 = vld [vmem:[%s1667 + $0x10] sm:$0xf]
      %v1673 = vld [vmem:[%s1667 + $0x14] sm:$0xf]
      %v1674 = vld [vmem:[%s1667 + $0x18] sm:$0xf]
      %v1675 = vld [vmem:[%s1667 + $0x1c] sm:$0xf]
      %v1676 = vld [vmem:[%s1667 + $0x20] sm:$0xf]
      %v1677 = vld [vmem:[%s1667 + $0x24] sm:$0xf]
      %v1678 = vld [vmem:[%s1667 + $0x28] sm:$0xf]
      %v1679 = vld [vmem:[%s1667 + $0x2c] sm:$0xf]
      %v1680 = vld [vmem:[%s1667 + $0x30] sm:$0xf]
      %v1681 = vld [vmem:[%s1667 + $0x34] sm:$0xf]
      %v1682 = vld [vmem:[%s1667 + $0x38] sm:$0xf]
      %v1683 = vld [vmem:[%s1667 + $0x3c] sm:$0xf]
      %v1684 = vld [vmem:[%s1667 + $0x40] sm:$0xf]
      %v1685 = vld [vmem:[%s1667 + $0x44] sm:$0xf]
      %v1686 = vunpack.c.l.bf16 %v1668
      %v1687 = vunpack.c.l.bf16 %v1669
      %v1688 = vunpack.c.l.bf16 %v1670
      %v1689 = vunpack.c.l.bf16 %v1671
      %v1690 = vunpack.c.l.bf16 %v1672
      %v1691 = vunpack.c.l.bf16 %v1673
      %v1692 = vunpack.c.l.bf16 %v1674
      %v1693 = vunpack.c.l.bf16 %v1675
      %v1694 = vunpack.c.l.bf16 %v1676
      %v1695 = vunpack.c.l.bf16 %v1677
      %v1696 = vunpack.c.l.bf16 %v1678
      %v1697 = vunpack.c.l.bf16 %v1679
      %v1698 = vunpack.c.l.bf16 %v1680
      %v1699 = vunpack.c.l.bf16 %v1681
      %v1700 = vunpack.c.l.bf16 %v1682
      %v1701 = vunpack.c.l.bf16 %v1683
      %v1702 = vunpack.c.l.bf16 %v1684
      %v1703 = vunpack.c.l.bf16 %v1685
      %v1704 = vlaneseq
      %v1705 = vshrl.u32 %v1704, 7
      %v1706 = vsub.s32 1, %v1705
      %v1707 = vrot.slane %v1624, %v1706
      %v1708 = vmul.f32 %v1686, %v1707
      %v1709 = vmul.f32 %v1687, %v1707
      %v1710 = vmul.f32 %v1688, %v1707
      %v1711 = vmul.f32 %v1689, %v1707
      %v1712 = vmul.f32 %v1690, %v1707
      %v1713 = vmul.f32 %v1691, %v1707
      %v1714 = vmul.f32 %v1692, %v1707
      %v1715 = vmul.f32 %v1693, %v1707
      %v1716 = vmul.f32 %v1694, %v1707
      %v1717 = vmul.f32 %v1695, %v1707
      %v1718 = vmul.f32 %v1696, %v1707
      %v1719 = vmul.f32 %v1697, %v1707
      %v1720 = vmul.f32 %v1698, %v1707
      %v1721 = vmul.f32 %v1699, %v1707
      %v1722 = vmul.f32 %v1700, %v1707
      %v1723 = vmul.f32 %v1701, %v1707
      %v1724 = vmul.f32 %v1702, %v1707
      %v1725 = vmul.f32 %v1703, %v1707
      %v1726 = vadd.f32 %v1647, %v1708
      %v1727 = vadd.f32 %v1648, %v1709
      %v1728 = vadd.f32 %v1649, %v1710
      %v1729 = vadd.f32 %v1650, %v1711
      %v1730 = vadd.f32 %v1651, %v1712
      %v1731 = vadd.f32 %v1652, %v1713
      %v1732 = vadd.f32 %v1653, %v1714
      %v1733 = vadd.f32 %v1654, %v1715
      %v1734 = vadd.f32 %v1655, %v1716
      %v1735 = vadd.f32 %v1656, %v1717
      %v1736 = vadd.f32 %v1657, %v1718
      %v1737 = vadd.f32 %v1658, %v1719
      %v1738 = vadd.f32 %v1659, %v1720
      %v1739 = vadd.f32 %v1660, %v1721
      %v1740 = vadd.f32 %v1661, %v1722
      %v1741 = vadd.f32 %v1662, %v1723
      %v1742 = vadd.f32 %v1663, %v1724
      %v1743 = vadd.f32 %v1664, %v1725
      %s1744 = sadd.s32 %s1504, 78
      %s1745 = smul.addr %s1744, 4
      %s1746 = scalar_lea.vmem %s279, %s1745
      %v1747 = vld [vmem:[%s1746] sm:$0xf]
      %v1748 = vld [vmem:[%s1746 + $0x4] sm:$0xf]
      %v1749 = vld [vmem:[%s1746 + $0x8] sm:$0xf]
      %v1750 = vld [vmem:[%s1746 + $0xc] sm:$0xf]
      %v1751 = vld [vmem:[%s1746 + $0x10] sm:$0xf]
      %v1752 = vld [vmem:[%s1746 + $0x14] sm:$0xf]
      %v1753 = vld [vmem:[%s1746 + $0x18] sm:$0xf]
      %v1754 = vld [vmem:[%s1746 + $0x1c] sm:$0xf]
      %v1755 = vld [vmem:[%s1746 + $0x20] sm:$0xf]
      %v1756 = vld [vmem:[%s1746 + $0x24] sm:$0xf]
      %v1757 = vld [vmem:[%s1746 + $0x28] sm:$0xf]
      %v1758 = vld [vmem:[%s1746 + $0x2c] sm:$0xf]
      %v1759 = vld [vmem:[%s1746 + $0x30] sm:$0xf]
      %v1760 = vld [vmem:[%s1746 + $0x34] sm:$0xf]
      %v1761 = vld [vmem:[%s1746 + $0x38] sm:$0xf]
      %v1762 = vld [vmem:[%s1746 + $0x3c] sm:$0xf]
      %v1763 = vld [vmem:[%s1746 + $0x40] sm:$0xf]
      %v1764 = vld [vmem:[%s1746 + $0x44] sm:$0xf]
      %v1765 = vunpack.c.l.bf16 %v1747
      %v1766 = vunpack.c.l.bf16 %v1748
      %v1767 = vunpack.c.l.bf16 %v1749
      %v1768 = vunpack.c.l.bf16 %v1750
      %v1769 = vunpack.c.l.bf16 %v1751
      %v1770 = vunpack.c.l.bf16 %v1752
      %v1771 = vunpack.c.l.bf16 %v1753
      %v1772 = vunpack.c.l.bf16 %v1754
      %v1773 = vunpack.c.l.bf16 %v1755
      %v1774 = vunpack.c.l.bf16 %v1756
      %v1775 = vunpack.c.l.bf16 %v1757
      %v1776 = vunpack.c.l.bf16 %v1758
      %v1777 = vunpack.c.l.bf16 %v1759
      %v1778 = vunpack.c.l.bf16 %v1760
      %v1779 = vunpack.c.l.bf16 %v1761
      %v1780 = vunpack.c.l.bf16 %v1762
      %v1781 = vunpack.c.l.bf16 %v1763
      %v1782 = vunpack.c.l.bf16 %v1764
      %v1783 = vld [vmem:[%s284 + $0x8] sm:$0x2]
      %v1784 = vunpack.c.l.bf16 %v1783
      %v1785 = vlaneseq
      %v1786 = vshrl.u32 %v1785, 7
      %v1787 = vsub.s32 2, %v1786
      %v1788 = vrot.slane %v1784, %v1787
      %v1789 = vmul.f32 %v1765, %v1788
      %v1790 = vmul.f32 %v1766, %v1788
      %v1791 = vmul.f32 %v1767, %v1788
      %v1792 = vmul.f32 %v1768, %v1788
      %v1793 = vmul.f32 %v1769, %v1788
      %v1794 = vmul.f32 %v1770, %v1788
      %v1795 = vmul.f32 %v1771, %v1788
      %v1796 = vmul.f32 %v1772, %v1788
      %v1797 = vmul.f32 %v1773, %v1788
      %v1798 = vmul.f32 %v1774, %v1788
      %v1799 = vmul.f32 %v1775, %v1788
      %v1800 = vmul.f32 %v1776, %v1788
      %v1801 = vmul.f32 %v1777, %v1788
      %v1802 = vmul.f32 %v1778, %v1788
      %v1803 = vmul.f32 %v1779, %v1788
      %v1804 = vmul.f32 %v1780, %v1788
      %v1805 = vmul.f32 %v1781, %v1788
      %v1806 = vmul.f32 %v1782, %v1788
      %v1807 = vadd.f32 %v1726, %v1789
      %v1808 = vadd.f32 %v1727, %v1790
      %v1809 = vadd.f32 %v1728, %v1791
      %v1810 = vadd.f32 %v1729, %v1792
      %v1811 = vadd.f32 %v1730, %v1793
      %v1812 = vadd.f32 %v1731, %v1794
      %v1813 = vadd.f32 %v1732, %v1795
      %v1814 = vadd.f32 %v1733, %v1796
      %v1815 = vadd.f32 %v1734, %v1797
      %v1816 = vadd.f32 %v1735, %v1798
      %v1817 = vadd.f32 %v1736, %v1799
      %v1818 = vadd.f32 %v1737, %v1800
      %v1819 = vadd.f32 %v1738, %v1801
      %v1820 = vadd.f32 %v1739, %v1802
      %v1821 = vadd.f32 %v1740, %v1803
      %v1822 = vadd.f32 %v1741, %v1804
      %v1823 = vadd.f32 %v1742, %v1805
      %v1824 = vadd.f32 %v1743, %v1806
      %s1825 = sadd.s32 %s1504, 104
      %s1826 = smul.addr %s1825, 4
      %s1827 = scalar_lea.vmem %s279, %s1826
      %v1828 = vld [vmem:[%s1827] sm:$0xf]
      %v1829 = vld [vmem:[%s1827 + $0x4] sm:$0xf]
      %v1830 = vld [vmem:[%s1827 + $0x8] sm:$0xf]
      %v1831 = vld [vmem:[%s1827 + $0xc] sm:$0xf]
      %v1832 = vld [vmem:[%s1827 + $0x10] sm:$0xf]
      %v1833 = vld [vmem:[%s1827 + $0x14] sm:$0xf]
      %v1834 = vld [vmem:[%s1827 + $0x18] sm:$0xf]
      %v1835 = vld [vmem:[%s1827 + $0x1c] sm:$0xf]
      %v1836 = vld [vmem:[%s1827 + $0x20] sm:$0xf]
      %v1837 = vld [vmem:[%s1827 + $0x24] sm:$0xf]
      %v1838 = vld [vmem:[%s1827 + $0x28] sm:$0xf]
      %v1839 = vld [vmem:[%s1827 + $0x2c] sm:$0xf]
      %v1840 = vld [vmem:[%s1827 + $0x30] sm:$0xf]
      %v1841 = vld [vmem:[%s1827 + $0x34] sm:$0xf]
      %v1842 = vld [vmem:[%s1827 + $0x38] sm:$0xf]
      %v1843 = vld [vmem:[%s1827 + $0x3c] sm:$0xf]
      %v1844 = vld [vmem:[%s1827 + $0x40] sm:$0xf]
      %v1845 = vld [vmem:[%s1827 + $0x44] sm:$0xf]
      %v1846 = vunpack.c.l.bf16 %v1828
      %v1847 = vunpack.c.l.bf16 %v1829
      %v1848 = vunpack.c.l.bf16 %v1830
      %v1849 = vunpack.c.l.bf16 %v1831
      %v1850 = vunpack.c.l.bf16 %v1832
      %v1851 = vunpack.c.l.bf16 %v1833
      %v1852 = vunpack.c.l.bf16 %v1834
      %v1853 = vunpack.c.l.bf16 %v1835
      %v1854 = vunpack.c.l.bf16 %v1836
      %v1855 = vunpack.c.l.bf16 %v1837
      %v1856 = vunpack.c.l.bf16 %v1838
      %v1857 = vunpack.c.l.bf16 %v1839
      %v1858 = vunpack.c.l.bf16 %v1840
      %v1859 = vunpack.c.l.bf16 %v1841
      %v1860 = vunpack.c.l.bf16 %v1842
      %v1861 = vunpack.c.l.bf16 %v1843
      %v1862 = vunpack.c.l.bf16 %v1844
      %v1863 = vunpack.c.l.bf16 %v1845
      %v1864 = vlaneseq
      %v1865 = vshrl.u32 %v1864, 7
      %v1866 = vsub.s32 3, %v1865
      %v1867 = vrot.slane %v1784, %v1866
      %v1868 = vmul.f32 %v1846, %v1867
      %v1869 = vmul.f32 %v1847, %v1867
      %v1870 = vmul.f32 %v1848, %v1867
      %v1871 = vmul.f32 %v1849, %v1867
      %v1872 = vmul.f32 %v1850, %v1867
      %v1873 = vmul.f32 %v1851, %v1867
      %v1874 = vmul.f32 %v1852, %v1867
      %v1875 = vmul.f32 %v1853, %v1867
      %v1876 = vmul.f32 %v1854, %v1867
      %v1877 = vmul.f32 %v1855, %v1867
      %v1878 = vmul.f32 %v1856, %v1867
      %v1879 = vmul.f32 %v1857, %v1867
      %v1880 = vmul.f32 %v1858, %v1867
      %v1881 = vmul.f32 %v1859, %v1867
      %v1882 = vmul.f32 %v1860, %v1867
      %v1883 = vmul.f32 %v1861, %v1867
      %v1884 = vmul.f32 %v1862, %v1867
      %v1885 = vmul.f32 %v1863, %v1867
      %v1886 = vadd.f32 %v1807, %v1868
      %v1887 = vadd.f32 %v1808, %v1869
      %v1888 = vadd.f32 %v1809, %v1870
      %v1889 = vadd.f32 %v1810, %v1871
      %v1890 = vadd.f32 %v1811, %v1872
      %v1891 = vadd.f32 %v1812, %v1873
      %v1892 = vadd.f32 %v1813, %v1874
      %v1893 = vadd.f32 %v1814, %v1875
      %v1894 = vadd.f32 %v1815, %v1876
      %v1895 = vadd.f32 %v1816, %v1877
      %v1896 = vadd.f32 %v1817, %v1878
      %v1897 = vadd.f32 %v1818, %v1879
      %v1898 = vadd.f32 %v1819, %v1880
      %v1899 = vadd.f32 %v1820, %v1881
      %v1900 = vadd.f32 %v1821, %v1882
      %v1901 = vadd.f32 %v1822, %v1883
      %v1902 = vadd.f32 %v1823, %v1884
      %v1903 = vadd.f32 %v1824, %v1885
      %s1904 = sadd.s32 %s296, 64
      %s1905 = sshra.s32 %s1904, 3
      %s1906 = sand.u32 %s1904, 7
      %s1907 = smul.addr %s1905, 4
      %s1908 = scalar_lea.vmem %s279, %s1907
      %v1909 = vld [vmem:[%s1908] sm:$0xf]
      %v1910 = vld [vmem:[%s1908 + $0x4] sm:$0xf]
      %v1911 = vld [vmem:[%s1908 + $0x8] sm:$0xf]
      %v1912 = vld [vmem:[%s1908 + $0xc] sm:$0xf]
      %v1913 = vld [vmem:[%s1908 + $0x10] sm:$0xf]
      %v1914 = vld [vmem:[%s1908 + $0x14] sm:$0xf]
      %v1915 = vld [vmem:[%s1908 + $0x18] sm:$0xf]
      %v1916 = vld [vmem:[%s1908 + $0x1c] sm:$0xf]
      %v1917 = vld [vmem:[%s1908 + $0x20] sm:$0xf]
      %v1918 = vld [vmem:[%s1908 + $0x24] sm:$0xf]
      %v1919 = vld [vmem:[%s1908 + $0x28] sm:$0xf]
      %v1920 = vld [vmem:[%s1908 + $0x2c] sm:$0xf]
      %v1921 = vld [vmem:[%s1908 + $0x30] sm:$0xf]
      %v1922 = vld [vmem:[%s1908 + $0x34] sm:$0xf]
      %v1923 = vld [vmem:[%s1908 + $0x38] sm:$0xf]
      %v1924 = vld [vmem:[%s1908 + $0x3c] sm:$0xf]
      %v1925 = vld [vmem:[%s1908 + $0x40] sm:$0xf]
      %v1926 = vld [vmem:[%s1908 + $0x44] sm:$0xf]
      %v1927 = vunpack.c.l.bf16 %v1909
      %v1928 = vunpack.c.l.bf16 %v1910
      %v1929 = vunpack.c.l.bf16 %v1911
      %v1930 = vunpack.c.l.bf16 %v1912
      %v1931 = vunpack.c.l.bf16 %v1913
      %v1932 = vunpack.c.l.bf16 %v1914
      %v1933 = vunpack.c.l.bf16 %v1915
      %v1934 = vunpack.c.l.bf16 %v1916
      %v1935 = vunpack.c.l.bf16 %v1917
      %v1936 = vunpack.c.l.bf16 %v1918
      %v1937 = vunpack.c.l.bf16 %v1919
      %v1938 = vunpack.c.l.bf16 %v1920
      %v1939 = vunpack.c.l.bf16 %v1921
      %v1940 = vunpack.c.l.bf16 %v1922
      %v1941 = vunpack.c.l.bf16 %v1923
      %v1942 = vunpack.c.l.bf16 %v1924
      %v1943 = vunpack.c.l.bf16 %v1925
      %v1944 = vunpack.c.l.bf16 %v1926
      %v1945 = vld [vmem:[%s284 + $0x8] sm:$0x4]
      %v1946 = vunpack.c.l.bf16 %v1945
      %v1947 = vlaneseq
      %v1948 = vshrl.u32 %v1947, 7
      %v1949 = vsub.s32 4, %v1948
      %v1950 = vrot.slane %v1946, %v1949
      %v1951 = vmul.f32 %v1927, %v1950
      %v1952 = vmul.f32 %v1928, %v1950
      %v1953 = vmul.f32 %v1929, %v1950
      %v1954 = vmul.f32 %v1930, %v1950
      %v1955 = vmul.f32 %v1931, %v1950
      %v1956 = vmul.f32 %v1932, %v1950
      %v1957 = vmul.f32 %v1933, %v1950
      %v1958 = vmul.f32 %v1934, %v1950
      %v1959 = vmul.f32 %v1935, %v1950
      %v1960 = vmul.f32 %v1936, %v1950
      %v1961 = vmul.f32 %v1937, %v1950
      %v1962 = vmul.f32 %v1938, %v1950
      %v1963 = vmul.f32 %v1939, %v1950
      %v1964 = vmul.f32 %v1940, %v1950
      %v1965 = vmul.f32 %v1941, %v1950
      %v1966 = vmul.f32 %v1942, %v1950
      %v1967 = vmul.f32 %v1943, %v1950
      %v1968 = vmul.f32 %v1944, %v1950
      %v1969 = vadd.f32 %v1886, %v1951
      %v1970 = vadd.f32 %v1887, %v1952
      %v1971 = vadd.f32 %v1888, %v1953
      %v1972 = vadd.f32 %v1889, %v1954
      %v1973 = vadd.f32 %v1890, %v1955
      %v1974 = vadd.f32 %v1891, %v1956
      %v1975 = vadd.f32 %v1892, %v1957
      %v1976 = vadd.f32 %v1893, %v1958
      %v1977 = vadd.f32 %v1894, %v1959
      %v1978 = vadd.f32 %v1895, %v1960
      %v1979 = vadd.f32 %v1896, %v1961
      %v1980 = vadd.f32 %v1897, %v1962
      %v1981 = vadd.f32 %v1898, %v1963
      %v1982 = vadd.f32 %v1899, %v1964
      %v1983 = vadd.f32 %v1900, %v1965
      %v1984 = vadd.f32 %v1901, %v1966
      %v1985 = vadd.f32 %v1902, %v1967
      %v1986 = vadd.f32 %v1903, %v1968
      %s1987 = sadd.s32 %s1905, 26
      %s1988 = smul.addr %s1987, 4
      %s1989 = scalar_lea.vmem %s279, %s1988
      %v1990 = vld [vmem:[%s1989] sm:$0xf]
      %v1991 = vld [vmem:[%s1989 + $0x4] sm:$0xf]
      %v1992 = vld [vmem:[%s1989 + $0x8] sm:$0xf]
      %v1993 = vld [vmem:[%s1989 + $0xc] sm:$0xf]
      %v1994 = vld [vmem:[%s1989 + $0x10] sm:$0xf]
      %v1995 = vld [vmem:[%s1989 + $0x14] sm:$0xf]
      %v1996 = vld [vmem:[%s1989 + $0x18] sm:$0xf]
      %v1997 = vld [vmem:[%s1989 + $0x1c] sm:$0xf]
      %v1998 = vld [vmem:[%s1989 + $0x20] sm:$0xf]
      %v1999 = vld [vmem:[%s1989 + $0x24] sm:$0xf]
      %v2000 = vld [vmem:[%s1989 + $0x28] sm:$0xf]
      %v2001 = vld [vmem:[%s1989 + $0x2c] sm:$0xf]
      %v2002 = vld [vmem:[%s1989 + $0x30] sm:$0xf]
      %v2003 = vld [vmem:[%s1989 + $0x34] sm:$0xf]
      %v2004 = vld [vmem:[%s1989 + $0x38] sm:$0xf]
      %v2005 = vld [vmem:[%s1989 + $0x3c] sm:$0xf]
      %v2006 = vld [vmem:[%s1989 + $0x40] sm:$0xf]
      %v2007 = vld [vmem:[%s1989 + $0x44] sm:$0xf]
      %v2008 = vunpack.c.l.bf16 %v1990
      %v2009 = vunpack.c.l.bf16 %v1991
      %v2010 = vunpack.c.l.bf16 %v1992
      %v2011 = vunpack.c.l.bf16 %v1993
      %v2012 = vunpack.c.l.bf16 %v1994
      %v2013 = vunpack.c.l.bf16 %v1995
      %v2014 = vunpack.c.l.bf16 %v1996
      %v2015 = vunpack.c.l.bf16 %v1997
      %v2016 = vunpack.c.l.bf16 %v1998
      %v2017 = vunpack.c.l.bf16 %v1999
      %v2018 = vunpack.c.l.bf16 %v2000
      %v2019 = vunpack.c.l.bf16 %v2001
      %v2020 = vunpack.c.l.bf16 %v2002
      %v2021 = vunpack.c.l.bf16 %v2003
      %v2022 = vunpack.c.l.bf16 %v2004
      %v2023 = vunpack.c.l.bf16 %v2005
      %v2024 = vunpack.c.l.bf16 %v2006
      %v2025 = vunpack.c.l.bf16 %v2007
      %v2026 = vlaneseq
      %v2027 = vshrl.u32 %v2026, 7
      %v2028 = vsub.s32 5, %v2027
      %v2029 = vrot.slane %v1946, %v2028
      %v2030 = vmul.f32 %v2008, %v2029
      %v2031 = vmul.f32 %v2009, %v2029
      %v2032 = vmul.f32 %v2010, %v2029
      %v2033 = vmul.f32 %v2011, %v2029
      %v2034 = vmul.f32 %v2012, %v2029
      %v2035 = vmul.f32 %v2013, %v2029
      %v2036 = vmul.f32 %v2014, %v2029
      %v2037 = vmul.f32 %v2015, %v2029
      %v2038 = vmul.f32 %v2016, %v2029
      %v2039 = vmul.f32 %v2017, %v2029
      %v2040 = vmul.f32 %v2018, %v2029
      %v2041 = vmul.f32 %v2019, %v2029
      %v2042 = vmul.f32 %v2020, %v2029
      %v2043 = vmul.f32 %v2021, %v2029
      %v2044 = vmul.f32 %v2022, %v2029
      %v2045 = vmul.f32 %v2023, %v2029
      %v2046 = vmul.f32 %v2024, %v2029
      %v2047 = vmul.f32 %v2025, %v2029
      %v2048 = vadd.f32 %v1969, %v2030
      %v2049 = vadd.f32 %v1970, %v2031
      %v2050 = vadd.f32 %v1971, %v2032
      %v2051 = vadd.f32 %v1972, %v2033
      %v2052 = vadd.f32 %v1973, %v2034
      %v2053 = vadd.f32 %v1974, %v2035
      %v2054 = vadd.f32 %v1975, %v2036
      %v2055 = vadd.f32 %v1976, %v2037
      %v2056 = vadd.f32 %v1977, %v2038
      %v2057 = vadd.f32 %v1978, %v2039
      %v2058 = vadd.f32 %v1979, %v2040
      %v2059 = vadd.f32 %v1980, %v2041
      %v2060 = vadd.f32 %v1981, %v2042
      %v2061 = vadd.f32 %v1982, %v2043
      %v2062 = vadd.f32 %v1983, %v2044
      %v2063 = vadd.f32 %v1984, %v2045
      %v2064 = vadd.f32 %v1985, %v2046
      %v2065 = vadd.f32 %v1986, %v2047
      %s2066 = sadd.s32 %s1905, 52
      %s2067 = smul.addr %s2066, 4
      %s2068 = scalar_lea.vmem %s279, %s2067
      %v2069 = vld [vmem:[%s2068] sm:$0xf]
      %v2070 = vld [vmem:[%s2068 + $0x4] sm:$0xf]
      %v2071 = vld [vmem:[%s2068 + $0x8] sm:$0xf]
      %v2072 = vld [vmem:[%s2068 + $0xc] sm:$0xf]
      %v2073 = vld [vmem:[%s2068 + $0x10] sm:$0xf]
      %v2074 = vld [vmem:[%s2068 + $0x14] sm:$0xf]
      %v2075 = vld [vmem:[%s2068 + $0x18] sm:$0xf]
      %v2076 = vld [vmem:[%s2068 + $0x1c] sm:$0xf]
      %v2077 = vld [vmem:[%s2068 + $0x20] sm:$0xf]
      %v2078 = vld [vmem:[%s2068 + $0x24] sm:$0xf]
      %v2079 = vld [vmem:[%s2068 + $0x28] sm:$0xf]
      %v2080 = vld [vmem:[%s2068 + $0x2c] sm:$0xf]
      %v2081 = vld [vmem:[%s2068 + $0x30] sm:$0xf]
      %v2082 = vld [vmem:[%s2068 + $0x34] sm:$0xf]
      %v2083 = vld [vmem:[%s2068 + $0x38] sm:$0xf]
      %v2084 = vld [vmem:[%s2068 + $0x3c] sm:$0xf]
      %v2085 = vld [vmem:[%s2068 + $0x40] sm:$0xf]
      %v2086 = vld [vmem:[%s2068 + $0x44] sm:$0xf]
      %v2087 = vunpack.c.l.bf16 %v2069
      %v2088 = vunpack.c.l.bf16 %v2070
      %v2089 = vunpack.c.l.bf16 %v2071
      %v2090 = vunpack.c.l.bf16 %v2072
      %v2091 = vunpack.c.l.bf16 %v2073
      %v2092 = vunpack.c.l.bf16 %v2074
      %v2093 = vunpack.c.l.bf16 %v2075
      %v2094 = vunpack.c.l.bf16 %v2076
      %v2095 = vunpack.c.l.bf16 %v2077
      %v2096 = vunpack.c.l.bf16 %v2078
      %v2097 = vunpack.c.l.bf16 %v2079
      %v2098 = vunpack.c.l.bf16 %v2080
      %v2099 = vunpack.c.l.bf16 %v2081
      %v2100 = vunpack.c.l.bf16 %v2082
      %v2101 = vunpack.c.l.bf16 %v2083
      %v2102 = vunpack.c.l.bf16 %v2084
      %v2103 = vunpack.c.l.bf16 %v2085
      %v2104 = vunpack.c.l.bf16 %v2086
      %v2105 = vld [vmem:[%s284 + $0x8] sm:$0x8]
      %v2106 = vunpack.c.l.bf16 %v2105
      %v2107 = vlaneseq
      %v2108 = vshrl.u32 %v2107, 7
      %v2109 = vsub.s32 6, %v2108
      %v2110 = vrot.slane %v2106, %v2109
      %v2111 = vmul.f32 %v2087, %v2110
      %v2112 = vmul.f32 %v2088, %v2110
      %v2113 = vmul.f32 %v2089, %v2110
      %v2114 = vmul.f32 %v2090, %v2110
      %v2115 = vmul.f32 %v2091, %v2110
      %v2116 = vmul.f32 %v2092, %v2110
      %v2117 = vmul.f32 %v2093, %v2110
      %v2118 = vmul.f32 %v2094, %v2110
      %v2119 = vmul.f32 %v2095, %v2110
      %v2120 = vmul.f32 %v2096, %v2110
      %v2121 = vmul.f32 %v2097, %v2110
      %v2122 = vmul.f32 %v2098, %v2110
      %v2123 = vmul.f32 %v2099, %v2110
      %v2124 = vmul.f32 %v2100, %v2110
      %v2125 = vmul.f32 %v2101, %v2110
      %v2126 = vmul.f32 %v2102, %v2110
      %v2127 = vmul.f32 %v2103, %v2110
      %v2128 = vmul.f32 %v2104, %v2110
      %v2129 = vadd.f32 %v2048, %v2111
      %v2130 = vadd.f32 %v2049, %v2112
      %v2131 = vadd.f32 %v2050, %v2113
      %v2132 = vadd.f32 %v2051, %v2114
      %v2133 = vadd.f32 %v2052, %v2115
      %v2134 = vadd.f32 %v2053, %v2116
      %v2135 = vadd.f32 %v2054, %v2117
      %v2136 = vadd.f32 %v2055, %v2118
      %v2137 = vadd.f32 %v2056, %v2119
      %v2138 = vadd.f32 %v2057, %v2120
      %v2139 = vadd.f32 %v2058, %v2121
      %v2140 = vadd.f32 %v2059, %v2122
      %v2141 = vadd.f32 %v2060, %v2123
      %v2142 = vadd.f32 %v2061, %v2124
      %v2143 = vadd.f32 %v2062, %v2125
      %v2144 = vadd.f32 %v2063, %v2126
      %v2145 = vadd.f32 %v2064, %v2127
      %v2146 = vadd.f32 %v2065, %v2128
      %s2147 = sadd.s32 %s1905, 78
      %s2148 = smul.addr %s2147, 4
      %s2149 = scalar_lea.vmem %s279, %s2148
      %v2150 = vld [vmem:[%s2149] sm:$0xf]
      %v2151 = vld [vmem:[%s2149 + $0x4] sm:$0xf]
      %v2152 = vld [vmem:[%s2149 + $0x8] sm:$0xf]
      %v2153 = vld [vmem:[%s2149 + $0xc] sm:$0xf]
      %v2154 = vld [vmem:[%s2149 + $0x10] sm:$0xf]
      %v2155 = vld [vmem:[%s2149 + $0x14] sm:$0xf]
      %v2156 = vld [vmem:[%s2149 + $0x18] sm:$0xf]
      %v2157 = vld [vmem:[%s2149 + $0x1c] sm:$0xf]
      %v2158 = vld [vmem:[%s2149 + $0x20] sm:$0xf]
      %v2159 = vld [vmem:[%s2149 + $0x24] sm:$0xf]
      %v2160 = vld [vmem:[%s2149 + $0x28] sm:$0xf]
      %v2161 = vld [vmem:[%s2149 + $0x2c] sm:$0xf]
      %v2162 = vld [vmem:[%s2149 + $0x30] sm:$0xf]
      %v2163 = vld [vmem:[%s2149 + $0x34] sm:$0xf]
      %v2164 = vld [vmem:[%s2149 + $0x38] sm:$0xf]
      %v2165 = vld [vmem:[%s2149 + $0x3c] sm:$0xf]
      %v2166 = vld [vmem:[%s2149 + $0x40] sm:$0xf]
      %v2167 = vld [vmem:[%s2149 + $0x44] sm:$0xf]
      %v2168 = vunpack.c.l.bf16 %v2150
      %v2169 = vunpack.c.l.bf16 %v2151
      %v2170 = vunpack.c.l.bf16 %v2152
      %v2171 = vunpack.c.l.bf16 %v2153
      %v2172 = vunpack.c.l.bf16 %v2154
      %v2173 = vunpack.c.l.bf16 %v2155
      %v2174 = vunpack.c.l.bf16 %v2156
      %v2175 = vunpack.c.l.bf16 %v2157
      %v2176 = vunpack.c.l.bf16 %v2158
      %v2177 = vunpack.c.l.bf16 %v2159
      %v2178 = vunpack.c.l.bf16 %v2160
      %v2179 = vunpack.c.l.bf16 %v2161
      %v2180 = vunpack.c.l.bf16 %v2162
      %v2181 = vunpack.c.l.bf16 %v2163
      %v2182 = vunpack.c.l.bf16 %v2164
      %v2183 = vunpack.c.l.bf16 %v2165
      %v2184 = vunpack.c.l.bf16 %v2166
      %v2185 = vunpack.c.l.bf16 %v2167
      %v2186 = vlaneseq
      %v2187 = vshrl.u32 %v2186, 7
      %v2188 = vsub.s32 7, %v2187
      %v2189 = vrot.slane %v2106, %v2188
      %v2190 = vmul.f32 %v2168, %v2189
      %v2191 = vmul.f32 %v2169, %v2189
      %v2192 = vmul.f32 %v2170, %v2189
      %v2193 = vmul.f32 %v2171, %v2189
      %v2194 = vmul.f32 %v2172, %v2189
      %v2195 = vmul.f32 %v2173, %v2189
      %v2196 = vmul.f32 %v2174, %v2189
      %v2197 = vmul.f32 %v2175, %v2189
      %v2198 = vmul.f32 %v2176, %v2189
      %v2199 = vmul.f32 %v2177, %v2189
      %v2200 = vmul.f32 %v2178, %v2189
      %v2201 = vmul.f32 %v2179, %v2189
      %v2202 = vmul.f32 %v2180, %v2189
      %v2203 = vmul.f32 %v2181, %v2189
      %v2204 = vmul.f32 %v2182, %v2189
      %v2205 = vmul.f32 %v2183, %v2189
      %v2206 = vmul.f32 %v2184, %v2189
      %v2207 = vmul.f32 %v2185, %v2189
      %v2208 = vadd.f32 %v2129, %v2190
      %v2209 = vadd.f32 %v2130, %v2191
      %v2210 = vadd.f32 %v2131, %v2192
      %v2211 = vadd.f32 %v2132, %v2193
      %v2212 = vadd.f32 %v2133, %v2194
      %v2213 = vadd.f32 %v2134, %v2195
      %v2214 = vadd.f32 %v2135, %v2196
      %v2215 = vadd.f32 %v2136, %v2197
      %v2216 = vadd.f32 %v2137, %v2198
      %v2217 = vadd.f32 %v2138, %v2199
      %v2218 = vadd.f32 %v2139, %v2200
      %v2219 = vadd.f32 %v2140, %v2201
      %v2220 = vadd.f32 %v2141, %v2202
      %v2221 = vadd.f32 %v2142, %v2203
      %v2222 = vadd.f32 %v2143, %v2204
      %v2223 = vadd.f32 %v2144, %v2205
      %v2224 = vadd.f32 %v2145, %v2206
      %v2225 = vadd.f32 %v2146, %v2207
      %s2226 = sadd.s32 %s1905, 104
      %s2227 = smul.addr %s2226, 4
      %s2228 = scalar_lea.vmem %s279, %s2227
      %v2229 = vld [vmem:[%s2228] sm:$0xf]
      %v2230 = vld [vmem:[%s2228 + $0x4] sm:$0xf]
      %v2231 = vld [vmem:[%s2228 + $0x8] sm:$0xf]
      %v2232 = vld [vmem:[%s2228 + $0xc] sm:$0xf]
      %v2233 = vld [vmem:[%s2228 + $0x10] sm:$0xf]
      %v2234 = vld [vmem:[%s2228 + $0x14] sm:$0xf]
      %v2235 = vld [vmem:[%s2228 + $0x18] sm:$0xf]
      %v2236 = vld [vmem:[%s2228 + $0x1c] sm:$0xf]
      %v2237 = vld [vmem:[%s2228 + $0x20] sm:$0xf]
      %v2238 = vld [vmem:[%s2228 + $0x24] sm:$0xf]
      %v2239 = vld [vmem:[%s2228 + $0x28] sm:$0xf]
      %v2240 = vld [vmem:[%s2228 + $0x2c] sm:$0xf]
      %v2241 = vld [vmem:[%s2228 + $0x30] sm:$0xf]
      %v2242 = vld [vmem:[%s2228 + $0x34] sm:$0xf]
      %v2243 = vld [vmem:[%s2228 + $0x38] sm:$0xf]
      %v2244 = vld [vmem:[%s2228 + $0x3c] sm:$0xf]
      %v2245 = vld [vmem:[%s2228 + $0x40] sm:$0xf]
      %v2246 = vld [vmem:[%s2228 + $0x44] sm:$0xf]
      %v2247 = vunpack.c.l.bf16 %v2229
      %v2248 = vunpack.c.l.bf16 %v2230
      %v2249 = vunpack.c.l.bf16 %v2231
      %v2250 = vunpack.c.l.bf16 %v2232
      %v2251 = vunpack.c.l.bf16 %v2233
      %v2252 = vunpack.c.l.bf16 %v2234
      %v2253 = vunpack.c.l.bf16 %v2235
      %v2254 = vunpack.c.l.bf16 %v2236
      %v2255 = vunpack.c.l.bf16 %v2237
      %v2256 = vunpack.c.l.bf16 %v2238
      %v2257 = vunpack.c.l.bf16 %v2239
      %v2258 = vunpack.c.l.bf16 %v2240
      %v2259 = vunpack.c.l.bf16 %v2241
      %v2260 = vunpack.c.l.bf16 %v2242
      %v2261 = vunpack.c.l.bf16 %v2243
      %v2262 = vunpack.c.l.bf16 %v2244
      %v2263 = vunpack.c.l.bf16 %v2245
      %v2264 = vunpack.c.l.bf16 %v2246
      %v2265 = vld [vmem:[%s284 + $0xc] sm:$0x1]
      %v2266 = vunpack.c.l.bf16 %v2265
      %v2267 = vlaneseq
      %v2268 = vshrl.u32 %v2267, 7
      %v2269 = vsub.s32 0, %v2268
      %v2270 = vrot.slane %v2266, %v2269
      %v2271 = vmul.f32 %v2247, %v2270
      %v2272 = vmul.f32 %v2248, %v2270
      %v2273 = vmul.f32 %v2249, %v2270
      %v2274 = vmul.f32 %v2250, %v2270
      %v2275 = vmul.f32 %v2251, %v2270
      %v2276 = vmul.f32 %v2252, %v2270
      %v2277 = vmul.f32 %v2253, %v2270
      %v2278 = vmul.f32 %v2254, %v2270
      %v2279 = vmul.f32 %v2255, %v2270
      %v2280 = vmul.f32 %v2256, %v2270
      %v2281 = vmul.f32 %v2257, %v2270
      %v2282 = vmul.f32 %v2258, %v2270
      %v2283 = vmul.f32 %v2259, %v2270
      %v2284 = vmul.f32 %v2260, %v2270
      %v2285 = vmul.f32 %v2261, %v2270
      %v2286 = vmul.f32 %v2262, %v2270
      %v2287 = vmul.f32 %v2263, %v2270
      %v2288 = vmul.f32 %v2264, %v2270
      %v2289 = vadd.f32 %v2208, %v2271
      %v2290 = vadd.f32 %v2209, %v2272
      %v2291 = vadd.f32 %v2210, %v2273
      %v2292 = vadd.f32 %v2211, %v2274
      %v2293 = vadd.f32 %v2212, %v2275
      %v2294 = vadd.f32 %v2213, %v2276
      %v2295 = vadd.f32 %v2214, %v2277
      %v2296 = vadd.f32 %v2215, %v2278
      %v2297 = vadd.f32 %v2216, %v2279
      %v2298 = vadd.f32 %v2217, %v2280
      %v2299 = vadd.f32 %v2218, %v2281
      %v2300 = vadd.f32 %v2219, %v2282
      %v2301 = vadd.f32 %v2220, %v2283
      %v2302 = vadd.f32 %v2221, %v2284
      %v2303 = vadd.f32 %v2222, %v2285
      %v2304 = vadd.f32 %v2223, %v2286
      %v2305 = vadd.f32 %v2224, %v2287
      %v2306 = vadd.f32 %v2225, %v2288
      %v2307 = vpack.c.bf16 %v2290, %v2289
      %v2308 = vpack.c.bf16 %v2292, %v2291
      %v2309 = vpack.c.bf16 %v2294, %v2293
      %v2310 = vpack.c.bf16 %v2296, %v2295
      %v2311 = vpack.c.bf16 %v2298, %v2297
      %v2312 = vpack.c.bf16 %v2300, %v2299
      %v2313 = vpack.c.bf16 %v2302, %v2301
      %v2314 = vpack.c.bf16 %v2304, %v2303
      %v2315 = vpack.c.bf16 %v2306, %v2305
      %v2316 = vld [vmem:[%s2] sm:$0xf]
      %v2317 = vld [vmem:[%s2 + $0x4] sm:$0xf]
      %v2318 = vld [vmem:[%s2 + $0x8] sm:$0xf]
      %v2319 = vld [vmem:[%s2 + $0xc] sm:$0xf]
      %v2320 = vld [vmem:[%s2 + $0x10] sm:$0xf]
      %v2321 = vld [vmem:[%s2 + $0x14] sm:$0xf]
      %v2322 = vld [vmem:[%s2 + $0x18] sm:$0xf]
      %v2323 = vld [vmem:[%s2 + $0x1c] sm:$0xf]
      %v2324 = vld [vmem:[%s2 + $0x20] sm:$0xf]
      %v2325 = vld [vmem:[%s2 + $0x24] sm:$0xf]
      %v2326 = vld [vmem:[%s2 + $0x28] sm:$0xf]
      %v2327 = vld [vmem:[%s2 + $0x2c] sm:$0xf]
      %v2328 = vld [vmem:[%s2 + $0x30] sm:$0xf]
      %v2329 = vld [vmem:[%s2 + $0x34] sm:$0xf]
      %v2330 = vld [vmem:[%s2 + $0x38] sm:$0xf]
      %v2331 = vld [vmem:[%s2 + $0x3c] sm:$0xf]
      %v2332 = vld [vmem:[%s3] sm:$0x1]
      %v2334 = vlaneseq
      %v2335 = vshrl.u32 %v2334, 7
      %v2336 = vsub.s32 0, %v2335
      %v2337 = vrot.slane %v2332, %v2336
      %v2355 = vunpack.c.l.b16 %v2316
      %v2356 = vunpack.c.l.b16 %v2317
      %v2357 = vunpack.c.l.b16 %v2318
      %v2358 = vunpack.c.l.b16 %v2319
      %v2359 = vunpack.c.l.b16 %v2320
      %v2360 = vunpack.c.l.b16 %v2321
      %v2361 = vunpack.c.l.b16 %v2322
      %v2362 = vunpack.c.l.b16 %v2323
      %v2363 = vunpack.c.l.b16 %v2324
      %v2364 = vunpack.c.l.b16 %v2325
      %v2365 = vunpack.c.l.b16 %v2326
      %v2366 = vunpack.c.l.b16 %v2327
      %v2367 = vunpack.c.l.b16 %v2328
      %v2368 = vunpack.c.l.b16 %v2329
      %v2369 = vunpack.c.l.b16 %v2330
      %v2370 = vunpack.c.l.b16 %v2331
      %v2371 = vpack.c.b16 %v2356, %v2355
      %v2372 = vpack.c.b16 %v2358, %v2357
      %v2373 = vpack.c.b16 %v2360, %v2359
      %v2374 = vpack.c.b16 %v2362, %v2361
      %v2375 = vpack.c.b16 %v2364, %v2363
      %v2376 = vpack.c.b16 %v2366, %v2365
      %v2377 = vpack.c.b16 %v2368, %v2367
      %v2378 = vpack.c.b16 %v2370, %v2369
      %2387 = vmatprep.subr.bf16.mxu0 0
      %2388 = vmatpush1.bf16.msra.mxu0 %v2371
      %2389 = vmatprep.subr.bf16.mxu0 0
      %2390 = vmatpush1.bf16.msra.mxu0 %v2372
      %2391 = vmatprep.subr.bf16.mxu0 0
      %2392 = vmatpush1.bf16.msra.mxu0 %v2373
      %2393 = vmatprep.subr.bf16.mxu0 0
      %2394 = vmatpush1.bf16.msra.mxu0 %v2374
      %2395 = vmatprep.subr.bf16.mxu0 0
      %2396 = vmatpush1.bf16.msra.mxu0 %v2375
      %2397 = vmatprep.subr.bf16.mxu0 0
      %2398 = vmatpush1.bf16.msra.mxu0 %v2376
      %2399 = vmatprep.subr.bf16.mxu0 0
      %2400 = vmatpush1.bf16.msra.mxu0 %v2377
      %2401 = vmatprep.subr.bf16.mxu0 0
      %2402 = vmatpush1.bf16.msra.mxu0 %v2378
      %2403 = vmatprep.subr.bf16.mxu0 0
      %2404 = vmatpush1.bf16.msra.mxu0 0
      %2405 = vmatprep.subr.bf16.mxu0 0
      %2406 = vmatpush1.bf16.msra.mxu0 0
      %2407 = vmatprep.subr.bf16.mxu0 0
      %2408 = vmatpush1.bf16.msra.mxu0 0
      %2409 = vmatprep.subr.bf16.mxu0 0
      %2410 = vmatpush1.bf16.msra.mxu0 0
      %2411 = vmatprep.subr.bf16.mxu0 0
      %2412 = vmatpush1.bf16.msra.mxu0 0
      %2413 = vmatprep.subr.bf16.mxu0 0
      %2414 = vmatpush1.bf16.msra.mxu0 0
      %2415 = vmatprep.subr.bf16.mxu0 0
      %2416 = vmatpush1.bf16.msra.mxu0 0
      %2417 = vmatprep.subr.bf16.mxu0 0
      %2418 = vmatpush1.bf16.msra.mxu0 0
      %2419 = vmatprep.mubr.bf16.mxu0 0
      %2420 = vmatmul.mubr.bf16.gmra.mrb[0].mxu0 %v2307
      %v2421 = vpop.f32.mrb[0].mxu0
      %v2422 = vadd.f32 %v2337, %v2421
      %v2423 = vpop.f32.mrb[0].mxu0
      %v2424 = vpop.f32.mrb[0].mxu0
      %v2425 = vadd.f32 %v2337, %v2424
      %v2426 = vpop.f32.mrb[0].mxu0
      %2427 = vmatprep.mubr.bf16.mxu0 0
      %2428 = vmatmul.mubr.bf16.gmra.mrb[0].mxu0 %v2308
      %v2429 = vpop.f32.mrb[0].mxu0
      %v2430 = vadd.f32 %v2337, %v2429
      %v2431 = vpop.f32.mrb[0].mxu0
      %v2432 = vpop.f32.mrb[0].mxu0
      %v2433 = vadd.f32 %v2337, %v2432
      %v2434 = vpop.f32.mrb[0].mxu0
      %2435 = vmatprep.mubr.bf16.mxu0 0
      %2436 = vmatmul.mubr.bf16.gmra.mrb[0].mxu0 %v2309
      %v2437 = vpop.f32.mrb[0].mxu0
      %v2438 = vadd.f32 %v2337, %v2437
      %v2439 = vpop.f32.mrb[0].mxu0
      %v2440 = vpop.f32.mrb[0].mxu0
      %v2441 = vadd.f32 %v2337, %v2440
      %v2442 = vpop.f32.mrb[0].mxu0
      %2443 = vmatprep.mubr.bf16.mxu0 0
      %2444 = vmatmul.mubr.bf16.gmra.mrb[0].mxu0 %v2310
      %v2445 = vpop.f32.mrb[0].mxu0
      %v2446 = vadd.f32 %v2337, %v2445
      %v2447 = vpop.f32.mrb[0].mxu0
      %v2448 = vpop.f32.mrb[0].mxu0
      %v2449 = vadd.f32 %v2337, %v2448
      %v2450 = vpop.f32.mrb[0].mxu0
      %2451 = vmatprep.mubr.bf16.mxu0 0
      %2452 = vmatmul.mubr.bf16.gmra.mrb[0].mxu0 %v2311
      %v2453 = vpop.f32.mrb[0].mxu0
      %v2454 = vadd.f32 %v2337, %v2453
      %v2455 = vpop.f32.mrb[0].mxu0
      %v2456 = vpop.f32.mrb[0].mxu0
      %v2457 = vadd.f32 %v2337, %v2456
      %v2458 = vpop.f32.mrb[0].mxu0
      %2459 = vmatprep.mubr.bf16.mxu0 0
      %2460 = vmatmul.mubr.bf16.gmra.mrb[0].mxu0 %v2312
      %v2461 = vpop.f32.mrb[0].mxu0
      %v2462 = vadd.f32 %v2337, %v2461
      %v2463 = vpop.f32.mrb[0].mxu0
      %v2464 = vpop.f32.mrb[0].mxu0
      %v2465 = vadd.f32 %v2337, %v2464
      %v2466 = vpop.f32.mrb[0].mxu0
      %2467 = vmatprep.mubr.bf16.mxu0 0
      %2468 = vmatmul.mubr.bf16.gmra.mrb[0].mxu0 %v2313
      %v2469 = vpop.f32.mrb[0].mxu0
      %v2470 = vadd.f32 %v2337, %v2469
      %v2471 = vpop.f32.mrb[0].mxu0
      %v2472 = vpop.f32.mrb[0].mxu0
      %v2473 = vadd.f32 %v2337, %v2472
      %v2474 = vpop.f32.mrb[0].mxu0
      %2475 = vmatprep.mubr.bf16.mxu0 0
      %2476 = vmatmul.mubr.bf16.gmra.mrb[0].mxu0 %v2314
      %v2477 = vpop.f32.mrb[0].mxu0
      %v2478 = vadd.f32 %v2337, %v2477
      %v2479 = vpop.f32.mrb[0].mxu0
      %v2480 = vpop.f32.mrb[0].mxu0
      %v2481 = vadd.f32 %v2337, %v2480
      %v2482 = vpop.f32.mrb[0].mxu0
      %2483 = vmatprep.mubr.bf16.mxu0 0
      %2484 = vmatmul.mubr.bf16.gmra.mrb[0].mxu0 %v2315
      %v2485 = vpop.f32.mrb[0].mxu0
      %v2486 = vadd.f32 %v2337, %v2485
      %v2487 = vpop.f32.mrb[0].mxu0
      %v2488 = vpop.f32.mrb[0].mxu0
      %v2489 = vadd.f32 %v2337, %v2488
      %v2490 = vpop.f32.mrb[0].mxu0
      %2491 = vdwg.mxu0
      %v2492 = vmax.f32 %v2422, 0.0
      %v2493 = vmax.f32 %v2425, 0.0
      %v2494 = vmax.f32 %v2430, 0.0
      %v2495 = vmax.f32 %v2433, 0.0
      %v2496 = vmax.f32 %v2438, 0.0
      %v2497 = vmax.f32 %v2441, 0.0
      %v2498 = vmax.f32 %v2446, 0.0
      %v2499 = vmax.f32 %v2449, 0.0
      %v2500 = vmax.f32 %v2454, 0.0
      %v2501 = vmax.f32 %v2457, 0.0
      %v2502 = vmax.f32 %v2462, 0.0
      %v2503 = vmax.f32 %v2465, 0.0
      %v2504 = vmax.f32 %v2470, 0.0
      %v2505 = vmax.f32 %v2473, 0.0
      %v2506 = vmax.f32 %v2478, 0.0
      %v2507 = vmax.f32 %v2481, 0.0
      %v2508 = vmax.f32 %v2486, 0.0
      %v2509 = vmax.f32 %v2489, 0.0
      %v2510 = vpack.c.bf16 %v2493, %v2492
      %v2511 = vpack.c.bf16 %v2495, %v2494
      %v2512 = vpack.c.bf16 %v2497, %v2496
      %v2513 = vpack.c.bf16 %v2499, %v2498
      %v2514 = vpack.c.bf16 %v2501, %v2500
      %v2515 = vpack.c.bf16 %v2503, %v2502
      %v2516 = vpack.c.bf16 %v2505, %v2504
      %v2517 = vpack.c.bf16 %v2507, %v2506
      %v2518 = vpack.c.bf16 %v2509, %v2508
      %v2519 = vld [vmem:[%s4] sm:$0xf]
      %v2520 = vld [vmem:[%s4 + $0x4] sm:$0xf]
      %v2521 = vld [vmem:[%s4 + $0x8] sm:$0xf]
      %v2522 = vld [vmem:[%s4 + $0xc] sm:$0xf]
      %v2523 = vld [vmem:[%s4 + $0x10] sm:$0xf]
      %v2524 = vld [vmem:[%s4 + $0x14] sm:$0xf]
      %v2525 = vld [vmem:[%s4 + $0x18] sm:$0xf]
      %v2526 = vld [vmem:[%s4 + $0x1c] sm:$0xf]
      %v2527 = vld [vmem:[%s4 + $0x20] sm:$0xf]
      %v2528 = vld [vmem:[%s4 + $0x24] sm:$0xf]
      %v2529 = vld [vmem:[%s4 + $0x28] sm:$0xf]
      %v2530 = vld [vmem:[%s4 + $0x2c] sm:$0xf]
      %v2531 = vld [vmem:[%s4 + $0x30] sm:$0xf]
      %v2532 = vld [vmem:[%s4 + $0x34] sm:$0xf]
      %v2533 = vld [vmem:[%s4 + $0x38] sm:$0xf]
      %v2534 = vld [vmem:[%s4 + $0x3c] sm:$0xf]
      %v2535 = vld [vmem:[%s5] sm:$0x1]
      %v2537 = vlaneseq
      %v2538 = vshrl.u32 %v2537, 7
      %v2539 = vsub.s32 0, %v2538
      %v2540 = vrot.slane %v2535, %v2539
      %v2558 = vunpack.c.l.b16 %v2519
      %v2559 = vunpack.c.l.b16 %v2520
      %v2560 = vunpack.c.l.b16 %v2521
      %v2561 = vunpack.c.l.b16 %v2522
      %v2562 = vunpack.c.l.b16 %v2523
      %v2563 = vunpack.c.l.b16 %v2524
      %v2564 = vunpack.c.l.b16 %v2525
      %v2565 = vunpack.c.l.b16 %v2526
      %v2566 = vunpack.c.l.b16 %v2527
      %v2567 = vunpack.c.l.b16 %v2528
      %v2568 = vunpack.c.l.b16 %v2529
      %v2569 = vunpack.c.l.b16 %v2530
      %v2570 = vunpack.c.l.b16 %v2531
      %v2571 = vunpack.c.l.b16 %v2532
      %v2572 = vunpack.c.l.b16 %v2533
      %v2573 = vunpack.c.l.b16 %v2534
      %v2574 = vpack.c.b16 %v2559, %v2558
      %v2575 = vpack.c.b16 %v2561, %v2560
      %v2576 = vpack.c.b16 %v2563, %v2562
      %v2577 = vpack.c.b16 %v2565, %v2564
      %v2578 = vpack.c.b16 %v2567, %v2566
      %v2579 = vpack.c.b16 %v2569, %v2568
      %v2580 = vpack.c.b16 %v2571, %v2570
      %v2581 = vpack.c.b16 %v2573, %v2572
      %2590 = vmatprep.subr.bf16.mxu0 0
      %2591 = vmatpush1.bf16.msra.mxu0 %v2574
      %2592 = vmatprep.subr.bf16.mxu0 0
      %2593 = vmatpush1.bf16.msra.mxu0 %v2575
      %2594 = vmatprep.subr.bf16.mxu0 0
      %2595 = vmatpush1.bf16.msra.mxu0 %v2576
      %2596 = vmatprep.subr.bf16.mxu0 0
      %2597 = vmatpush1.bf16.msra.mxu0 %v2577
      %2598 = vmatprep.subr.bf16.mxu0 0
      %2599 = vmatpush1.bf16.msra.mxu0 %v2578
      %2600 = vmatprep.subr.bf16.mxu0 0
      %2601 = vmatpush1.bf16.msra.mxu0 %v2579
      %2602 = vmatprep.subr.bf16.mxu0 0
      %2603 = vmatpush1.bf16.msra.mxu0 %v2580
      %2604 = vmatprep.subr.bf16.mxu0 0
      %2605 = vmatpush1.bf16.msra.mxu0 %v2581
      %2606 = vmatprep.subr.bf16.mxu0 0
      %2607 = vmatpush1.bf16.msra.mxu0 0
      %2608 = vmatprep.subr.bf16.mxu0 0
      %2609 = vmatpush1.bf16.msra.mxu0 0
      %2610 = vmatprep.subr.bf16.mxu0 0
      %2611 = vmatpush1.bf16.msra.mxu0 0
      %2612 = vmatprep.subr.bf16.mxu0 0
      %2613 = vmatpush1.bf16.msra.mxu0 0
      %2614 = vmatprep.subr.bf16.mxu0 0
      %2615 = vmatpush1.bf16.msra.mxu0 0
      %2616 = vmatprep.subr.bf16.mxu0 0
      %2617 = vmatpush1.bf16.msra.mxu0 0
      %2618 = vmatprep.subr.bf16.mxu0 0
      %2619 = vmatpush1.bf16.msra.mxu0 0
      %2620 = vmatprep.subr.bf16.mxu0 0
      %2621 = vmatpush1.bf16.msra.mxu0 0
      %2622 = vmatprep.mubr.bf16.mxu0 0
      %2623 = vmatmul.mubr.bf16.gmra.mrb[0].mxu0 %v2510
      %v2624 = vpop.f32.mrb[0].mxu0
      %v2625 = vadd.f32 %v2540, %v2624
      %v2626 = vpop.f32.mrb[0].mxu0
      %v2627 = vpop.f32.mrb[0].mxu0
      %v2628 = vadd.f32 %v2540, %v2627
      %v2629 = vpop.f32.mrb[0].mxu0
      %2630 = vmatprep.mubr.bf16.mxu0 0
      %2631 = vmatmul.mubr.bf16.gmra.mrb[0].mxu0 %v2511
      %v2632 = vpop.f32.mrb[0].mxu0
      %v2633 = vadd.f32 %v2540, %v2632
      %v2634 = vpop.f32.mrb[0].mxu0
      %v2635 = vpop.f32.mrb[0].mxu0
      %v2636 = vadd.f32 %v2540, %v2635
      %v2637 = vpop.f32.mrb[0].mxu0
      %2638 = vmatprep.mubr.bf16.mxu0 0
      %2639 = vmatmul.mubr.bf16.gmra.mrb[0].mxu0 %v2512
      %v2640 = vpop.f32.mrb[0].mxu0
      %v2641 = vadd.f32 %v2540, %v2640
      %v2642 = vpop.f32.mrb[0].mxu0
      %v2643 = vpop.f32.mrb[0].mxu0
      %v2644 = vadd.f32 %v2540, %v2643
      %v2645 = vpop.f32.mrb[0].mxu0
      %2646 = vmatprep.mubr.bf16.mxu0 0
      %2647 = vmatmul.mubr.bf16.gmra.mrb[0].mxu0 %v2513
      %v2648 = vpop.f32.mrb[0].mxu0
      %v2649 = vadd.f32 %v2540, %v2648
      %v2650 = vpop.f32.mrb[0].mxu0
      %v2651 = vpop.f32.mrb[0].mxu0
      %v2652 = vadd.f32 %v2540, %v2651
      %v2653 = vpop.f32.mrb[0].mxu0
      %2654 = vmatprep.mubr.bf16.mxu0 0
      %2655 = vmatmul.mubr.bf16.gmra.mrb[0].mxu0 %v2514
      %v2656 = vpop.f32.mrb[0].mxu0
      %v2657 = vadd.f32 %v2540, %v2656
      %v2658 = vpop.f32.mrb[0].mxu0
      %v2659 = vpop.f32.mrb[0].mxu0
      %v2660 = vadd.f32 %v2540, %v2659
      %v2661 = vpop.f32.mrb[0].mxu0
      %2662 = vmatprep.mubr.bf16.mxu0 0
      %2663 = vmatmul.mubr.bf16.gmra.mrb[0].mxu0 %v2515
      %v2664 = vpop.f32.mrb[0].mxu0
      %v2665 = vadd.f32 %v2540, %v2664
      %v2666 = vpop.f32.mrb[0].mxu0
      %v2667 = vpop.f32.mrb[0].mxu0
      %v2668 = vadd.f32 %v2540, %v2667
      %v2669 = vpop.f32.mrb[0].mxu0
      %2670 = vmatprep.mubr.bf16.mxu0 0
      %2671 = vmatmul.mubr.bf16.gmra.mrb[0].mxu0 %v2516
      %v2672 = vpop.f32.mrb[0].mxu0
      %v2673 = vadd.f32 %v2540, %v2672
      %v2674 = vpop.f32.mrb[0].mxu0
      %v2675 = vpop.f32.mrb[0].mxu0
      %v2676 = vadd.f32 %v2540, %v2675
      %v2677 = vpop.f32.mrb[0].mxu0
      %2678 = vmatprep.mubr.bf16.mxu0 0
      %2679 = vmatmul.mubr.bf16.gmra.mrb[0].mxu0 %v2517
      %v2680 = vpop.f32.mrb[0].mxu0
      %v2681 = vadd.f32 %v2540, %v2680
      %v2682 = vpop.f32.mrb[0].mxu0
      %v2683 = vpop.f32.mrb[0].mxu0
      %v2684 = vadd.f32 %v2540, %v2683
      %v2685 = vpop.f32.mrb[0].mxu0
      %2686 = vmatprep.mubr.bf16.mxu0 0
      %2687 = vmatmul.mubr.bf16.gmra.mrb[0].mxu0 %v2518
      %v2688 = vpop.f32.mrb[0].mxu0
      %v2689 = vadd.f32 %v2540, %v2688
      %v2690 = vpop.f32.mrb[0].mxu0
      %v2691 = vpop.f32.mrb[0].mxu0
      %v2692 = vadd.f32 %v2540, %v2691
      %v2693 = vpop.f32.mrb[0].mxu0
      %2694 = vdwg.mxu0
      %2695 = vst [vmem:[%s293] sm:$0xff] %v2625
      %2696 = vst [vmem:[%s293 + $0x8] sm:$0xff] %v2628
      %2697 = vst [vmem:[%s293 + $0x10] sm:$0xff] %v2633
      %2698 = vst [vmem:[%s293 + $0x18] sm:$0xff] %v2636
      %2699 = vst [vmem:[%s293 + $0x20] sm:$0xff] %v2641
      %2700 = vst [vmem:[%s293 + $0x28] sm:$0xff] %v2644
      %2701 = vst [vmem:[%s293 + $0x30] sm:$0xff] %v2649
      %2702 = vst [vmem:[%s293 + $0x38] sm:$0xff] %v2652
      %2703 = vst [vmem:[%s293 + $0x40] sm:$0xff] %v2657
      %2704 = vst [vmem:[%s293 + $0x48] sm:$0xff] %v2660
      %2705 = vst [vmem:[%s293 + $0x50] sm:$0xff] %v2665
      %2706 = vst [vmem:[%s293 + $0x58] sm:$0xff] %v2668
      %2707 = vst [vmem:[%s293 + $0x60] sm:$0xff] %v2673
      %2708 = vst [vmem:[%s293 + $0x68] sm:$0xff] %v2676
      %2709 = vst [vmem:[%s293 + $0x70] sm:$0xff] %v2681
      %2710 = vst [vmem:[%s293 + $0x78] sm:$0xff] %v2684
      %2711 = vst [vmem:[%s293 + $0x80] sm:$0xff] %v2689
      %2712 = vst [vmem:[%s293 + $0x88] sm:$0xff] %v2692
      %s2713 = smul.u32 18, %s22
      %p2714 = scmp.lt.s32.totalorder %s21, 1
      %s2715 = scalar_select %p2714, %s21, 1
      %p2716 = scmp.lt.s32.totalorder %s2713, 17
      %s2717 = scalar_select %p2716, %s2713, 17
      %s2718 = smul.addr %s2715, 18
      %s2719 = sadd.s32 %s2717, %s2718
      %s2720 = smul.addr %s2719, 8
      %s2721 = scalar_lea.vmem %s6, %s2720
      // Predicated region
      $region45: #{depth_corr_forward.5} parent=43 // pred_check
        %p2722 = pneg %p185
      $region46: #{depth_corr_forward.5} parent=43 // pred_check_branch
        %2724 = sbr.rel (%p2722) target = $region48
      $region47: #{depth_corr_forward.5} parent=43 // pred_region
        %s2725 = smul.u32 18, %s22
      $region48: #{depth_corr_forward.5} parent=43 // pred_fallthru
        _
    $region44: #{depth_corr_forward.5} parent=5 // pred_fallthru
      _
    %p2726 = scmp.le.s32.totalorder 2, %s12
    // Predicated region
    $region49: #{depth_corr_forward.5} parent=5 // pred_check
      %p2727 = pneg %p2726
    $region50: #{depth_corr_forward.5} parent=5 // pred_check_branch
      %2729 = sbr.rel (%p2727) target = $region52
    $region51: #{depth_corr_forward.5} parent=5 // pred_region
      %s2730 = ssub.s32 %s12, 2
      // Predicated region
      $region53: #{depth_corr_forward.5} parent=51 // pred_check
        %p2731 = pneg %p191
      $region54: #{depth_corr_forward.5} parent=51 // pred_check_branch
        %2733 = sbr.rel (%p2731) target = $region56
      $region55: #{depth_corr_forward.5} parent=51 // pred_region
        %s2734 = smul.u32 18, %s24
        %p2735 = scmp.lt.s32.totalorder %s23, 1
        %s2736 = scalar_select %p2735, %s23, 1
        %p2737 = scmp.lt.s32.totalorder %s2734, 17
        %s2738 = scalar_select %p2737, %s2734, 17
        %s2739 = smul.addr %s2736, 18
        %s2740 = sadd.s32 %s2738, %s2739
        %s2741 = smul.addr %s2740, 8
        %s2742 = scalar_lea.vmem %s6, %s2741
      $region56: #{depth_corr_forward.5} parent=51 // pred_fallthru
        _
    $region52: #{depth_corr_forward.5} parent=5 // pred_fallthru
      _
  $region6: #{depth_corr_forward.5} parent=0 // loop_footer
    %s16 = sadd.s32 1, %s12
  $region7: #{depth_corr_forward.5} parent=0 // loop_footer_branch
    %11 = sbr.rel target = $region3
  $region8: #{depth_corr_forward.5} parent=0 // loop_exit
    _

</llo_original>
